<compile_context>
chip_gen: v7x
topology: tpu7x:2x2x1
jax: 0.10.0
libtpu: 0.0.40
codegen_flags: <defaults>
</compile_context>

<pallas_src>
import random
from functools import partial

import numpy as np
import jax
import jax.numpy as jnp
from jax import lax
from jax.experimental import pallas as pl
from jax.experimental.pallas import tpu as pltpu

# ----------------------------- module constants -----------------------------
FS = 24000
C_SOUND = 343
NMICS = 4
NTDOAS = 6
MAX_TAU = 6
TRACKS = 3                      # tracks == 3 -> the `else` branch of TdoaLoss.forward
MAX_EVENTS = 3
IGNORE_IDX = -100
NCLASSES_TDOA = 2 * MAX_TAU + 1  # 13 TDOA classes (pred class dim)

# itertools.permutations(range(3)) order -> matches PitWrapper iteration order
PERMS = ((0, 1, 2), (0, 2, 1), (1, 0, 2), (1, 2, 0), (2, 0, 1), (2, 1, 0))


def _round_up(x, m):
    return ((x + m - 1) // m) * m


# ----------------------------- host-side helpers ----------------------------
def deg2rad(deg):
    return deg * 2 * np.pi / 360


def center_mic_coords(mic_coords, mic_center):
    mic_locs = np.empty((0, 3))
    for coord in mic_coords:
        rad, azi, ele = coord
        azi = deg2rad(azi)
        ele = deg2rad(ele)
        x_offset = rad * np.cos(azi) * np.cos(ele)
        y_offset = rad * np.sin(azi) * np.cos(ele)
        z_offset = rad * np.sin(ele)
        mic_loc = mic_center + np.array([x_offset, y_offset, z_offset])
        mic_locs = np.vstack([mic_locs, mic_loc])
    return mic_locs


MIC_LOCS = center_mic_coords(
    [[0.042, 45, 35], [0.042, -45, -35], [0.042, 135, -35], [0.042, -135, 35]],
    np.array([0.0, 0.0, 0.0]),
)


def get_tdoa_target(target):
    """Host (numpy) re-implementation of TdoaLoss.get_tdoa_target.
    target: (B, T, max_events, F>=5, C_classes) with [activity, doa_xyz, dist] along axis 3."""
    # TODO(synk): data-dependent control flow + random.shuffle has no clean Pallas equivalent; kept on host.
    B, T, _, F, C = target.shape
    tdoas = np.full((B, T, MAX_EVENTS, NTDOAS), np.nan, dtype=np.float32)
    tdoas2 = tdoas.copy()
    for b in range(B):
        for t in range(T):
            tr_cnt = 0
            for tr in range(MAX_EVENTS):
                classes = list(range(C))
                random.shuffle(classes)
                for c in classes:
                    if tr_cnt >= MAX_EVENTS:
                        break
                    active = target[b, t, tr, 0, c]
                    if active:
                        doa = target[b, t, tr, 1:4, c]
                        dist = target[b, t, tr, 4, c]
                        source_loc = doa * dist
                        cnt = 0
                        for m1 in range(NMICS):
                            for m2 in range(m1 + 1, NMICS):
                                mic1 = MIC_LOCS[m1]
                                mic2 = MIC_LOCS[m2]
                                tdoa = (np.sqrt(np.sum((source_loc - mic1) ** 2))
                                        - np.sqrt(np.sum((source_loc - mic2) ** 2)))
                                tdoa = int(np.round(tdoa * FS / C_SOUND))
                                tdoas[b, t, tr_cnt, cnt] = tdoa + MAX_TAU
                                tdoas2[b, t, tr_cnt, cnt] = tdoa + MAX_TAU
                                cnt += 1
                        tr_cnt += 1
            if tr_cnt == 0:
                tdoas[b, t, :, :] = IGNORE_IDX
                tdoas2[b, t, :, :] = IGNORE_IDX
            elif tr_cnt < MAX_EVENTS:
                tdoas[b, t, tr_cnt:, :] = tdoas[b, t, tr_cnt - 1, :]
                tdoas2[b, t, tr_cnt:, :] = tdoas[b, t, 0, :]
    return tdoas, tdoas2


# ------------------------------- Pallas kernel -------------------------------
def tdoa_pit_kernel(pred_ref, tgt_ref, out_ref):
    # Dense layout (sample axis as sublane x lane):
    #   pred_ref: (Tr=3, C=13, TR, 128) f32 — each class slab is a full-vreg (TR, 128) block.
    #   tgt_ref : (8, TR, 128) int32 — rows 0..2 = target variant 1, rows 3..5 = variant 2,
    #             rows 6..7 padding (= -100). Padded samples carry -100 everywhere.
    #   out_ref : (1, 8, 128) f32 per-tile partials in rows 0..3:
    #             loss_sum, pos_cnt, acc_num, acc_den (value broadcast across lanes).
    Tr, C, TR, L = pred_ref.shape
    nperm = len(PERMS)
    nev2 = 2 * MAX_EVENTS

    # --- targets + ignore masks ---
    tgts = [tgt_ref[i] for i in range(nev2)]                    # each (TR, 128) i32
    ignore = [t == IGNORE_IDX for t in tgts]

    # --- single pass over classes: running argmax (strict > keeps first occurrence,
    #     matches torch/np argmax) fused with running-select gather of target logits ---
    p_c = [pred_ref[j, 0] for j in range(Tr)]
    best = [p_c[j] for j in range(Tr)]                          # running max == argmax value
    bidx = [jnp.zeros((TR, L), jnp.int32) for _ in range(Tr)]   # running argmax class index
    mask_c = [t == 0 for t in tgts]
    picks = [[jnp.where(mask_c[i], p_c[j], 0.0) for j in range(Tr)] for i in range(nev2)]
    for c in range(1, C):
        p_c = [pred_ref[j, c] for j in range(Tr)]
        mask_c = [t == c for t in tgts]                         # one compare per target, shared by tracks
        for j in range(Tr):
            better = p_c[j] > best[j]
            best[j] = jnp.where(better, p_c[j], best[j])
            bidx[j] = jnp.where(better, c, bidx[j])
        for i in range(nev2):
            for j in range(Tr):
                picks[i][j] = jnp.where(mask_c[i], p_c[j], picks[i][j])

    # --- log-sum-exp per track (second pass over classes reusing the running max) ---
    lse = []
    for j in range(Tr):
        s = jnp.exp(pred_ref[j, 0] - best[j])
        for c in range(1, C):
            s = s + jnp.exp(pred_ref[j, c] - best[j])
        lse.append(best[j] + jnp.log(s))

    # --- cross-entropy matrix: CE(pred track j, target event i); ignore_index -> 0 ---
    lm = [[jnp.where(ignore[i], 0.0, lse[j] - picks[i][j]) for j in range(Tr)]
          for i in range(nev2)]

    # --- PIT: running argmin over 6 permutations (strict < => first-min tie-break) ---
    def pit(lm3):
        best_l = (lm3[0][0] + lm3[1][1] + lm3[2][2]) * (1.0 / 3.0)   # PERMS[0]
        best_p = jnp.zeros((TR, L), jnp.int32)
        for p_i in range(1, nperm):
            p = PERMS[p_i]
            pls = (lm3[0][p[0]] + lm3[1][p[1]] + lm3[2][p[2]]) * (1.0 / 3.0)
            better = pls < best_l
            best_l = jnp.where(better, pls, best_l)
            best_p = jnp.where(better, p_i, best_p)
        return best_l, best_p

    loss1, p1 = pit(lm[0:MAX_EVENTS])
    loss2, p2 = pit(lm[MAX_EVENTS:nev2])

    sel2 = loss2 < loss1                                        # torch.min keeps index 0 on ties
    loss = jnp.where(sel2, loss2, loss1)
    pidx = jnp.where(sel2, p2, p1)
    tsel = [jnp.where(sel2, tgts[i + MAX_EVENTS], tgts[i]) for i in range(MAX_EVENTS)]

    # --- accuracy under the chosen permutation (perm masks hoisted out of the track loop) ---
    pmask = [pidx == p_i for p_i in range(1, nperm)]
    valid_f = jnp.zeros((TR, L), jnp.float32)
    corr_f = jnp.zeros((TR, L), jnp.float32)
    for k in range(Tr):
        tk = tsel[PERMS[0][k]]
        for p_i in range(1, nperm):
            tk = jnp.where(pmask[p_i - 1], tsel[PERMS[p_i][k]], tk)
        valid = tk != IGNORE_IDX
        correct = jnp.logical_and(valid, bidx[k] == tk)
        valid_f = valid_f + valid.astype(jnp.float32)
        corr_f = corr_f + correct.astype(jnp.float32)

    pos = loss > 0.0

    def tile_sum(x):                                            # (TR, L) -> (1, 1)
        return jnp.sum(jnp.sum(x, axis=0, keepdims=True), axis=1, keepdims=True)

    loss_sum = tile_sum(jnp.where(pos, loss, 0.0))
    pos_cnt = tile_sum(pos.astype(jnp.float32))
    acc_num = tile_sum(corr_f)
    acc_den = tile_sum(valid_f)

    # assemble per-tile partials into one aligned (8, 128) block (rows 0..3 hold the values)
    sub = lax.broadcasted_iota(jnp.int32, (8, 128), 0)
    blk = (jnp.where(sub == 0, loss_sum, 0.0)
           + jnp.where(sub == 1, pos_cnt, 0.0)
           + jnp.where(sub == 2, acc_num, 0.0)
           + jnp.where(sub == 3, acc_den, 0.0))
    out_ref[...] = blk.reshape(1, 8, 128)


# ------------------------------ tiling / device path -------------------------
def _choose_tiling(N, tile_n):
    base = 1024                                   # lane-dim 128 x sublane multiple of 8
    N_pad = _round_up(max(N, 1), base)
    TN = min(_round_up(int(tile_n), base), N_pad)
    # prefer >= 2 tiles when possible (v7x megacore shards the parallel grid axis)
    if N_pad // TN < 2 and N_pad >= 2 * base:
        TN = _round_up(N_pad // 2, base)
    N_pad = _round_up(N_pad, TN)
    return N_pad, TN, N_pad // TN


@partial(jax.jit, static_argnames=("tile_n",))
def _tdoa_loss_device(pred, tpack, tile_n=8192):
    """pred: (B, T, C, Tr, ntdoa) f32 logits; tpack: (8, N) int32 packed targets."""
    B, T, C, Tr, ntdoa = pred.shape
    N = B * T * ntdoa
    N_pad, TN, G = _choose_tiling(N, tile_n)
    TR = TN // 128
    R = N_pad // 128

    # single fused transpose + pad to kernel layout (Tr, C, N//128, 128); padded lanes carry
    # target -100 everywhere -> CE 0, excluded by loss>0 / valid masks.
    predT = jnp.transpose(pred, (3, 2, 0, 1, 4)).reshape(Tr, C, N).astype(jnp.float32)
    if N_pad != N:
        predT = jnp.pad(predT, ((0, 0), (0, 0), (0, N_pad - N)))
    predT = predT.reshape(Tr, C, R, 128)

    tpad = tpack
    if N_pad != N:
        tpad = jnp.pad(tpack, ((0, 0), (0, N_pad - N)), constant_values=IGNORE_IDX)
    tpad = tpad.reshape(8, R, 128)

    partials = pl.pallas_call(
        tdoa_pit_kernel,
        out_shape=jax.ShapeDtypeStruct((G, 8, 128), jnp.float32),
        grid=(G,),
        in_specs=[pl.BlockSpec((Tr, C, TR, 128), lambda i: (0, 0, i, 0)),
                  pl.BlockSpec((8, TR, 128), lambda i: (0, i, 0))],
        out_specs=pl.BlockSpec((1, 8, 128), lambda i: (i, 0, 0)),
        compiler_params=pltpu.CompilerParams(dimension_semantics=("parallel",)),
    )(predT, tpad)

    # final 4-scalar reduction in XLA (keeps the grid axis fully parallel)
    tot = jnp.sum(partials[:, 0:4, 0], axis=0)   # [loss_sum, pos_cnt, acc_num, acc_den]
    loss = tot[0] / tot[1]        # NaN if no sample has loss > 0 -> matches torch mean of empty tensor
    acc = jnp.where(tot[3] > 0.0, tot[2] / tot[3], 0.0)
    return loss, acc


# --------------------------------- wrapper -----------------------------------
def tdoa_loss_pallas(pred, target, shuffle_seed=0, tile_n=8192):
    """pred: (B, T, C=13, Tr=3, ntdoa=6) float32 logits; target: (B, T, 3, 5, C_classes)."""
    B, T, C, Tr, ntdoa = pred.shape
    assert Tr == TRACKS == MAX_EVENTS and C == NCLASSES_TDOA and ntdoa == NTDOAS

    random.seed(shuffle_seed)                     # deterministic random.shuffle on host
    td1, td2 = get_tdoa_target(np.asarray(target))
    N = B * T * ntdoa
    t1 = td1.transpose(0, 1, 3, 2).reshape(N, MAX_EVENTS).astype(np.int32)   # torch-layout targets
    t2 = td2.transpose(0, 1, 3, 2).reshape(N, MAX_EVENTS).astype(np.int32)

    # pack both target variants into one (8, N) int32 slab (rows 6..7 pad = -100)
    tpack = np.full((8, N), IGNORE_IDX, dtype=np.int32)
    tpack[0:3] = t1.T
    tpack[3:6] = t2.T

    loss, acc = _tdoa_loss_device(pred, jnp.asarray(tpack), tile_n=tile_n)
    return loss, acc, t1, t2


# ------------------------ numpy reference (self-check) ------------------------
def ref_forward_np(pred_r, t1, t2):
    pred_r = np.asarray(pred_r, dtype=np.float32)
    N, C, Tr = pred_r.shape
    m = pred_r.max(axis=1, keepdims=True)
    logZ = (m + np.log(np.exp(pred_r - m).sum(axis=1, keepdims=True)))[:, 0, :]   # (N, Tr)

    def pit(t):
        lm = np.zeros((N, 3, 3), dtype=np.float32)
        for i in range(3):
            tgt = t[:, i]
            safe = np.where(tgt == IGNORE_IDX, 0, tgt)
            for j in range(3):
                pick = pred_r[np.arange(N), safe, j]
                lm[:, i, j] = np.where(tgt == IGNORE_IDX, 0.0, logZ[:, j] - pick)
        pls = np.stack([lm[:, [0, 1, 2], list(p)].mean(axis=1) for p in PERMS], axis=1)
        best = pls[:, 0].copy()
        bidx = np.zeros(N, dtype=np.int32)
        for k in range(1, len(PERMS)):
            better = pls[:, k] < best
            bidx = np.where(better, k, bidx)
            best = np.where(better, pls[:, k], best)
        return best, bidx

    l1, p1 = pit(t1)
    l2, p2 = pit(t2)
    sel2 = l2 < l1
    loss = np.where(sel2, l2, l1)
    pidx = np.where(sel2, p2, p1)
    tsel = np.where(sel2[:, None], t2, t1)
    pred_cls = pred_r.argmax(axis=1)
    acc_num = 0.0
    acc_den = 0.0
    for n in range(N):
        perm = PERMS[int(pidx[n])]
        tt = tsel[n, list(perm)]
        valid = tt != IGNORE_IDX
        acc_num += float((pred_cls[n][valid] == tt[valid]).sum())
        acc_den += float(valid.sum())
    acc = acc_num / acc_den if acc_den > 0 else 0.0
    pos = loss > 0.0
    loss_mean = float(loss[pos].mean()) if pos.any() else float("nan")
    return loss_mean, acc


# ----------------------------------- main ------------------------------------
if __name__ == "__main__":
    key = jax.random.PRNGKey(0)
    B, T = 2, 8
    CC = 4   # number of SELD sound-event classes in the target
    k1, k2, k3, k4 = jax.random.split(key, 4)

    active = (jax.random.uniform(k1, (B, T, MAX_EVENTS, CC)) < 0.4).astype(jnp.float32)
    doa = jax.random.normal(k2, (B, T, MAX_EVENTS, 3, CC))
    doa = doa / (jnp.linalg.norm(doa, axis=3, keepdims=True) + 1e-8)
    dist = jax.random.uniform(k3, (B, T, MAX_EVENTS, CC), minval=1.0, maxval=3.0)
    # target layout (as in the torch module): (B, T, max_events, [act, dx, dy, dz, dist], classes)
    target = jnp.concatenate(
        [active[:, :, :, None, :], doa, dist[:, :, :, None, :]], axis=3)

    # pred logits: (B, T, C=2*max_tau+1, tracks, ntdoas)
    pred = jax.random.normal(k4, (B, T, NCLASSES_TDOA, TRACKS, NTDOAS), dtype=jnp.float32)

    loss, acc, t1, t2 = tdoa_loss_pallas(pred, target)
    loss = jax.block_until_ready(loss)
    acc = jax.block_until_ready(acc)

    # reference self-check (host transposes are test-only; not on the production path)
    N = B * T * NTDOAS
    pred_r = np.transpose(np.asarray(pred), (0, 1, 4, 2, 3)).reshape(N, NCLASSES_TDOA, TRACKS)
    ref_loss, ref_acc = ref_forward_np(pred_r, t1, t2)
    np.testing.assert_allclose(float(loss), ref_loss, rtol=1e-4, atol=1e-5)
    np.testing.assert_allclose(float(acc), ref_acc, rtol=1e-4, atol=1e-5)

    print("KERNEL_OK")
</pallas_src>

<mosaic_0001>
module attributes {stable_mosaic.version = 11 : i64} {
  func.func @tdoa_pit_kernel(%arg0: i32, %arg1: memref<3x13x8x128xf32, #tpu.memory_space<vmem>>, %arg2: memref<8x8x128xi32, #tpu.memory_space<vmem>>, %arg3: memref<1x8x128xf32, #tpu.memory_space<vmem>>) attributes {dimension_semantics = [#tpu.dimension_semantics<parallel>], iteration_bounds = array<i64: 1>, scalar_prefetch = 0 : i64, scratch_operands = 0 : i64, tpu.core_type = #tpu.core_type<tc>, window_params = [{transform_indices = @transform_0, window_bounds = array<i64: 3, 13, 8, 128>}, {transform_indices = @transform_1, window_bounds = array<i64: 8, 8, 128>}, {transform_indices = @transform_2, window_bounds = array<i64: 1, 8, 128>}]} {
    %c0 = arith.constant 0 : index
    %c0_0 = arith.constant 0 : index
    %c0_1 = arith.constant 0 : index
    %0 = vector.load %arg2[%c0, %c0_0, %c0_1] : memref<8x8x128xi32, #tpu.memory_space<vmem>>, vector<1x8x128xi32>
    %1 = vector.shape_cast %0 : vector<1x8x128xi32> to vector<8x128xi32>
    %c1 = arith.constant 1 : index
    %c0_2 = arith.constant 0 : index
    %c0_3 = arith.constant 0 : index
    %2 = vector.load %arg2[%c1, %c0_2, %c0_3] : memref<8x8x128xi32, #tpu.memory_space<vmem>>, vector<1x8x128xi32>
    %3 = vector.shape_cast %2 : vector<1x8x128xi32> to vector<8x128xi32>
    %c2 = arith.constant 2 : index
    %c0_4 = arith.constant 0 : index
    %c0_5 = arith.constant 0 : index
    %4 = vector.load %arg2[%c2, %c0_4, %c0_5] : memref<8x8x128xi32, #tpu.memory_space<vmem>>, vector<1x8x128xi32>
    %5 = vector.shape_cast %4 : vector<1x8x128xi32> to vector<8x128xi32>
    %c3 = arith.constant 3 : index
    %c0_6 = arith.constant 0 : index
    %c0_7 = arith.constant 0 : index
    %6 = vector.load %arg2[%c3, %c0_6, %c0_7] : memref<8x8x128xi32, #tpu.memory_space<vmem>>, vector<1x8x128xi32>
    %7 = vector.shape_cast %6 : vector<1x8x128xi32> to vector<8x128xi32>
    %c4 = arith.constant 4 : index
    %c0_8 = arith.constant 0 : index
    %c0_9 = arith.constant 0 : index
    %8 = vector.load %arg2[%c4, %c0_8, %c0_9] : memref<8x8x128xi32, #tpu.memory_space<vmem>>, vector<1x8x128xi32>
    %9 = vector.shape_cast %8 : vector<1x8x128xi32> to vector<8x128xi32>
    %c5 = arith.constant 5 : index
    %c0_10 = arith.constant 0 : index
    %c0_11 = arith.constant 0 : index
    %10 = vector.load %arg2[%c5, %c0_10, %c0_11] : memref<8x8x128xi32, #tpu.memory_space<vmem>>, vector<1x8x128xi32>
    %11 = vector.shape_cast %10 : vector<1x8x128xi32> to vector<8x128xi32>
    %c-100_i32 = arith.constant -100 : i32
    %12 = vector.broadcast %c-100_i32 : i32 to vector<8x128xi32>
    %13 = arith.cmpi eq, %1, %12 : vector<8x128xi32>
    %c-100_i32_12 = arith.constant -100 : i32
    %14 = vector.broadcast %c-100_i32_12 : i32 to vector<8x128xi32>
    %15 = arith.cmpi eq, %3, %14 : vector<8x128xi32>
    %c-100_i32_13 = arith.constant -100 : i32
    %16 = vector.broadcast %c-100_i32_13 : i32 to vector<8x128xi32>
    %17 = arith.cmpi eq, %5, %16 : vector<8x128xi32>
    %c-100_i32_14 = arith.constant -100 : i32
    %18 = vector.broadcast %c-100_i32_14 : i32 to vector<8x128xi32>
    %19 = arith.cmpi eq, %7, %18 : vector<8x128xi32>
    %c-100_i32_15 = arith.constant -100 : i32
    %20 = vector.broadcast %c-100_i32_15 : i32 to vector<8x128xi32>
    %21 = arith.cmpi eq, %9, %20 : vector<8x128xi32>
    %c-100_i32_16 = arith.constant -100 : i32
    %22 = vector.broadcast %c-100_i32_16 : i32 to vector<8x128xi32>
    %23 = arith.cmpi eq, %11, %22 : vector<8x128xi32>
    %c0_17 = arith.constant 0 : index
    %c0_18 = arith.constant 0 : index
    %c0_19 = arith.constant 0 : index
    %c0_20 = arith.constant 0 : index
    %24 = vector.load %arg1[%c0_17, %c0_18, %c0_19, %c0_20] : memref<3x13x8x128xf32, #tpu.memory_space<vmem>>, vector<1x1x8x128xf32>
    %25 = vector.shape_cast %24 : vector<1x1x8x128xf32> to vector<8x128xf32>
    %c1_21 = arith.constant 1 : index
    %c0_22 = arith.constant 0 : index
    %c0_23 = arith.constant 0 : index
    %c0_24 = arith.constant 0 : index
    %26 = vector.load %arg1[%c1_21, %c0_22, %c0_23, %c0_24] : memref<3x13x8x128xf32, #tpu.memory_space<vmem>>, vector<1x1x8x128xf32>
    %27 = vector.shape_cast %26 : vector<1x1x8x128xf32> to vector<8x128xf32>
    %c2_25 = arith.constant 2 : index
    %c0_26 = arith.constant 0 : index
    %c0_27 = arith.constant 0 : index
    %c0_28 = arith.constant 0 : index
    %28 = vector.load %arg1[%c2_25, %c0_26, %c0_27, %c0_28] : memref<3x13x8x128xf32, #tpu.memory_space<vmem>>, vector<1x1x8x128xf32>
    %29 = vector.shape_cast %28 : vector<1x1x8x128xf32> to vector<8x128xf32>
    %c0_i32 = arith.constant 0 : i32
    %30 = vector.broadcast %c0_i32 : i32 to vector<8x128xi32>
    %c0_i32_29 = arith.constant 0 : i32
    %31 = vector.broadcast %c0_i32_29 : i32 to vector<8x128xi32>
    %c0_i32_30 = arith.constant 0 : i32
    %32 = vector.broadcast %c0_i32_30 : i32 to vector<8x128xi32>
    %c0_i32_31 = arith.constant 0 : i32
    %33 = vector.broadcast %c0_i32_31 : i32 to vector<8x128xi32>
    %34 = arith.cmpi eq, %1, %33 : vector<8x128xi32>
    %c0_i32_32 = arith.constant 0 : i32
    %35 = vector.broadcast %c0_i32_32 : i32 to vector<8x128xi32>
    %36 = arith.cmpi eq, %3, %35 : vector<8x128xi32>
    %c0_i32_33 = arith.constant 0 : i32
    %37 = vector.broadcast %c0_i32_33 : i32 to vector<8x128xi32>
    %38 = arith.cmpi eq, %5, %37 : vector<8x128xi32>
    %c0_i32_34 = arith.constant 0 : i32
    %39 = vector.broadcast %c0_i32_34 : i32 to vector<8x128xi32>
    %40 = arith.cmpi eq, %7, %39 : vector<8x128xi32>
    %c0_i32_35 = arith.constant 0 : i32
    %41 = vector.broadcast %c0_i32_35 : i32 to vector<8x128xi32>
    %42 = arith.cmpi eq, %9, %41 : vector<8x128xi32>
    %c0_i32_36 = arith.constant 0 : i32
    %43 = vector.broadcast %c0_i32_36 : i32 to vector<8x128xi32>
    %44 = arith.cmpi eq, %11, %43 : vector<8x128xi32>
    %cst = arith.constant 0.000000e+00 : f32
    %45 = vector.broadcast %cst : f32 to vector<8x128xf32>
    %46 = arith.select %34, %25, %45 : vector<8x128xi1>, vector<8x128xf32>
    %cst_37 = arith.constant 0.000000e+00 : f32
    %47 = vector.broadcast %cst_37 : f32 to vector<8x128xf32>
    %48 = arith.select %34, %27, %47 : vector<8x128xi1>, vector<8x128xf32>
    %cst_38 = arith.constant 0.000000e+00 : f32
    %49 = vector.broadcast %cst_38 : f32 to vector<8x128xf32>
    %50 = arith.select %34, %29, %49 : vector<8x128xi1>, vector<8x128xf32>
    %cst_39 = arith.constant 0.000000e+00 : f32
    %51 = vector.broadcast %cst_39 : f32 to vector<8x128xf32>
    %52 = arith.select %36, %25, %51 : vector<8x128xi1>, vector<8x128xf32>
    %cst_40 = arith.constant 0.000000e+00 : f32
    %53 = vector.broadcast %cst_40 : f32 to vector<8x128xf32>
    %54 = arith.select %36, %27, %53 : vector<8x128xi1>, vector<8x128xf32>
    %cst_41 = arith.constant 0.000000e+00 : f32
    %55 = vector.broadcast %cst_41 : f32 to vector<8x128xf32>
    %56 = arith.select %36, %29, %55 : vector<8x128xi1>, vector<8x128xf32>
    %cst_42 = arith.constant 0.000000e+00 : f32
    %57 = vector.broadcast %cst_42 : f32 to vector<8x128xf32>
    %58 = arith.select %38, %25, %57 : vector<8x128xi1>, vector<8x128xf32>
    %cst_43 = arith.constant 0.000000e+00 : f32
    %59 = vector.broadcast %cst_43 : f32 to vector<8x128xf32>
    %60 = arith.select %38, %27, %59 : vector<8x128xi1>, vector<8x128xf32>
    %cst_44 = arith.constant 0.000000e+00 : f32
    %61 = vector.broadcast %cst_44 : f32 to vector<8x128xf32>
    %62 = arith.select %38, %29, %61 : vector<8x128xi1>, vector<8x128xf32>
    %cst_45 = arith.constant 0.000000e+00 : f32
    %63 = vector.broadcast %cst_45 : f32 to vector<8x128xf32>
    %64 = arith.select %40, %25, %63 : vector<8x128xi1>, vector<8x128xf32>
    %cst_46 = arith.constant 0.000000e+00 : f32
    %65 = vector.broadcast %cst_46 : f32 to vector<8x128xf32>
    %66 = arith.select %40, %27, %65 : vector<8x128xi1>, vector<8x128xf32>
    %cst_47 = arith.constant 0.000000e+00 : f32
    %67 = vector.broadcast %cst_47 : f32 to vector<8x128xf32>
    %68 = arith.select %40, %29, %67 : vector<8x128xi1>, vector<8x128xf32>
    %cst_48 = arith.constant 0.000000e+00 : f32
    %69 = vector.broadcast %cst_48 : f32 to vector<8x128xf32>
    %70 = arith.select %42, %25, %69 : vector<8x128xi1>, vector<8x128xf32>
    %cst_49 = arith.constant 0.000000e+00 : f32
    %71 = vector.broadcast %cst_49 : f32 to vector<8x128xf32>
    %72 = arith.select %42, %27, %71 : vector<8x128xi1>, vector<8x128xf32>
    %cst_50 = arith.constant 0.000000e+00 : f32
    %73 = vector.broadcast %cst_50 : f32 to vector<8x128xf32>
    %74 = arith.select %42, %29, %73 : vector<8x128xi1>, vector<8x128xf32>
    %cst_51 = arith.constant 0.000000e+00 : f32
    %75 = vector.broadcast %cst_51 : f32 to vector<8x128xf32>
    %76 = arith.select %44, %25, %75 : vector<8x128xi1>, vector<8x128xf32>
    %cst_52 = arith.constant 0.000000e+00 : f32
    %77 = vector.broadcast %cst_52 : f32 to vector<8x128xf32>
    %78 = arith.select %44, %27, %77 : vector<8x128xi1>, vector<8x128xf32>
    %cst_53 = arith.constant 0.000000e+00 : f32
    %79 = vector.broadcast %cst_53 : f32 to vector<8x128xf32>
    %80 = arith.select %44, %29, %79 : vector<8x128xi1>, vector<8x128xf32>
    %c0_54 = arith.constant 0 : index
    %c1_55 = arith.constant 1 : index
    %c0_56 = arith.constant 0 : index
    %c0_57 = arith.constant 0 : index
    %81 = vector.load %arg1[%c0_54, %c1_55, %c0_56, %c0_57] : memref<3x13x8x128xf32, #tpu.memory_space<vmem>>, vector<1x1x8x128xf32>
    %82 = vector.shape_cast %81 : vector<1x1x8x128xf32> to vector<8x128xf32>
    %c1_58 = arith.constant 1 : index
    %c1_59 = arith.constant 1 : index
    %c0_60 = arith.constant 0 : index
    %c0_61 = arith.constant 0 : index
    %83 = vector.load %arg1[%c1_58, %c1_59, %c0_60, %c0_61] : memref<3x13x8x128xf32, #tpu.memory_space<vmem>>, vector<1x1x8x128xf32>
    %84 = vector.shape_cast %83 : vector<1x1x8x128xf32> to vector<8x128xf32>
    %c2_62 = arith.constant 2 : index
    %c1_63 = arith.constant 1 : index
    %c0_64 = arith.constant 0 : index
    %c0_65 = arith.constant 0 : index
    %85 = vector.load %arg1[%c2_62, %c1_63, %c0_64, %c0_65] : memref<3x13x8x128xf32, #tpu.memory_space<vmem>>, vector<1x1x8x128xf32>
    %86 = vector.shape_cast %85 : vector<1x1x8x128xf32> to vector<8x128xf32>
    %c1_i32 = arith.constant 1 : i32
    %87 = vector.broadcast %c1_i32 : i32 to vector<8x128xi32>
    %88 = arith.cmpi eq, %1, %87 : vector<8x128xi32>
    %c1_i32_66 = arith.constant 1 : i32
    %89 = vector.broadcast %c1_i32_66 : i32 to vector<8x128xi32>
    %90 = arith.cmpi eq, %3, %89 : vector<8x128xi32>
    %c1_i32_67 = arith.constant 1 : i32
    %91 = vector.broadcast %c1_i32_67 : i32 to vector<8x128xi32>
    %92 = arith.cmpi eq, %5, %91 : vector<8x128xi32>
    %c1_i32_68 = arith.constant 1 : i32
    %93 = vector.broadcast %c1_i32_68 : i32 to vector<8x128xi32>
    %94 = arith.cmpi eq, %7, %93 : vector<8x128xi32>
    %c1_i32_69 = arith.constant 1 : i32
    %95 = vector.broadcast %c1_i32_69 : i32 to vector<8x128xi32>
    %96 = arith.cmpi eq, %9, %95 : vector<8x128xi32>
    %c1_i32_70 = arith.constant 1 : i32
    %97 = vector.broadcast %c1_i32_70 : i32 to vector<8x128xi32>
    %98 = arith.cmpi eq, %11, %97 : vector<8x128xi32>
    %99 = arith.cmpf ogt, %82, %25 : vector<8x128xf32>
    %100 = arith.select %99, %82, %25 : vector<8x128xi1>, vector<8x128xf32>
    %c1_i32_71 = arith.constant 1 : i32
    %101 = vector.broadcast %c1_i32_71 : i32 to vector<8x128xi32>
    %102 = arith.select %99, %101, %30 : vector<8x128xi1>, vector<8x128xi32>
    %103 = arith.cmpf ogt, %84, %27 : vector<8x128xf32>
    %104 = arith.select %103, %84, %27 : vector<8x128xi1>, vector<8x128xf32>
    %c1_i32_72 = arith.constant 1 : i32
    %105 = vector.broadcast %c1_i32_72 : i32 to vector<8x128xi32>
    %106 = arith.select %103, %105, %31 : vector<8x128xi1>, vector<8x128xi32>
    %107 = arith.cmpf ogt, %86, %29 : vector<8x128xf32>
    %108 = arith.select %107, %86, %29 : vector<8x128xi1>, vector<8x128xf32>
    %c1_i32_73 = arith.constant 1 : i32
    %109 = vector.broadcast %c1_i32_73 : i32 to vector<8x128xi32>
    %110 = arith.select %107, %109, %32 : vector<8x128xi1>, vector<8x128xi32>
    %111 = arith.select %88, %82, %46 : vector<8x128xi1>, vector<8x128xf32>
    %112 = arith.select %88, %84, %48 : vector<8x128xi1>, vector<8x128xf32>
    %113 = arith.select %88, %86, %50 : vector<8x128xi1>, vector<8x128xf32>
    %114 = arith.select %90, %82, %52 : vector<8x128xi1>, vector<8x128xf32>
    %115 = arith.select %90, %84, %54 : vector<8x128xi1>, vector<8x128xf32>
    %116 = arith.select %90, %86, %56 : vector<8x128xi1>, vector<8x128xf32>
    %117 = arith.select %92, %82, %58 : vector<8x128xi1>, vector<8x128xf32>
    %118 = arith.select %92, %84, %60 : vector<8x128xi1>, vector<8x128xf32>
    %119 = arith.select %92, %86, %62 : vector<8x128xi1>, vector<8x128xf32>
    %120 = arith.select %94, %82, %64 : vector<8x128xi1>, vector<8x128xf32>
    %121 = arith.select %94, %84, %66 : vector<8x128xi1>, vector<8x128xf32>
    %122 = arith.select %94, %86, %68 : vector<8x128xi1>, vector<8x128xf32>
    %123 = arith.select %96, %82, %70 : vector<8x128xi1>, vector<8x128xf32>
    %124 = arith.select %96, %84, %72 : vector<8x128xi1>, vector<8x128xf32>
    %125 = arith.select %96, %86, %74 : vector<8x128xi1>, vector<8x128xf32>
    %126 = arith.select %98, %82, %76 : vector<8x128xi1>, vector<8x128xf32>
    %127 = arith.select %98, %84, %78 : vector<8x128xi1>, vector<8x128xf32>
    %128 = arith.select %98, %86, %80 : vector<8x128xi1>, vector<8x128xf32>
    %c0_74 = arith.constant 0 : index
    %c2_75 = arith.constant 2 : index
    %c0_76 = arith.constant 0 : index
    %c0_77 = arith.constant 0 : index
    %129 = vector.load %arg1[%c0_74, %c2_75, %c0_76, %c0_77] : memref<3x13x8x128xf32, #tpu.memory_space<vmem>>, vector<1x1x8x128xf32>
    %130 = vector.shape_cast %129 : vector<1x1x8x128xf32> to vector<8x128xf32>
    %c1_78 = arith.constant 1 : index
    %c2_79 = arith.constant 2 : index
    %c0_80 = arith.constant 0 : index
    %c0_81 = arith.constant 0 : index
    %131 = vector.load %arg1[%c1_78, %c2_79, %c0_80, %c0_81] : memref<3x13x8x128xf32, #tpu.memory_space<vmem>>, vector<1x1x8x128xf32>
    %132 = vector.shape_cast %131 : vector<1x1x8x128xf32> to vector<8x128xf32>
    %c2_82 = arith.constant 2 : index
    %c2_83 = arith.constant 2 : index
    %c0_84 = arith.constant 0 : index
    %c0_85 = arith.constant 0 : index
    %133 = vector.load %arg1[%c2_82, %c2_83, %c0_84, %c0_85] : memref<3x13x8x128xf32, #tpu.memory_space<vmem>>, vector<1x1x8x128xf32>
    %134 = vector.shape_cast %133 : vector<1x1x8x128xf32> to vector<8x128xf32>
    %c2_i32 = arith.constant 2 : i32
    %135 = vector.broadcast %c2_i32 : i32 to vector<8x128xi32>
    %136 = arith.cmpi eq, %1, %135 : vector<8x128xi32>
    %c2_i32_86 = arith.constant 2 : i32
    %137 = vector.broadcast %c2_i32_86 : i32 to vector<8x128xi32>
    %138 = arith.cmpi eq, %3, %137 : vector<8x128xi32>
    %c2_i32_87 = arith.constant 2 : i32
    %139 = vector.broadcast %c2_i32_87 : i32 to vector<8x128xi32>
    %140 = arith.cmpi eq, %5, %139 : vector<8x128xi32>
    %c2_i32_88 = arith.constant 2 : i32
    %141 = vector.broadcast %c2_i32_88 : i32 to vector<8x128xi32>
    %142 = arith.cmpi eq, %7, %141 : vector<8x128xi32>
    %c2_i32_89 = arith.constant 2 : i32
    %143 = vector.broadcast %c2_i32_89 : i32 to vector<8x128xi32>
    %144 = arith.cmpi eq, %9, %143 : vector<8x128xi32>
    %c2_i32_90 = arith.constant 2 : i32
    %145 = vector.broadcast %c2_i32_90 : i32 to vector<8x128xi32>
    %146 = arith.cmpi eq, %11, %145 : vector<8x128xi32>
    %147 = arith.cmpf ogt, %130, %100 : vector<8x128xf32>
    %148 = arith.select %147, %130, %100 : vector<8x128xi1>, vector<8x128xf32>
    %c2_i32_91 = arith.constant 2 : i32
    %149 = vector.broadcast %c2_i32_91 : i32 to vector<8x128xi32>
    %150 = arith.select %147, %149, %102 : vector<8x128xi1>, vector<8x128xi32>
    %151 = arith.cmpf ogt, %132, %104 : vector<8x128xf32>
    %152 = arith.select %151, %132, %104 : vector<8x128xi1>, vector<8x128xf32>
    %c2_i32_92 = arith.constant 2 : i32
    %153 = vector.broadcast %c2_i32_92 : i32 to vector<8x128xi32>
    %154 = arith.select %151, %153, %106 : vector<8x128xi1>, vector<8x128xi32>
    %155 = arith.cmpf ogt, %134, %108 : vector<8x128xf32>
    %156 = arith.select %155, %134, %108 : vector<8x128xi1>, vector<8x128xf32>
    %c2_i32_93 = arith.constant 2 : i32
    %157 = vector.broadcast %c2_i32_93 : i32 to vector<8x128xi32>
    %158 = arith.select %155, %157, %110 : vector<8x128xi1>, vector<8x128xi32>
    %159 = arith.select %136, %130, %111 : vector<8x128xi1>, vector<8x128xf32>
    %160 = arith.select %136, %132, %112 : vector<8x128xi1>, vector<8x128xf32>
    %161 = arith.select %136, %134, %113 : vector<8x128xi1>, vector<8x128xf32>
    %162 = arith.select %138, %130, %114 : vector<8x128xi1>, vector<8x128xf32>
    %163 = arith.select %138, %132, %115 : vector<8x128xi1>, vector<8x128xf32>
    %164 = arith.select %138, %134, %116 : vector<8x128xi1>, vector<8x128xf32>
    %165 = arith.select %140, %130, %117 : vector<8x128xi1>, vector<8x128xf32>
    %166 = arith.select %140, %132, %118 : vector<8x128xi1>, vector<8x128xf32>
    %167 = arith.select %140, %134, %119 : vector<8x128xi1>, vector<8x128xf32>
    %168 = arith.select %142, %130, %120 : vector<8x128xi1>, vector<8x128xf32>
    %169 = arith.select %142, %132, %121 : vector<8x128xi1>, vector<8x128xf32>
    %170 = arith.select %142, %134, %122 : vector<8x128xi1>, vector<8x128xf32>
    %171 = arith.select %144, %130, %123 : vector<8x128xi1>, vector<8x128xf32>
    %172 = arith.select %144, %132, %124 : vector<8x128xi1>, vector<8x128xf32>
    %173 = arith.select %144, %134, %125 : vector<8x128xi1>, vector<8x128xf32>
    %174 = arith.select %146, %130, %126 : vector<8x128xi1>, vector<8x128xf32>
    %175 = arith.select %146, %132, %127 : vector<8x128xi1>, vector<8x128xf32>
    %176 = arith.select %146, %134, %128 : vector<8x128xi1>, vector<8x128xf32>
    %c0_94 = arith.constant 0 : index
    %c3_95 = arith.constant 3 : index
    %c0_96 = arith.constant 0 : index
    %c0_97 = arith.constant 0 : index
    %177 = vector.load %arg1[%c0_94, %c3_95, %c0_96, %c0_97] : memref<3x13x8x128xf32, #tpu.memory_space<vmem>>, vector<1x1x8x128xf32>
    %178 = vector.shape_cast %177 : vector<1x1x8x128xf32> to vector<8x128xf32>
    %c1_98 = arith.constant 1 : index
    %c3_99 = arith.constant 3 : index
    %c0_100 = arith.constant 0 : index
    %c0_101 = arith.constant 0 : index
    %179 = vector.load %arg1[%c1_98, %c3_99, %c0_100, %c0_101] : memref<3x13x8x128xf32, #tpu.memory_space<vmem>>, vector<1x1x8x128xf32>
    %180 = vector.shape_cast %179 : vector<1x1x8x128xf32> to vector<8x128xf32>
    %c2_102 = arith.constant 2 : index
    %c3_103 = arith.constant 3 : index
    %c0_104 = arith.constant 0 : index
    %c0_105 = arith.constant 0 : index
    %181 = vector.load %arg1[%c2_102, %c3_103, %c0_104, %c0_105] : memref<3x13x8x128xf32, #tpu.memory_space<vmem>>, vector<1x1x8x128xf32>
    %182 = vector.shape_cast %181 : vector<1x1x8x128xf32> to vector<8x128xf32>
    %c3_i32 = arith.constant 3 : i32
    %183 = vector.broadcast %c3_i32 : i32 to vector<8x128xi32>
    %184 = arith.cmpi eq, %1, %183 : vector<8x128xi32>
    %c3_i32_106 = arith.constant 3 : i32
    %185 = vector.broadcast %c3_i32_106 : i32 to vector<8x128xi32>
    %186 = arith.cmpi eq, %3, %185 : vector<8x128xi32>
    %c3_i32_107 = arith.constant 3 : i32
    %187 = vector.broadcast %c3_i32_107 : i32 to vector<8x128xi32>
    %188 = arith.cmpi eq, %5, %187 : vector<8x128xi32>
    %c3_i32_108 = arith.constant 3 : i32
    %189 = vector.broadcast %c3_i32_108 : i32 to vector<8x128xi32>
    %190 = arith.cmpi eq, %7, %189 : vector<8x128xi32>
    %c3_i32_109 = arith.constant 3 : i32
    %191 = vector.broadcast %c3_i32_109 : i32 to vector<8x128xi32>
    %192 = arith.cmpi eq, %9, %191 : vector<8x128xi32>
    %c3_i32_110 = arith.constant 3 : i32
    %193 = vector.broadcast %c3_i32_110 : i32 to vector<8x128xi32>
    %194 = arith.cmpi eq, %11, %193 : vector<8x128xi32>
    %195 = arith.cmpf ogt, %178, %148 : vector<8x128xf32>
    %196 = arith.select %195, %178, %148 : vector<8x128xi1>, vector<8x128xf32>
    %c3_i32_111 = arith.constant 3 : i32
    %197 = vector.broadcast %c3_i32_111 : i32 to vector<8x128xi32>
    %198 = arith.select %195, %197, %150 : vector<8x128xi1>, vector<8x128xi32>
    %199 = arith.cmpf ogt, %180, %152 : vector<8x128xf32>
    %200 = arith.select %199, %180, %152 : vector<8x128xi1>, vector<8x128xf32>
    %c3_i32_112 = arith.constant 3 : i32
    %201 = vector.broadcast %c3_i32_112 : i32 to vector<8x128xi32>
    %202 = arith.select %199, %201, %154 : vector<8x128xi1>, vector<8x128xi32>
    %203 = arith.cmpf ogt, %182, %156 : vector<8x128xf32>
    %204 = arith.select %203, %182, %156 : vector<8x128xi1>, vector<8x128xf32>
    %c3_i32_113 = arith.constant 3 : i32
    %205 = vector.broadcast %c3_i32_113 : i32 to vector<8x128xi32>
    %206 = arith.select %203, %205, %158 : vector<8x128xi1>, vector<8x128xi32>
    %207 = arith.select %184, %178, %159 : vector<8x128xi1>, vector<8x128xf32>
    %208 = arith.select %184, %180, %160 : vector<8x128xi1>, vector<8x128xf32>
    %209 = arith.select %184, %182, %161 : vector<8x128xi1>, vector<8x128xf32>
    %210 = arith.select %186, %178, %162 : vector<8x128xi1>, vector<8x128xf32>
    %211 = arith.select %186, %180, %163 : vector<8x128xi1>, vector<8x128xf32>
    %212 = arith.select %186, %182, %164 : vector<8x128xi1>, vector<8x128xf32>
    %213 = arith.select %188, %178, %165 : vector<8x128xi1>, vector<8x128xf32>
    %214 = arith.select %188, %180, %166 : vector<8x128xi1>, vector<8x128xf32>
    %215 = arith.select %188, %182, %167 : vector<8x128xi1>, vector<8x128xf32>
    %216 = arith.select %190, %178, %168 : vector<8x128xi1>, vector<8x128xf32>
    %217 = arith.select %190, %180, %169 : vector<8x128xi1>, vector<8x128xf32>
    %218 = arith.select %190, %182, %170 : vector<8x128xi1>, vector<8x128xf32>
    %219 = arith.select %192, %178, %171 : vector<8x128xi1>, vector<8x128xf32>
    %220 = arith.select %192, %180, %172 : vector<8x128xi1>, vector<8x128xf32>
    %221 = arith.select %192, %182, %173 : vector<8x128xi1>, vector<8x128xf32>
    %222 = arith.select %194, %178, %174 : vector<8x128xi1>, vector<8x128xf32>
    %223 = arith.select %194, %180, %175 : vector<8x128xi1>, vector<8x128xf32>
    %224 = arith.select %194, %182, %176 : vector<8x128xi1>, vector<8x128xf32>
    %c0_114 = arith.constant 0 : index
    %c4_115 = arith.constant 4 : index
    %c0_116 = arith.constant 0 : index
    %c0_117 = arith.constant 0 : index
    %225 = vector.load %arg1[%c0_114, %c4_115, %c0_116, %c0_117] : memref<3x13x8x128xf32, #tpu.memory_space<vmem>>, vector<1x1x8x128xf32>
    %226 = vector.shape_cast %225 : vector<1x1x8x128xf32> to vector<8x128xf32>
    %c1_118 = arith.constant 1 : index
    %c4_119 = arith.constant 4 : index
    %c0_120 = arith.constant 0 : index
    %c0_121 = arith.constant 0 : index
    %227 = vector.load %arg1[%c1_118, %c4_119, %c0_120, %c0_121] : memref<3x13x8x128xf32, #tpu.memory_space<vmem>>, vector<1x1x8x128xf32>
    %228 = vector.shape_cast %227 : vector<1x1x8x128xf32> to vector<8x128xf32>
    %c2_122 = arith.constant 2 : index
    %c4_123 = arith.constant 4 : index
    %c0_124 = arith.constant 0 : index
    %c0_125 = arith.constant 0 : index
    %229 = vector.load %arg1[%c2_122, %c4_123, %c0_124, %c0_125] : memref<3x13x8x128xf32, #tpu.memory_space<vmem>>, vector<1x1x8x128xf32>
    %230 = vector.shape_cast %229 : vector<1x1x8x128xf32> to vector<8x128xf32>
    %c4_i32 = arith.constant 4 : i32
    %231 = vector.broadcast %c4_i32 : i32 to vector<8x128xi32>
    %232 = arith.cmpi eq, %1, %231 : vector<8x128xi32>
    %c4_i32_126 = arith.constant 4 : i32
    %233 = vector.broadcast %c4_i32_126 : i32 to vector<8x128xi32>
    %234 = arith.cmpi eq, %3, %233 : vector<8x128xi32>
    %c4_i32_127 = arith.constant 4 : i32
    %235 = vector.broadcast %c4_i32_127 : i32 to vector<8x128xi32>
    %236 = arith.cmpi eq, %5, %235 : vector<8x128xi32>
    %c4_i32_128 = arith.constant 4 : i32
    %237 = vector.broadcast %c4_i32_128 : i32 to vector<8x128xi32>
    %238 = arith.cmpi eq, %7, %237 : vector<8x128xi32>
    %c4_i32_129 = arith.constant 4 : i32
    %239 = vector.broadcast %c4_i32_129 : i32 to vector<8x128xi32>
    %240 = arith.cmpi eq, %9, %239 : vector<8x128xi32>
    %c4_i32_130 = arith.constant 4 : i32
    %241 = vector.broadcast %c4_i32_130 : i32 to vector<8x128xi32>
    %242 = arith.cmpi eq, %11, %241 : vector<8x128xi32>
    %243 = arith.cmpf ogt, %226, %196 : vector<8x128xf32>
    %244 = arith.select %243, %226, %196 : vector<8x128xi1>, vector<8x128xf32>
    %c4_i32_131 = arith.constant 4 : i32
    %245 = vector.broadcast %c4_i32_131 : i32 to vector<8x128xi32>
    %246 = arith.select %243, %245, %198 : vector<8x128xi1>, vector<8x128xi32>
    %247 = arith.cmpf ogt, %228, %200 : vector<8x128xf32>
    %248 = arith.select %247, %228, %200 : vector<8x128xi1>, vector<8x128xf32>
    %c4_i32_132 = arith.constant 4 : i32
    %249 = vector.broadcast %c4_i32_132 : i32 to vector<8x128xi32>
    %250 = arith.select %247, %249, %202 : vector<8x128xi1>, vector<8x128xi32>
    %251 = arith.cmpf ogt, %230, %204 : vector<8x128xf32>
    %252 = arith.select %251, %230, %204 : vector<8x128xi1>, vector<8x128xf32>
    %c4_i32_133 = arith.constant 4 : i32
    %253 = vector.broadcast %c4_i32_133 : i32 to vector<8x128xi32>
    %254 = arith.select %251, %253, %206 : vector<8x128xi1>, vector<8x128xi32>
    %255 = arith.select %232, %226, %207 : vector<8x128xi1>, vector<8x128xf32>
    %256 = arith.select %232, %228, %208 : vector<8x128xi1>, vector<8x128xf32>
    %257 = arith.select %232, %230, %209 : vector<8x128xi1>, vector<8x128xf32>
    %258 = arith.select %234, %226, %210 : vector<8x128xi1>, vector<8x128xf32>
    %259 = arith.select %234, %228, %211 : vector<8x128xi1>, vector<8x128xf32>
    %260 = arith.select %234, %230, %212 : vector<8x128xi1>, vector<8x128xf32>
    %261 = arith.select %236, %226, %213 : vector<8x128xi1>, vector<8x128xf32>
    %262 = arith.select %236, %228, %214 : vector<8x128xi1>, vector<8x128xf32>
    %263 = arith.select %236, %230, %215 : vector<8x128xi1>, vector<8x128xf32>
    %264 = arith.select %238, %226, %216 : vector<8x128xi1>, vector<8x128xf32>
    %265 = arith.select %238, %228, %217 : vector<8x128xi1>, vector<8x128xf32>
    %266 = arith.select %238, %230, %218 : vector<8x128xi1>, vector<8x128xf32>
    %267 = arith.select %240, %226, %219 : vector<8x128xi1>, vector<8x128xf32>
    %268 = arith.select %240, %228, %220 : vector<8x128xi1>, vector<8x128xf32>
    %269 = arith.select %240, %230, %221 : vector<8x128xi1>, vector<8x128xf32>
    %270 = arith.select %242, %226, %222 : vector<8x128xi1>, vector<8x128xf32>
    %271 = arith.select %242, %228, %223 : vector<8x128xi1>, vector<8x128xf32>
    %272 = arith.select %242, %230, %224 : vector<8x128xi1>, vector<8x128xf32>
    %c0_134 = arith.constant 0 : index
    %c5_135 = arith.constant 5 : index
    %c0_136 = arith.constant 0 : index
    %c0_137 = arith.constant 0 : index
    %273 = vector.load %arg1[%c0_134, %c5_135, %c0_136, %c0_137] : memref<3x13x8x128xf32, #tpu.memory_space<vmem>>, vector<1x1x8x128xf32>
    %274 = vector.shape_cast %273 : vector<1x1x8x128xf32> to vector<8x128xf32>
    %c1_138 = arith.constant 1 : index
    %c5_139 = arith.constant 5 : index
    %c0_140 = arith.constant 0 : index
    %c0_141 = arith.constant 0 : index
    %275 = vector.load %arg1[%c1_138, %c5_139, %c0_140, %c0_141] : memref<3x13x8x128xf32, #tpu.memory_space<vmem>>, vector<1x1x8x128xf32>
    %276 = vector.shape_cast %275 : vector<1x1x8x128xf32> to vector<8x128xf32>
    %c2_142 = arith.constant 2 : index
    %c5_143 = arith.constant 5 : index
    %c0_144 = arith.constant 0 : index
    %c0_145 = arith.constant 0 : index
    %277 = vector.load %arg1[%c2_142, %c5_143, %c0_144, %c0_145] : memref<3x13x8x128xf32, #tpu.memory_space<vmem>>, vector<1x1x8x128xf32>
    %278 = vector.shape_cast %277 : vector<1x1x8x128xf32> to vector<8x128xf32>
    %c5_i32 = arith.constant 5 : i32
    %279 = vector.broadcast %c5_i32 : i32 to vector<8x128xi32>
    %280 = arith.cmpi eq, %1, %279 : vector<8x128xi32>
    %c5_i32_146 = arith.constant 5 : i32
    %281 = vector.broadcast %c5_i32_146 : i32 to vector<8x128xi32>
    %282 = arith.cmpi eq, %3, %281 : vector<8x128xi32>
    %c5_i32_147 = arith.constant 5 : i32
    %283 = vector.broadcast %c5_i32_147 : i32 to vector<8x128xi32>
    %284 = arith.cmpi eq, %5, %283 : vector<8x128xi32>
    %c5_i32_148 = arith.constant 5 : i32
    %285 = vector.broadcast %c5_i32_148 : i32 to vector<8x128xi32>
    %286 = arith.cmpi eq, %7, %285 : vector<8x128xi32>
    %c5_i32_149 = arith.constant 5 : i32
    %287 = vector.broadcast %c5_i32_149 : i32 to vector<8x128xi32>
    %288 = arith.cmpi eq, %9, %287 : vector<8x128xi32>
    %c5_i32_150 = arith.constant 5 : i32
    %289 = vector.broadcast %c5_i32_150 : i32 to vector<8x128xi32>
    %290 = arith.cmpi eq, %11, %289 : vector<8x128xi32>
    %291 = arith.cmpf ogt, %274, %244 : vector<8x128xf32>
    %292 = arith.select %291, %274, %244 : vector<8x128xi1>, vector<8x128xf32>
    %c5_i32_151 = arith.constant 5 : i32
    %293 = vector.broadcast %c5_i32_151 : i32 to vector<8x128xi32>
    %294 = arith.select %291, %293, %246 : vector<8x128xi1>, vector<8x128xi32>
    %295 = arith.cmpf ogt, %276, %248 : vector<8x128xf32>
    %296 = arith.select %295, %276, %248 : vector<8x128xi1>, vector<8x128xf32>
    %c5_i32_152 = arith.constant 5 : i32
    %297 = vector.broadcast %c5_i32_152 : i32 to vector<8x128xi32>
    %298 = arith.select %295, %297, %250 : vector<8x128xi1>, vector<8x128xi32>
    %299 = arith.cmpf ogt, %278, %252 : vector<8x128xf32>
    %300 = arith.select %299, %278, %252 : vector<8x128xi1>, vector<8x128xf32>
    %c5_i32_153 = arith.constant 5 : i32
    %301 = vector.broadcast %c5_i32_153 : i32 to vector<8x128xi32>
    %302 = arith.select %299, %301, %254 : vector<8x128xi1>, vector<8x128xi32>
    %303 = arith.select %280, %274, %255 : vector<8x128xi1>, vector<8x128xf32>
    %304 = arith.select %280, %276, %256 : vector<8x128xi1>, vector<8x128xf32>
    %305 = arith.select %280, %278, %257 : vector<8x128xi1>, vector<8x128xf32>
    %306 = arith.select %282, %274, %258 : vector<8x128xi1>, vector<8x128xf32>
    %307 = arith.select %282, %276, %259 : vector<8x128xi1>, vector<8x128xf32>
    %308 = arith.select %282, %278, %260 : vector<8x128xi1>, vector<8x128xf32>
    %309 = arith.select %284, %274, %261 : vector<8x128xi1>, vector<8x128xf32>
    %310 = arith.select %284, %276, %262 : vector<8x128xi1>, vector<8x128xf32>
    %311 = arith.select %284, %278, %263 : vector<8x128xi1>, vector<8x128xf32>
    %312 = arith.select %286, %274, %264 : vector<8x128xi1>, vector<8x128xf32>
    %313 = arith.select %286, %276, %265 : vector<8x128xi1>, vector<8x128xf32>
    %314 = arith.select %286, %278, %266 : vector<8x128xi1>, vector<8x128xf32>
    %315 = arith.select %288, %274, %267 : vector<8x128xi1>, vector<8x128xf32>
    %316 = arith.select %288, %276, %268 : vector<8x128xi1>, vector<8x128xf32>
    %317 = arith.select %288, %278, %269 : vector<8x128xi1>, vector<8x128xf32>
    %318 = arith.select %290, %274, %270 : vector<8x128xi1>, vector<8x128xf32>
    %319 = arith.select %290, %276, %271 : vector<8x128xi1>, vector<8x128xf32>
    %320 = arith.select %290, %278, %272 : vector<8x128xi1>, vector<8x128xf32>
    %c0_154 = arith.constant 0 : index
    %c6 = arith.constant 6 : index
    %c0_155 = arith.constant 0 : index
    %c0_156 = arith.constant 0 : index
    %321 = vector.load %arg1[%c0_154, %c6, %c0_155, %c0_156] : memref<3x13x8x128xf32, #tpu.memory_space<vmem>>, vector<1x1x8x128xf32>
    %322 = vector.shape_cast %321 : vector<1x1x8x128xf32> to vector<8x128xf32>
    %c1_157 = arith.constant 1 : index
    %c6_158 = arith.constant 6 : index
    %c0_159 = arith.constant 0 : index
    %c0_160 = arith.constant 0 : index
    %323 = vector.load %arg1[%c1_157, %c6_158, %c0_159, %c0_160] : memref<3x13x8x128xf32, #tpu.memory_space<vmem>>, vector<1x1x8x128xf32>
    %324 = vector.shape_cast %323 : vector<1x1x8x128xf32> to vector<8x128xf32>
    %c2_161 = arith.constant 2 : index
    %c6_162 = arith.constant 6 : index
    %c0_163 = arith.constant 0 : index
    %c0_164 = arith.constant 0 : index
    %325 = vector.load %arg1[%c2_161, %c6_162, %c0_163, %c0_164] : memref<3x13x8x128xf32, #tpu.memory_space<vmem>>, vector<1x1x8x128xf32>
    %326 = vector.shape_cast %325 : vector<1x1x8x128xf32> to vector<8x128xf32>
    %c6_i32 = arith.constant 6 : i32
    %327 = vector.broadcast %c6_i32 : i32 to vector<8x128xi32>
    %328 = arith.cmpi eq, %1, %327 : vector<8x128xi32>
    %c6_i32_165 = arith.constant 6 : i32
    %329 = vector.broadcast %c6_i32_165 : i32 to vector<8x128xi32>
    %330 = arith.cmpi eq, %3, %329 : vector<8x128xi32>
    %c6_i32_166 = arith.constant 6 : i32
    %331 = vector.broadcast %c6_i32_166 : i32 to vector<8x128xi32>
    %332 = arith.cmpi eq, %5, %331 : vector<8x128xi32>
    %c6_i32_167 = arith.constant 6 : i32
    %333 = vector.broadcast %c6_i32_167 : i32 to vector<8x128xi32>
    %334 = arith.cmpi eq, %7, %333 : vector<8x128xi32>
    %c6_i32_168 = arith.constant 6 : i32
    %335 = vector.broadcast %c6_i32_168 : i32 to vector<8x128xi32>
    %336 = arith.cmpi eq, %9, %335 : vector<8x128xi32>
    %c6_i32_169 = arith.constant 6 : i32
    %337 = vector.broadcast %c6_i32_169 : i32 to vector<8x128xi32>
    %338 = arith.cmpi eq, %11, %337 : vector<8x128xi32>
    %339 = arith.cmpf ogt, %322, %292 : vector<8x128xf32>
    %340 = arith.select %339, %322, %292 : vector<8x128xi1>, vector<8x128xf32>
    %c6_i32_170 = arith.constant 6 : i32
    %341 = vector.broadcast %c6_i32_170 : i32 to vector<8x128xi32>
    %342 = arith.select %339, %341, %294 : vector<8x128xi1>, vector<8x128xi32>
    %343 = arith.cmpf ogt, %324, %296 : vector<8x128xf32>
    %344 = arith.select %343, %324, %296 : vector<8x128xi1>, vector<8x128xf32>
    %c6_i32_171 = arith.constant 6 : i32
    %345 = vector.broadcast %c6_i32_171 : i32 to vector<8x128xi32>
    %346 = arith.select %343, %345, %298 : vector<8x128xi1>, vector<8x128xi32>
    %347 = arith.cmpf ogt, %326, %300 : vector<8x128xf32>
    %348 = arith.select %347, %326, %300 : vector<8x128xi1>, vector<8x128xf32>
    %c6_i32_172 = arith.constant 6 : i32
    %349 = vector.broadcast %c6_i32_172 : i32 to vector<8x128xi32>
    %350 = arith.select %347, %349, %302 : vector<8x128xi1>, vector<8x128xi32>
    %351 = arith.select %328, %322, %303 : vector<8x128xi1>, vector<8x128xf32>
    %352 = arith.select %328, %324, %304 : vector<8x128xi1>, vector<8x128xf32>
    %353 = arith.select %328, %326, %305 : vector<8x128xi1>, vector<8x128xf32>
    %354 = arith.select %330, %322, %306 : vector<8x128xi1>, vector<8x128xf32>
    %355 = arith.select %330, %324, %307 : vector<8x128xi1>, vector<8x128xf32>
    %356 = arith.select %330, %326, %308 : vector<8x128xi1>, vector<8x128xf32>
    %357 = arith.select %332, %322, %309 : vector<8x128xi1>, vector<8x128xf32>
    %358 = arith.select %332, %324, %310 : vector<8x128xi1>, vector<8x128xf32>
    %359 = arith.select %332, %326, %311 : vector<8x128xi1>, vector<8x128xf32>
    %360 = arith.select %334, %322, %312 : vector<8x128xi1>, vector<8x128xf32>
    %361 = arith.select %334, %324, %313 : vector<8x128xi1>, vector<8x128xf32>
    %362 = arith.select %334, %326, %314 : vector<8x128xi1>, vector<8x128xf32>
    %363 = arith.select %336, %322, %315 : vector<8x128xi1>, vector<8x128xf32>
    %364 = arith.select %336, %324, %316 : vector<8x128xi1>, vector<8x128xf32>
    %365 = arith.select %336, %326, %317 : vector<8x128xi1>, vector<8x128xf32>
    %366 = arith.select %338, %322, %318 : vector<8x128xi1>, vector<8x128xf32>
    %367 = arith.select %338, %324, %319 : vector<8x128xi1>, vector<8x128xf32>
    %368 = arith.select %338, %326, %320 : vector<8x128xi1>, vector<8x128xf32>
    %c0_173 = arith.constant 0 : index
    %c7 = arith.constant 7 : index
    %c0_174 = arith.constant 0 : index
    %c0_175 = arith.constant 0 : index
    %369 = vector.load %arg1[%c0_173, %c7, %c0_174, %c0_175] : memref<3x13x8x128xf32, #tpu.memory_space<vmem>>, vector<1x1x8x128xf32>
    %370 = vector.shape_cast %369 : vector<1x1x8x128xf32> to vector<8x128xf32>
    %c1_176 = arith.constant 1 : index
    %c7_177 = arith.constant 7 : index
    %c0_178 = arith.constant 0 : index
    %c0_179 = arith.constant 0 : index
    %371 = vector.load %arg1[%c1_176, %c7_177, %c0_178, %c0_179] : memref<3x13x8x128xf32, #tpu.memory_space<vmem>>, vector<1x1x8x128xf32>
    %372 = vector.shape_cast %371 : vector<1x1x8x128xf32> to vector<8x128xf32>
    %c2_180 = arith.constant 2 : index
    %c7_181 = arith.constant 7 : index
    %c0_182 = arith.constant 0 : index
    %c0_183 = arith.constant 0 : index
    %373 = vector.load %arg1[%c2_180, %c7_181, %c0_182, %c0_183] : memref<3x13x8x128xf32, #tpu.memory_space<vmem>>, vector<1x1x8x128xf32>
    %374 = vector.shape_cast %373 : vector<1x1x8x128xf32> to vector<8x128xf32>
    %c7_i32 = arith.constant 7 : i32
    %375 = vector.broadcast %c7_i32 : i32 to vector<8x128xi32>
    %376 = arith.cmpi eq, %1, %375 : vector<8x128xi32>
    %c7_i32_184 = arith.constant 7 : i32
    %377 = vector.broadcast %c7_i32_184 : i32 to vector<8x128xi32>
    %378 = arith.cmpi eq, %3, %377 : vector<8x128xi32>
    %c7_i32_185 = arith.constant 7 : i32
    %379 = vector.broadcast %c7_i32_185 : i32 to vector<8x128xi32>
    %380 = arith.cmpi eq, %5, %379 : vector<8x128xi32>
    %c7_i32_186 = arith.constant 7 : i32
    %381 = vector.broadcast %c7_i32_186 : i32 to vector<8x128xi32>
    %382 = arith.cmpi eq, %7, %381 : vector<8x128xi32>
    %c7_i32_187 = arith.constant 7 : i32
    %383 = vector.broadcast %c7_i32_187 : i32 to vector<8x128xi32>
    %384 = arith.cmpi eq, %9, %383 : vector<8x128xi32>
    %c7_i32_188 = arith.constant 7 : i32
    %385 = vector.broadcast %c7_i32_188 : i32 to vector<8x128xi32>
    %386 = arith.cmpi eq, %11, %385 : vector<8x128xi32>
    %387 = arith.cmpf ogt, %370, %340 : vector<8x128xf32>
    %388 = arith.select %387, %370, %340 : vector<8x128xi1>, vector<8x128xf32>
    %c7_i32_189 = arith.constant 7 : i32
    %389 = vector.broadcast %c7_i32_189 : i32 to vector<8x128xi32>
    %390 = arith.select %387, %389, %342 : vector<8x128xi1>, vector<8x128xi32>
    %391 = arith.cmpf ogt, %372, %344 : vector<8x128xf32>
    %392 = arith.select %391, %372, %344 : vector<8x128xi1>, vector<8x128xf32>
    %c7_i32_190 = arith.constant 7 : i32
    %393 = vector.broadcast %c7_i32_190 : i32 to vector<8x128xi32>
    %394 = arith.select %391, %393, %346 : vector<8x128xi1>, vector<8x128xi32>
    %395 = arith.cmpf ogt, %374, %348 : vector<8x128xf32>
    %396 = arith.select %395, %374, %348 : vector<8x128xi1>, vector<8x128xf32>
    %c7_i32_191 = arith.constant 7 : i32
    %397 = vector.broadcast %c7_i32_191 : i32 to vector<8x128xi32>
    %398 = arith.select %395, %397, %350 : vector<8x128xi1>, vector<8x128xi32>
    %399 = arith.select %376, %370, %351 : vector<8x128xi1>, vector<8x128xf32>
    %400 = arith.select %376, %372, %352 : vector<8x128xi1>, vector<8x128xf32>
    %401 = arith.select %376, %374, %353 : vector<8x128xi1>, vector<8x128xf32>
    %402 = arith.select %378, %370, %354 : vector<8x128xi1>, vector<8x128xf32>
    %403 = arith.select %378, %372, %355 : vector<8x128xi1>, vector<8x128xf32>
    %404 = arith.select %378, %374, %356 : vector<8x128xi1>, vector<8x128xf32>
    %405 = arith.select %380, %370, %357 : vector<8x128xi1>, vector<8x128xf32>
    %406 = arith.select %380, %372, %358 : vector<8x128xi1>, vector<8x128xf32>
    %407 = arith.select %380, %374, %359 : vector<8x128xi1>, vector<8x128xf32>
    %408 = arith.select %382, %370, %360 : vector<8x128xi1>, vector<8x128xf32>
    %409 = arith.select %382, %372, %361 : vector<8x128xi1>, vector<8x128xf32>
    %410 = arith.select %382, %374, %362 : vector<8x128xi1>, vector<8x128xf32>
    %411 = arith.select %384, %370, %363 : vector<8x128xi1>, vector<8x128xf32>
    %412 = arith.select %384, %372, %364 : vector<8x128xi1>, vector<8x128xf32>
    %413 = arith.select %384, %374, %365 : vector<8x128xi1>, vector<8x128xf32>
    %414 = arith.select %386, %370, %366 : vector<8x128xi1>, vector<8x128xf32>
    %415 = arith.select %386, %372, %367 : vector<8x128xi1>, vector<8x128xf32>
    %416 = arith.select %386, %374, %368 : vector<8x128xi1>, vector<8x128xf32>
    %c0_192 = arith.constant 0 : index
    %c8 = arith.constant 8 : index
    %c0_193 = arith.constant 0 : index
    %c0_194 = arith.constant 0 : index
    %417 = vector.load %arg1[%c0_192, %c8, %c0_193, %c0_194] : memref<3x13x8x128xf32, #tpu.memory_space<vmem>>, vector<1x1x8x128xf32>
    %418 = vector.shape_cast %417 : vector<1x1x8x128xf32> to vector<8x128xf32>
    %c1_195 = arith.constant 1 : index
    %c8_196 = arith.constant 8 : index
    %c0_197 = arith.constant 0 : index
    %c0_198 = arith.constant 0 : index
    %419 = vector.load %arg1[%c1_195, %c8_196, %c0_197, %c0_198] : memref<3x13x8x128xf32, #tpu.memory_space<vmem>>, vector<1x1x8x128xf32>
    %420 = vector.shape_cast %419 : vector<1x1x8x128xf32> to vector<8x128xf32>
    %c2_199 = arith.constant 2 : index
    %c8_200 = arith.constant 8 : index
    %c0_201 = arith.constant 0 : index
    %c0_202 = arith.constant 0 : index
    %421 = vector.load %arg1[%c2_199, %c8_200, %c0_201, %c0_202] : memref<3x13x8x128xf32, #tpu.memory_space<vmem>>, vector<1x1x8x128xf32>
    %422 = vector.shape_cast %421 : vector<1x1x8x128xf32> to vector<8x128xf32>
    %c8_i32 = arith.constant 8 : i32
    %423 = vector.broadcast %c8_i32 : i32 to vector<8x128xi32>
    %424 = arith.cmpi eq, %1, %423 : vector<8x128xi32>
    %c8_i32_203 = arith.constant 8 : i32
    %425 = vector.broadcast %c8_i32_203 : i32 to vector<8x128xi32>
    %426 = arith.cmpi eq, %3, %425 : vector<8x128xi32>
    %c8_i32_204 = arith.constant 8 : i32
    %427 = vector.broadcast %c8_i32_204 : i32 to vector<8x128xi32>
    %428 = arith.cmpi eq, %5, %427 : vector<8x128xi32>
    %c8_i32_205 = arith.constant 8 : i32
    %429 = vector.broadcast %c8_i32_205 : i32 to vector<8x128xi32>
    %430 = arith.cmpi eq, %7, %429 : vector<8x128xi32>
    %c8_i32_206 = arith.constant 8 : i32
    %431 = vector.broadcast %c8_i32_206 : i32 to vector<8x128xi32>
    %432 = arith.cmpi eq, %9, %431 : vector<8x128xi32>
    %c8_i32_207 = arith.constant 8 : i32
    %433 = vector.broadcast %c8_i32_207 : i32 to vector<8x128xi32>
    %434 = arith.cmpi eq, %11, %433 : vector<8x128xi32>
    %435 = arith.cmpf ogt, %418, %388 : vector<8x128xf32>
    %436 = arith.select %435, %418, %388 : vector<8x128xi1>, vector<8x128xf32>
    %c8_i32_208 = arith.constant 8 : i32
    %437 = vector.broadcast %c8_i32_208 : i32 to vector<8x128xi32>
    %438 = arith.select %435, %437, %390 : vector<8x128xi1>, vector<8x128xi32>
    %439 = arith.cmpf ogt, %420, %392 : vector<8x128xf32>
    %440 = arith.select %439, %420, %392 : vector<8x128xi1>, vector<8x128xf32>
    %c8_i32_209 = arith.constant 8 : i32
    %441 = vector.broadcast %c8_i32_209 : i32 to vector<8x128xi32>
    %442 = arith.select %439, %441, %394 : vector<8x128xi1>, vector<8x128xi32>
    %443 = arith.cmpf ogt, %422, %396 : vector<8x128xf32>
    %444 = arith.select %443, %422, %396 : vector<8x128xi1>, vector<8x128xf32>
    %c8_i32_210 = arith.constant 8 : i32
    %445 = vector.broadcast %c8_i32_210 : i32 to vector<8x128xi32>
    %446 = arith.select %443, %445, %398 : vector<8x128xi1>, vector<8x128xi32>
    %447 = arith.select %424, %418, %399 : vector<8x128xi1>, vector<8x128xf32>
    %448 = arith.select %424, %420, %400 : vector<8x128xi1>, vector<8x128xf32>
    %449 = arith.select %424, %422, %401 : vector<8x128xi1>, vector<8x128xf32>
    %450 = arith.select %426, %418, %402 : vector<8x128xi1>, vector<8x128xf32>
    %451 = arith.select %426, %420, %403 : vector<8x128xi1>, vector<8x128xf32>
    %452 = arith.select %426, %422, %404 : vector<8x128xi1>, vector<8x128xf32>
    %453 = arith.select %428, %418, %405 : vector<8x128xi1>, vector<8x128xf32>
    %454 = arith.select %428, %420, %406 : vector<8x128xi1>, vector<8x128xf32>
    %455 = arith.select %428, %422, %407 : vector<8x128xi1>, vector<8x128xf32>
    %456 = arith.select %430, %418, %408 : vector<8x128xi1>, vector<8x128xf32>
    %457 = arith.select %430, %420, %409 : vector<8x128xi1>, vector<8x128xf32>
    %458 = arith.select %430, %422, %410 : vector<8x128xi1>, vector<8x128xf32>
    %459 = arith.select %432, %418, %411 : vector<8x128xi1>, vector<8x128xf32>
    %460 = arith.select %432, %420, %412 : vector<8x128xi1>, vector<8x128xf32>
    %461 = arith.select %432, %422, %413 : vector<8x128xi1>, vector<8x128xf32>
    %462 = arith.select %434, %418, %414 : vector<8x128xi1>, vector<8x128xf32>
    %463 = arith.select %434, %420, %415 : vector<8x128xi1>, vector<8x128xf32>
    %464 = arith.select %434, %422, %416 : vector<8x128xi1>, vector<8x128xf32>
    %c0_211 = arith.constant 0 : index
    %c9 = arith.constant 9 : index
    %c0_212 = arith.constant 0 : index
    %c0_213 = arith.constant 0 : index
    %465 = vector.load %arg1[%c0_211, %c9, %c0_212, %c0_213] : memref<3x13x8x128xf32, #tpu.memory_space<vmem>>, vector<1x1x8x128xf32>
    %466 = vector.shape_cast %465 : vector<1x1x8x128xf32> to vector<8x128xf32>
    %c1_214 = arith.constant 1 : index
    %c9_215 = arith.constant 9 : index
    %c0_216 = arith.constant 0 : index
    %c0_217 = arith.constant 0 : index
    %467 = vector.load %arg1[%c1_214, %c9_215, %c0_216, %c0_217] : memref<3x13x8x128xf32, #tpu.memory_space<vmem>>, vector<1x1x8x128xf32>
    %468 = vector.shape_cast %467 : vector<1x1x8x128xf32> to vector<8x128xf32>
    %c2_218 = arith.constant 2 : index
    %c9_219 = arith.constant 9 : index
    %c0_220 = arith.constant 0 : index
    %c0_221 = arith.constant 0 : index
    %469 = vector.load %arg1[%c2_218, %c9_219, %c0_220, %c0_221] : memref<3x13x8x128xf32, #tpu.memory_space<vmem>>, vector<1x1x8x128xf32>
    %470 = vector.shape_cast %469 : vector<1x1x8x128xf32> to vector<8x128xf32>
    %c9_i32 = arith.constant 9 : i32
    %471 = vector.broadcast %c9_i32 : i32 to vector<8x128xi32>
    %472 = arith.cmpi eq, %1, %471 : vector<8x128xi32>
    %c9_i32_222 = arith.constant 9 : i32
    %473 = vector.broadcast %c9_i32_222 : i32 to vector<8x128xi32>
    %474 = arith.cmpi eq, %3, %473 : vector<8x128xi32>
    %c9_i32_223 = arith.constant 9 : i32
    %475 = vector.broadcast %c9_i32_223 : i32 to vector<8x128xi32>
    %476 = arith.cmpi eq, %5, %475 : vector<8x128xi32>
    %c9_i32_224 = arith.constant 9 : i32
    %477 = vector.broadcast %c9_i32_224 : i32 to vector<8x128xi32>
    %478 = arith.cmpi eq, %7, %477 : vector<8x128xi32>
    %c9_i32_225 = arith.constant 9 : i32
    %479 = vector.broadcast %c9_i32_225 : i32 to vector<8x128xi32>
    %480 = arith.cmpi eq, %9, %479 : vector<8x128xi32>
    %c9_i32_226 = arith.constant 9 : i32
    %481 = vector.broadcast %c9_i32_226 : i32 to vector<8x128xi32>
    %482 = arith.cmpi eq, %11, %481 : vector<8x128xi32>
    %483 = arith.cmpf ogt, %466, %436 : vector<8x128xf32>
    %484 = arith.select %483, %466, %436 : vector<8x128xi1>, vector<8x128xf32>
    %c9_i32_227 = arith.constant 9 : i32
    %485 = vector.broadcast %c9_i32_227 : i32 to vector<8x128xi32>
    %486 = arith.select %483, %485, %438 : vector<8x128xi1>, vector<8x128xi32>
    %487 = arith.cmpf ogt, %468, %440 : vector<8x128xf32>
    %488 = arith.select %487, %468, %440 : vector<8x128xi1>, vector<8x128xf32>
    %c9_i32_228 = arith.constant 9 : i32
    %489 = vector.broadcast %c9_i32_228 : i32 to vector<8x128xi32>
    %490 = arith.select %487, %489, %442 : vector<8x128xi1>, vector<8x128xi32>
    %491 = arith.cmpf ogt, %470, %444 : vector<8x128xf32>
    %492 = arith.select %491, %470, %444 : vector<8x128xi1>, vector<8x128xf32>
    %c9_i32_229 = arith.constant 9 : i32
    %493 = vector.broadcast %c9_i32_229 : i32 to vector<8x128xi32>
    %494 = arith.select %491, %493, %446 : vector<8x128xi1>, vector<8x128xi32>
    %495 = arith.select %472, %466, %447 : vector<8x128xi1>, vector<8x128xf32>
    %496 = arith.select %472, %468, %448 : vector<8x128xi1>, vector<8x128xf32>
    %497 = arith.select %472, %470, %449 : vector<8x128xi1>, vector<8x128xf32>
    %498 = arith.select %474, %466, %450 : vector<8x128xi1>, vector<8x128xf32>
    %499 = arith.select %474, %468, %451 : vector<8x128xi1>, vector<8x128xf32>
    %500 = arith.select %474, %470, %452 : vector<8x128xi1>, vector<8x128xf32>
    %501 = arith.select %476, %466, %453 : vector<8x128xi1>, vector<8x128xf32>
    %502 = arith.select %476, %468, %454 : vector<8x128xi1>, vector<8x128xf32>
    %503 = arith.select %476, %470, %455 : vector<8x128xi1>, vector<8x128xf32>
    %504 = arith.select %478, %466, %456 : vector<8x128xi1>, vector<8x128xf32>
    %505 = arith.select %478, %468, %457 : vector<8x128xi1>, vector<8x128xf32>
    %506 = arith.select %478, %470, %458 : vector<8x128xi1>, vector<8x128xf32>
    %507 = arith.select %480, %466, %459 : vector<8x128xi1>, vector<8x128xf32>
    %508 = arith.select %480, %468, %460 : vector<8x128xi1>, vector<8x128xf32>
    %509 = arith.select %480, %470, %461 : vector<8x128xi1>, vector<8x128xf32>
    %510 = arith.select %482, %466, %462 : vector<8x128xi1>, vector<8x128xf32>
    %511 = arith.select %482, %468, %463 : vector<8x128xi1>, vector<8x128xf32>
    %512 = arith.select %482, %470, %464 : vector<8x128xi1>, vector<8x128xf32>
    %c0_230 = arith.constant 0 : index
    %c10 = arith.constant 10 : index
    %c0_231 = arith.constant 0 : index
    %c0_232 = arith.constant 0 : index
    %513 = vector.load %arg1[%c0_230, %c10, %c0_231, %c0_232] : memref<3x13x8x128xf32, #tpu.memory_space<vmem>>, vector<1x1x8x128xf32>
    %514 = vector.shape_cast %513 : vector<1x1x8x128xf32> to vector<8x128xf32>
    %c1_233 = arith.constant 1 : index
    %c10_234 = arith.constant 10 : index
    %c0_235 = arith.constant 0 : index
    %c0_236 = arith.constant 0 : index
    %515 = vector.load %arg1[%c1_233, %c10_234, %c0_235, %c0_236] : memref<3x13x8x128xf32, #tpu.memory_space<vmem>>, vector<1x1x8x128xf32>
    %516 = vector.shape_cast %515 : vector<1x1x8x128xf32> to vector<8x128xf32>
    %c2_237 = arith.constant 2 : index
    %c10_238 = arith.constant 10 : index
    %c0_239 = arith.constant 0 : index
    %c0_240 = arith.constant 0 : index
    %517 = vector.load %arg1[%c2_237, %c10_238, %c0_239, %c0_240] : memref<3x13x8x128xf32, #tpu.memory_space<vmem>>, vector<1x1x8x128xf32>
    %518 = vector.shape_cast %517 : vector<1x1x8x128xf32> to vector<8x128xf32>
    %c10_i32 = arith.constant 10 : i32
    %519 = vector.broadcast %c10_i32 : i32 to vector<8x128xi32>
    %520 = arith.cmpi eq, %1, %519 : vector<8x128xi32>
    %c10_i32_241 = arith.constant 10 : i32
    %521 = vector.broadcast %c10_i32_241 : i32 to vector<8x128xi32>
    %522 = arith.cmpi eq, %3, %521 : vector<8x128xi32>
    %c10_i32_242 = arith.constant 10 : i32
    %523 = vector.broadcast %c10_i32_242 : i32 to vector<8x128xi32>
    %524 = arith.cmpi eq, %5, %523 : vector<8x128xi32>
    %c10_i32_243 = arith.constant 10 : i32
    %525 = vector.broadcast %c10_i32_243 : i32 to vector<8x128xi32>
    %526 = arith.cmpi eq, %7, %525 : vector<8x128xi32>
    %c10_i32_244 = arith.constant 10 : i32
    %527 = vector.broadcast %c10_i32_244 : i32 to vector<8x128xi32>
    %528 = arith.cmpi eq, %9, %527 : vector<8x128xi32>
    %c10_i32_245 = arith.constant 10 : i32
    %529 = vector.broadcast %c10_i32_245 : i32 to vector<8x128xi32>
    %530 = arith.cmpi eq, %11, %529 : vector<8x128xi32>
    %531 = arith.cmpf ogt, %514, %484 : vector<8x128xf32>
    %532 = arith.select %531, %514, %484 : vector<8x128xi1>, vector<8x128xf32>
    %c10_i32_246 = arith.constant 10 : i32
    %533 = vector.broadcast %c10_i32_246 : i32 to vector<8x128xi32>
    %534 = arith.select %531, %533, %486 : vector<8x128xi1>, vector<8x128xi32>
    %535 = arith.cmpf ogt, %516, %488 : vector<8x128xf32>
    %536 = arith.select %535, %516, %488 : vector<8x128xi1>, vector<8x128xf32>
    %c10_i32_247 = arith.constant 10 : i32
    %537 = vector.broadcast %c10_i32_247 : i32 to vector<8x128xi32>
    %538 = arith.select %535, %537, %490 : vector<8x128xi1>, vector<8x128xi32>
    %539 = arith.cmpf ogt, %518, %492 : vector<8x128xf32>
    %540 = arith.select %539, %518, %492 : vector<8x128xi1>, vector<8x128xf32>
    %c10_i32_248 = arith.constant 10 : i32
    %541 = vector.broadcast %c10_i32_248 : i32 to vector<8x128xi32>
    %542 = arith.select %539, %541, %494 : vector<8x128xi1>, vector<8x128xi32>
    %543 = arith.select %520, %514, %495 : vector<8x128xi1>, vector<8x128xf32>
    %544 = arith.select %520, %516, %496 : vector<8x128xi1>, vector<8x128xf32>
    %545 = arith.select %520, %518, %497 : vector<8x128xi1>, vector<8x128xf32>
    %546 = arith.select %522, %514, %498 : vector<8x128xi1>, vector<8x128xf32>
    %547 = arith.select %522, %516, %499 : vector<8x128xi1>, vector<8x128xf32>
    %548 = arith.select %522, %518, %500 : vector<8x128xi1>, vector<8x128xf32>
    %549 = arith.select %524, %514, %501 : vector<8x128xi1>, vector<8x128xf32>
    %550 = arith.select %524, %516, %502 : vector<8x128xi1>, vector<8x128xf32>
    %551 = arith.select %524, %518, %503 : vector<8x128xi1>, vector<8x128xf32>
    %552 = arith.select %526, %514, %504 : vector<8x128xi1>, vector<8x128xf32>
    %553 = arith.select %526, %516, %505 : vector<8x128xi1>, vector<8x128xf32>
    %554 = arith.select %526, %518, %506 : vector<8x128xi1>, vector<8x128xf32>
    %555 = arith.select %528, %514, %507 : vector<8x128xi1>, vector<8x128xf32>
    %556 = arith.select %528, %516, %508 : vector<8x128xi1>, vector<8x128xf32>
    %557 = arith.select %528, %518, %509 : vector<8x128xi1>, vector<8x128xf32>
    %558 = arith.select %530, %514, %510 : vector<8x128xi1>, vector<8x128xf32>
    %559 = arith.select %530, %516, %511 : vector<8x128xi1>, vector<8x128xf32>
    %560 = arith.select %530, %518, %512 : vector<8x128xi1>, vector<8x128xf32>
    %c0_249 = arith.constant 0 : index
    %c11 = arith.constant 11 : index
    %c0_250 = arith.constant 0 : index
    %c0_251 = arith.constant 0 : index
    %561 = vector.load %arg1[%c0_249, %c11, %c0_250, %c0_251] : memref<3x13x8x128xf32, #tpu.memory_space<vmem>>, vector<1x1x8x128xf32>
    %562 = vector.shape_cast %561 : vector<1x1x8x128xf32> to vector<8x128xf32>
    %c1_252 = arith.constant 1 : index
    %c11_253 = arith.constant 11 : index
    %c0_254 = arith.constant 0 : index
    %c0_255 = arith.constant 0 : index
    %563 = vector.load %arg1[%c1_252, %c11_253, %c0_254, %c0_255] : memref<3x13x8x128xf32, #tpu.memory_space<vmem>>, vector<1x1x8x128xf32>
    %564 = vector.shape_cast %563 : vector<1x1x8x128xf32> to vector<8x128xf32>
    %c2_256 = arith.constant 2 : index
    %c11_257 = arith.constant 11 : index
    %c0_258 = arith.constant 0 : index
    %c0_259 = arith.constant 0 : index
    %565 = vector.load %arg1[%c2_256, %c11_257, %c0_258, %c0_259] : memref<3x13x8x128xf32, #tpu.memory_space<vmem>>, vector<1x1x8x128xf32>
    %566 = vector.shape_cast %565 : vector<1x1x8x128xf32> to vector<8x128xf32>
    %c11_i32 = arith.constant 11 : i32
    %567 = vector.broadcast %c11_i32 : i32 to vector<8x128xi32>
    %568 = arith.cmpi eq, %1, %567 : vector<8x128xi32>
    %c11_i32_260 = arith.constant 11 : i32
    %569 = vector.broadcast %c11_i32_260 : i32 to vector<8x128xi32>
    %570 = arith.cmpi eq, %3, %569 : vector<8x128xi32>
    %c11_i32_261 = arith.constant 11 : i32
    %571 = vector.broadcast %c11_i32_261 : i32 to vector<8x128xi32>
    %572 = arith.cmpi eq, %5, %571 : vector<8x128xi32>
    %c11_i32_262 = arith.constant 11 : i32
    %573 = vector.broadcast %c11_i32_262 : i32 to vector<8x128xi32>
    %574 = arith.cmpi eq, %7, %573 : vector<8x128xi32>
    %c11_i32_263 = arith.constant 11 : i32
    %575 = vector.broadcast %c11_i32_263 : i32 to vector<8x128xi32>
    %576 = arith.cmpi eq, %9, %575 : vector<8x128xi32>
    %c11_i32_264 = arith.constant 11 : i32
    %577 = vector.broadcast %c11_i32_264 : i32 to vector<8x128xi32>
    %578 = arith.cmpi eq, %11, %577 : vector<8x128xi32>
    %579 = arith.cmpf ogt, %562, %532 : vector<8x128xf32>
    %580 = arith.select %579, %562, %532 : vector<8x128xi1>, vector<8x128xf32>
    %c11_i32_265 = arith.constant 11 : i32
    %581 = vector.broadcast %c11_i32_265 : i32 to vector<8x128xi32>
    %582 = arith.select %579, %581, %534 : vector<8x128xi1>, vector<8x128xi32>
    %583 = arith.cmpf ogt, %564, %536 : vector<8x128xf32>
    %584 = arith.select %583, %564, %536 : vector<8x128xi1>, vector<8x128xf32>
    %c11_i32_266 = arith.constant 11 : i32
    %585 = vector.broadcast %c11_i32_266 : i32 to vector<8x128xi32>
    %586 = arith.select %583, %585, %538 : vector<8x128xi1>, vector<8x128xi32>
    %587 = arith.cmpf ogt, %566, %540 : vector<8x128xf32>
    %588 = arith.select %587, %566, %540 : vector<8x128xi1>, vector<8x128xf32>
    %c11_i32_267 = arith.constant 11 : i32
    %589 = vector.broadcast %c11_i32_267 : i32 to vector<8x128xi32>
    %590 = arith.select %587, %589, %542 : vector<8x128xi1>, vector<8x128xi32>
    %591 = arith.select %568, %562, %543 : vector<8x128xi1>, vector<8x128xf32>
    %592 = arith.select %568, %564, %544 : vector<8x128xi1>, vector<8x128xf32>
    %593 = arith.select %568, %566, %545 : vector<8x128xi1>, vector<8x128xf32>
    %594 = arith.select %570, %562, %546 : vector<8x128xi1>, vector<8x128xf32>
    %595 = arith.select %570, %564, %547 : vector<8x128xi1>, vector<8x128xf32>
    %596 = arith.select %570, %566, %548 : vector<8x128xi1>, vector<8x128xf32>
    %597 = arith.select %572, %562, %549 : vector<8x128xi1>, vector<8x128xf32>
    %598 = arith.select %572, %564, %550 : vector<8x128xi1>, vector<8x128xf32>
    %599 = arith.select %572, %566, %551 : vector<8x128xi1>, vector<8x128xf32>
    %600 = arith.select %574, %562, %552 : vector<8x128xi1>, vector<8x128xf32>
    %601 = arith.select %574, %564, %553 : vector<8x128xi1>, vector<8x128xf32>
    %602 = arith.select %574, %566, %554 : vector<8x128xi1>, vector<8x128xf32>
    %603 = arith.select %576, %562, %555 : vector<8x128xi1>, vector<8x128xf32>
    %604 = arith.select %576, %564, %556 : vector<8x128xi1>, vector<8x128xf32>
    %605 = arith.select %576, %566, %557 : vector<8x128xi1>, vector<8x128xf32>
    %606 = arith.select %578, %562, %558 : vector<8x128xi1>, vector<8x128xf32>
    %607 = arith.select %578, %564, %559 : vector<8x128xi1>, vector<8x128xf32>
    %608 = arith.select %578, %566, %560 : vector<8x128xi1>, vector<8x128xf32>
    %c0_268 = arith.constant 0 : index
    %c12 = arith.constant 12 : index
    %c0_269 = arith.constant 0 : index
    %c0_270 = arith.constant 0 : index
    %609 = vector.load %arg1[%c0_268, %c12, %c0_269, %c0_270] : memref<3x13x8x128xf32, #tpu.memory_space<vmem>>, vector<1x1x8x128xf32>
    %610 = vector.shape_cast %609 : vector<1x1x8x128xf32> to vector<8x128xf32>
    %c1_271 = arith.constant 1 : index
    %c12_272 = arith.constant 12 : index
    %c0_273 = arith.constant 0 : index
    %c0_274 = arith.constant 0 : index
    %611 = vector.load %arg1[%c1_271, %c12_272, %c0_273, %c0_274] : memref<3x13x8x128xf32, #tpu.memory_space<vmem>>, vector<1x1x8x128xf32>
    %612 = vector.shape_cast %611 : vector<1x1x8x128xf32> to vector<8x128xf32>
    %c2_275 = arith.constant 2 : index
    %c12_276 = arith.constant 12 : index
    %c0_277 = arith.constant 0 : index
    %c0_278 = arith.constant 0 : index
    %613 = vector.load %arg1[%c2_275, %c12_276, %c0_277, %c0_278] : memref<3x13x8x128xf32, #tpu.memory_space<vmem>>, vector<1x1x8x128xf32>
    %614 = vector.shape_cast %613 : vector<1x1x8x128xf32> to vector<8x128xf32>
    %c12_i32 = arith.constant 12 : i32
    %615 = vector.broadcast %c12_i32 : i32 to vector<8x128xi32>
    %616 = arith.cmpi eq, %1, %615 : vector<8x128xi32>
    %c12_i32_279 = arith.constant 12 : i32
    %617 = vector.broadcast %c12_i32_279 : i32 to vector<8x128xi32>
    %618 = arith.cmpi eq, %3, %617 : vector<8x128xi32>
    %c12_i32_280 = arith.constant 12 : i32
    %619 = vector.broadcast %c12_i32_280 : i32 to vector<8x128xi32>
    %620 = arith.cmpi eq, %5, %619 : vector<8x128xi32>
    %c12_i32_281 = arith.constant 12 : i32
    %621 = vector.broadcast %c12_i32_281 : i32 to vector<8x128xi32>
    %622 = arith.cmpi eq, %7, %621 : vector<8x128xi32>
    %c12_i32_282 = arith.constant 12 : i32
    %623 = vector.broadcast %c12_i32_282 : i32 to vector<8x128xi32>
    %624 = arith.cmpi eq, %9, %623 : vector<8x128xi32>
    %c12_i32_283 = arith.constant 12 : i32
    %625 = vector.broadcast %c12_i32_283 : i32 to vector<8x128xi32>
    %626 = arith.cmpi eq, %11, %625 : vector<8x128xi32>
    %627 = arith.cmpf ogt, %610, %580 : vector<8x128xf32>
    %628 = arith.select %627, %610, %580 : vector<8x128xi1>, vector<8x128xf32>
    %c12_i32_284 = arith.constant 12 : i32
    %629 = vector.broadcast %c12_i32_284 : i32 to vector<8x128xi32>
    %630 = arith.select %627, %629, %582 : vector<8x128xi1>, vector<8x128xi32>
    %631 = arith.cmpf ogt, %612, %584 : vector<8x128xf32>
    %632 = arith.select %631, %612, %584 : vector<8x128xi1>, vector<8x128xf32>
    %c12_i32_285 = arith.constant 12 : i32
    %633 = vector.broadcast %c12_i32_285 : i32 to vector<8x128xi32>
    %634 = arith.select %631, %633, %586 : vector<8x128xi1>, vector<8x128xi32>
    %635 = arith.cmpf ogt, %614, %588 : vector<8x128xf32>
    %636 = arith.select %635, %614, %588 : vector<8x128xi1>, vector<8x128xf32>
    %c12_i32_286 = arith.constant 12 : i32
    %637 = vector.broadcast %c12_i32_286 : i32 to vector<8x128xi32>
    %638 = arith.select %635, %637, %590 : vector<8x128xi1>, vector<8x128xi32>
    %639 = arith.select %616, %610, %591 : vector<8x128xi1>, vector<8x128xf32>
    %640 = arith.select %616, %612, %592 : vector<8x128xi1>, vector<8x128xf32>
    %641 = arith.select %616, %614, %593 : vector<8x128xi1>, vector<8x128xf32>
    %642 = arith.select %618, %610, %594 : vector<8x128xi1>, vector<8x128xf32>
    %643 = arith.select %618, %612, %595 : vector<8x128xi1>, vector<8x128xf32>
    %644 = arith.select %618, %614, %596 : vector<8x128xi1>, vector<8x128xf32>
    %645 = arith.select %620, %610, %597 : vector<8x128xi1>, vector<8x128xf32>
    %646 = arith.select %620, %612, %598 : vector<8x128xi1>, vector<8x128xf32>
    %647 = arith.select %620, %614, %599 : vector<8x128xi1>, vector<8x128xf32>
    %648 = arith.select %622, %610, %600 : vector<8x128xi1>, vector<8x128xf32>
    %649 = arith.select %622, %612, %601 : vector<8x128xi1>, vector<8x128xf32>
    %650 = arith.select %622, %614, %602 : vector<8x128xi1>, vector<8x128xf32>
    %651 = arith.select %624, %610, %603 : vector<8x128xi1>, vector<8x128xf32>
    %652 = arith.select %624, %612, %604 : vector<8x128xi1>, vector<8x128xf32>
    %653 = arith.select %624, %614, %605 : vector<8x128xi1>, vector<8x128xf32>
    %654 = arith.select %626, %610, %606 : vector<8x128xi1>, vector<8x128xf32>
    %655 = arith.select %626, %612, %607 : vector<8x128xi1>, vector<8x128xf32>
    %656 = arith.select %626, %614, %608 : vector<8x128xi1>, vector<8x128xf32>
    %c0_287 = arith.constant 0 : index
    %c0_288 = arith.constant 0 : index
    %c0_289 = arith.constant 0 : index
    %c0_290 = arith.constant 0 : index
    %657 = vector.load %arg1[%c0_287, %c0_288, %c0_289, %c0_290] : memref<3x13x8x128xf32, #tpu.memory_space<vmem>>, vector<1x1x8x128xf32>
    %658 = vector.shape_cast %657 : vector<1x1x8x128xf32> to vector<8x128xf32>
    %659 = arith.subf %658, %628 : vector<8x128xf32>
    %660 = math.exp %659 : vector<8x128xf32>
    %c0_291 = arith.constant 0 : index
    %c1_292 = arith.constant 1 : index
    %c0_293 = arith.constant 0 : index
    %c0_294 = arith.constant 0 : index
    %661 = vector.load %arg1[%c0_291, %c1_292, %c0_293, %c0_294] : memref<3x13x8x128xf32, #tpu.memory_space<vmem>>, vector<1x1x8x128xf32>
    %662 = vector.shape_cast %661 : vector<1x1x8x128xf32> to vector<8x128xf32>
    %663 = arith.subf %662, %628 : vector<8x128xf32>
    %664 = math.exp %663 : vector<8x128xf32>
    %665 = arith.addf %660, %664 : vector<8x128xf32>
    %c0_295 = arith.constant 0 : index
    %c2_296 = arith.constant 2 : index
    %c0_297 = arith.constant 0 : index
    %c0_298 = arith.constant 0 : index
    %666 = vector.load %arg1[%c0_295, %c2_296, %c0_297, %c0_298] : memref<3x13x8x128xf32, #tpu.memory_space<vmem>>, vector<1x1x8x128xf32>
    %667 = vector.shape_cast %666 : vector<1x1x8x128xf32> to vector<8x128xf32>
    %668 = arith.subf %667, %628 : vector<8x128xf32>
    %669 = math.exp %668 : vector<8x128xf32>
    %670 = arith.addf %665, %669 : vector<8x128xf32>
    %c0_299 = arith.constant 0 : index
    %c3_300 = arith.constant 3 : index
    %c0_301 = arith.constant 0 : index
    %c0_302 = arith.constant 0 : index
    %671 = vector.load %arg1[%c0_299, %c3_300, %c0_301, %c0_302] : memref<3x13x8x128xf32, #tpu.memory_space<vmem>>, vector<1x1x8x128xf32>
    %672 = vector.shape_cast %671 : vector<1x1x8x128xf32> to vector<8x128xf32>
    %673 = arith.subf %672, %628 : vector<8x128xf32>
    %674 = math.exp %673 : vector<8x128xf32>
    %675 = arith.addf %670, %674 : vector<8x128xf32>
    %c0_303 = arith.constant 0 : index
    %c4_304 = arith.constant 4 : index
    %c0_305 = arith.constant 0 : index
    %c0_306 = arith.constant 0 : index
    %676 = vector.load %arg1[%c0_303, %c4_304, %c0_305, %c0_306] : memref<3x13x8x128xf32, #tpu.memory_space<vmem>>, vector<1x1x8x128xf32>
    %677 = vector.shape_cast %676 : vector<1x1x8x128xf32> to vector<8x128xf32>
    %678 = arith.subf %677, %628 : vector<8x128xf32>
    %679 = math.exp %678 : vector<8x128xf32>
    %680 = arith.addf %675, %679 : vector<8x128xf32>
    %c0_307 = arith.constant 0 : index
    %c5_308 = arith.constant 5 : index
    %c0_309 = arith.constant 0 : index
    %c0_310 = arith.constant 0 : index
    %681 = vector.load %arg1[%c0_307, %c5_308, %c0_309, %c0_310] : memref<3x13x8x128xf32, #tpu.memory_space<vmem>>, vector<1x1x8x128xf32>
    %682 = vector.shape_cast %681 : vector<1x1x8x128xf32> to vector<8x128xf32>
    %683 = arith.subf %682, %628 : vector<8x128xf32>
    %684 = math.exp %683 : vector<8x128xf32>
    %685 = arith.addf %680, %684 : vector<8x128xf32>
    %c0_311 = arith.constant 0 : index
    %c6_312 = arith.constant 6 : index
    %c0_313 = arith.constant 0 : index
    %c0_314 = arith.constant 0 : index
    %686 = vector.load %arg1[%c0_311, %c6_312, %c0_313, %c0_314] : memref<3x13x8x128xf32, #tpu.memory_space<vmem>>, vector<1x1x8x128xf32>
    %687 = vector.shape_cast %686 : vector<1x1x8x128xf32> to vector<8x128xf32>
    %688 = arith.subf %687, %628 : vector<8x128xf32>
    %689 = math.exp %688 : vector<8x128xf32>
    %690 = arith.addf %685, %689 : vector<8x128xf32>
    %c0_315 = arith.constant 0 : index
    %c7_316 = arith.constant 7 : index
    %c0_317 = arith.constant 0 : index
    %c0_318 = arith.constant 0 : index
    %691 = vector.load %arg1[%c0_315, %c7_316, %c0_317, %c0_318] : memref<3x13x8x128xf32, #tpu.memory_space<vmem>>, vector<1x1x8x128xf32>
    %692 = vector.shape_cast %691 : vector<1x1x8x128xf32> to vector<8x128xf32>
    %693 = arith.subf %692, %628 : vector<8x128xf32>
    %694 = math.exp %693 : vector<8x128xf32>
    %695 = arith.addf %690, %694 : vector<8x128xf32>
    %c0_319 = arith.constant 0 : index
    %c8_320 = arith.constant 8 : index
    %c0_321 = arith.constant 0 : index
    %c0_322 = arith.constant 0 : index
    %696 = vector.load %arg1[%c0_319, %c8_320, %c0_321, %c0_322] : memref<3x13x8x128xf32, #tpu.memory_space<vmem>>, vector<1x1x8x128xf32>
    %697 = vector.shape_cast %696 : vector<1x1x8x128xf32> to vector<8x128xf32>
    %698 = arith.subf %697, %628 : vector<8x128xf32>
    %699 = math.exp %698 : vector<8x128xf32>
    %700 = arith.addf %695, %699 : vector<8x128xf32>
    %c0_323 = arith.constant 0 : index
    %c9_324 = arith.constant 9 : index
    %c0_325 = arith.constant 0 : index
    %c0_326 = arith.constant 0 : index
    %701 = vector.load %arg1[%c0_323, %c9_324, %c0_325, %c0_326] : memref<3x13x8x128xf32, #tpu.memory_space<vmem>>, vector<1x1x8x128xf32>
    %702 = vector.shape_cast %701 : vector<1x1x8x128xf32> to vector<8x128xf32>
    %703 = arith.subf %702, %628 : vector<8x128xf32>
    %704 = math.exp %703 : vector<8x128xf32>
    %705 = arith.addf %700, %704 : vector<8x128xf32>
    %c0_327 = arith.constant 0 : index
    %c10_328 = arith.constant 10 : index
    %c0_329 = arith.constant 0 : index
    %c0_330 = arith.constant 0 : index
    %706 = vector.load %arg1[%c0_327, %c10_328, %c0_329, %c0_330] : memref<3x13x8x128xf32, #tpu.memory_space<vmem>>, vector<1x1x8x128xf32>
    %707 = vector.shape_cast %706 : vector<1x1x8x128xf32> to vector<8x128xf32>
    %708 = arith.subf %707, %628 : vector<8x128xf32>
    %709 = math.exp %708 : vector<8x128xf32>
    %710 = arith.addf %705, %709 : vector<8x128xf32>
    %c0_331 = arith.constant 0 : index
    %c11_332 = arith.constant 11 : index
    %c0_333 = arith.constant 0 : index
    %c0_334 = arith.constant 0 : index
    %711 = vector.load %arg1[%c0_331, %c11_332, %c0_333, %c0_334] : memref<3x13x8x128xf32, #tpu.memory_space<vmem>>, vector<1x1x8x128xf32>
    %712 = vector.shape_cast %711 : vector<1x1x8x128xf32> to vector<8x128xf32>
    %713 = arith.subf %712, %628 : vector<8x128xf32>
    %714 = math.exp %713 : vector<8x128xf32>
    %715 = arith.addf %710, %714 : vector<8x128xf32>
    %c0_335 = arith.constant 0 : index
    %c12_336 = arith.constant 12 : index
    %c0_337 = arith.constant 0 : index
    %c0_338 = arith.constant 0 : index
    %716 = vector.load %arg1[%c0_335, %c12_336, %c0_337, %c0_338] : memref<3x13x8x128xf32, #tpu.memory_space<vmem>>, vector<1x1x8x128xf32>
    %717 = vector.shape_cast %716 : vector<1x1x8x128xf32> to vector<8x128xf32>
    %718 = arith.subf %717, %628 : vector<8x128xf32>
    %719 = math.exp %718 : vector<8x128xf32>
    %720 = arith.addf %715, %719 : vector<8x128xf32>
    %721 = math.log %720 : vector<8x128xf32>
    %722 = arith.addf %628, %721 : vector<8x128xf32>
    %c1_339 = arith.constant 1 : index
    %c0_340 = arith.constant 0 : index
    %c0_341 = arith.constant 0 : index
    %c0_342 = arith.constant 0 : index
    %723 = vector.load %arg1[%c1_339, %c0_340, %c0_341, %c0_342] : memref<3x13x8x128xf32, #tpu.memory_space<vmem>>, vector<1x1x8x128xf32>
    %724 = vector.shape_cast %723 : vector<1x1x8x128xf32> to vector<8x128xf32>
    %725 = arith.subf %724, %632 : vector<8x128xf32>
    %726 = math.exp %725 : vector<8x128xf32>
    %c1_343 = arith.constant 1 : index
    %c1_344 = arith.constant 1 : index
    %c0_345 = arith.constant 0 : index
    %c0_346 = arith.constant 0 : index
    %727 = vector.load %arg1[%c1_343, %c1_344, %c0_345, %c0_346] : memref<3x13x8x128xf32, #tpu.memory_space<vmem>>, vector<1x1x8x128xf32>
    %728 = vector.shape_cast %727 : vector<1x1x8x128xf32> to vector<8x128xf32>
    %729 = arith.subf %728, %632 : vector<8x128xf32>
    %730 = math.exp %729 : vector<8x128xf32>
    %731 = arith.addf %726, %730 : vector<8x128xf32>
    %c1_347 = arith.constant 1 : index
    %c2_348 = arith.constant 2 : index
    %c0_349 = arith.constant 0 : index
    %c0_350 = arith.constant 0 : index
    %732 = vector.load %arg1[%c1_347, %c2_348, %c0_349, %c0_350] : memref<3x13x8x128xf32, #tpu.memory_space<vmem>>, vector<1x1x8x128xf32>
    %733 = vector.shape_cast %732 : vector<1x1x8x128xf32> to vector<8x128xf32>
    %734 = arith.subf %733, %632 : vector<8x128xf32>
    %735 = math.exp %734 : vector<8x128xf32>
    %736 = arith.addf %731, %735 : vector<8x128xf32>
    %c1_351 = arith.constant 1 : index
    %c3_352 = arith.constant 3 : index
    %c0_353 = arith.constant 0 : index
    %c0_354 = arith.constant 0 : index
    %737 = vector.load %arg1[%c1_351, %c3_352, %c0_353, %c0_354] : memref<3x13x8x128xf32, #tpu.memory_space<vmem>>, vector<1x1x8x128xf32>
    %738 = vector.shape_cast %737 : vector<1x1x8x128xf32> to vector<8x128xf32>
    %739 = arith.subf %738, %632 : vector<8x128xf32>
    %740 = math.exp %739 : vector<8x128xf32>
    %741 = arith.addf %736, %740 : vector<8x128xf32>
    %c1_355 = arith.constant 1 : index
    %c4_356 = arith.constant 4 : index
    %c0_357 = arith.constant 0 : index
    %c0_358 = arith.constant 0 : index
    %742 = vector.load %arg1[%c1_355, %c4_356, %c0_357, %c0_358] : memref<3x13x8x128xf32, #tpu.memory_space<vmem>>, vector<1x1x8x128xf32>
    %743 = vector.shape_cast %742 : vector<1x1x8x128xf32> to vector<8x128xf32>
    %744 = arith.subf %743, %632 : vector<8x128xf32>
    %745 = math.exp %744 : vector<8x128xf32>
    %746 = arith.addf %741, %745 : vector<8x128xf32>
    %c1_359 = arith.constant 1 : index
    %c5_360 = arith.constant 5 : index
    %c0_361 = arith.constant 0 : index
    %c0_362 = arith.constant 0 : index
    %747 = vector.load %arg1[%c1_359, %c5_360, %c0_361, %c0_362] : memref<3x13x8x128xf32, #tpu.memory_space<vmem>>, vector<1x1x8x128xf32>
    %748 = vector.shape_cast %747 : vector<1x1x8x128xf32> to vector<8x128xf32>
    %749 = arith.subf %748, %632 : vector<8x128xf32>
    %750 = math.exp %749 : vector<8x128xf32>
    %751 = arith.addf %746, %750 : vector<8x128xf32>
    %c1_363 = arith.constant 1 : index
    %c6_364 = arith.constant 6 : index
    %c0_365 = arith.constant 0 : index
    %c0_366 = arith.constant 0 : index
    %752 = vector.load %arg1[%c1_363, %c6_364, %c0_365, %c0_366] : memref<3x13x8x128xf32, #tpu.memory_space<vmem>>, vector<1x1x8x128xf32>
    %753 = vector.shape_cast %752 : vector<1x1x8x128xf32> to vector<8x128xf32>
    %754 = arith.subf %753, %632 : vector<8x128xf32>
    %755 = math.exp %754 : vector<8x128xf32>
    %756 = arith.addf %751, %755 : vector<8x128xf32>
    %c1_367 = arith.constant 1 : index
    %c7_368 = arith.constant 7 : index
    %c0_369 = arith.constant 0 : index
    %c0_370 = arith.constant 0 : index
    %757 = vector.load %arg1[%c1_367, %c7_368, %c0_369, %c0_370] : memref<3x13x8x128xf32, #tpu.memory_space<vmem>>, vector<1x1x8x128xf32>
    %758 = vector.shape_cast %757 : vector<1x1x8x128xf32> to vector<8x128xf32>
    %759 = arith.subf %758, %632 : vector<8x128xf32>
    %760 = math.exp %759 : vector<8x128xf32>
    %761 = arith.addf %756, %760 : vector<8x128xf32>
    %c1_371 = arith.constant 1 : index
    %c8_372 = arith.constant 8 : index
    %c0_373 = arith.constant 0 : index
    %c0_374 = arith.constant 0 : index
    %762 = vector.load %arg1[%c1_371, %c8_372, %c0_373, %c0_374] : memref<3x13x8x128xf32, #tpu.memory_space<vmem>>, vector<1x1x8x128xf32>
    %763 = vector.shape_cast %762 : vector<1x1x8x128xf32> to vector<8x128xf32>
    %764 = arith.subf %763, %632 : vector<8x128xf32>
    %765 = math.exp %764 : vector<8x128xf32>
    %766 = arith.addf %761, %765 : vector<8x128xf32>
    %c1_375 = arith.constant 1 : index
    %c9_376 = arith.constant 9 : index
    %c0_377 = arith.constant 0 : index
    %c0_378 = arith.constant 0 : index
    %767 = vector.load %arg1[%c1_375, %c9_376, %c0_377, %c0_378] : memref<3x13x8x128xf32, #tpu.memory_space<vmem>>, vector<1x1x8x128xf32>
    %768 = vector.shape_cast %767 : vector<1x1x8x128xf32> to vector<8x128xf32>
    %769 = arith.subf %768, %632 : vector<8x128xf32>
    %770 = math.exp %769 : vector<8x128xf32>
    %771 = arith.addf %766, %770 : vector<8x128xf32>
    %c1_379 = arith.constant 1 : index
    %c10_380 = arith.constant 10 : index
    %c0_381 = arith.constant 0 : index
    %c0_382 = arith.constant 0 : index
    %772 = vector.load %arg1[%c1_379, %c10_380, %c0_381, %c0_382] : memref<3x13x8x128xf32, #tpu.memory_space<vmem>>, vector<1x1x8x128xf32>
    %773 = vector.shape_cast %772 : vector<1x1x8x128xf32> to vector<8x128xf32>
    %774 = arith.subf %773, %632 : vector<8x128xf32>
    %775 = math.exp %774 : vector<8x128xf32>
    %776 = arith.addf %771, %775 : vector<8x128xf32>
    %c1_383 = arith.constant 1 : index
    %c11_384 = arith.constant 11 : index
    %c0_385 = arith.constant 0 : index
    %c0_386 = arith.constant 0 : index
    %777 = vector.load %arg1[%c1_383, %c11_384, %c0_385, %c0_386] : memref<3x13x8x128xf32, #tpu.memory_space<vmem>>, vector<1x1x8x128xf32>
    %778 = vector.shape_cast %777 : vector<1x1x8x128xf32> to vector<8x128xf32>
    %779 = arith.subf %778, %632 : vector<8x128xf32>
    %780 = math.exp %779 : vector<8x128xf32>
    %781 = arith.addf %776, %780 : vector<8x128xf32>
    %c1_387 = arith.constant 1 : index
    %c12_388 = arith.constant 12 : index
    %c0_389 = arith.constant 0 : index
    %c0_390 = arith.constant 0 : index
    %782 = vector.load %arg1[%c1_387, %c12_388, %c0_389, %c0_390] : memref<3x13x8x128xf32, #tpu.memory_space<vmem>>, vector<1x1x8x128xf32>
    %783 = vector.shape_cast %782 : vector<1x1x8x128xf32> to vector<8x128xf32>
    %784 = arith.subf %783, %632 : vector<8x128xf32>
    %785 = math.exp %784 : vector<8x128xf32>
    %786 = arith.addf %781, %785 : vector<8x128xf32>
    %787 = math.log %786 : vector<8x128xf32>
    %788 = arith.addf %632, %787 : vector<8x128xf32>
    %c2_391 = arith.constant 2 : index
    %c0_392 = arith.constant 0 : index
    %c0_393 = arith.constant 0 : index
    %c0_394 = arith.constant 0 : index
    %789 = vector.load %arg1[%c2_391, %c0_392, %c0_393, %c0_394] : memref<3x13x8x128xf32, #tpu.memory_space<vmem>>, vector<1x1x8x128xf32>
    %790 = vector.shape_cast %789 : vector<1x1x8x128xf32> to vector<8x128xf32>
    %791 = arith.subf %790, %636 : vector<8x128xf32>
    %792 = math.exp %791 : vector<8x128xf32>
    %c2_395 = arith.constant 2 : index
    %c1_396 = arith.constant 1 : index
    %c0_397 = arith.constant 0 : index
    %c0_398 = arith.constant 0 : index
    %793 = vector.load %arg1[%c2_395, %c1_396, %c0_397, %c0_398] : memref<3x13x8x128xf32, #tpu.memory_space<vmem>>, vector<1x1x8x128xf32>
    %794 = vector.shape_cast %793 : vector<1x1x8x128xf32> to vector<8x128xf32>
    %795 = arith.subf %794, %636 : vector<8x128xf32>
    %796 = math.exp %795 : vector<8x128xf32>
    %797 = arith.addf %792, %796 : vector<8x128xf32>
    %c2_399 = arith.constant 2 : index
    %c2_400 = arith.constant 2 : index
    %c0_401 = arith.constant 0 : index
    %c0_402 = arith.constant 0 : index
    %798 = vector.load %arg1[%c2_399, %c2_400, %c0_401, %c0_402] : memref<3x13x8x128xf32, #tpu.memory_space<vmem>>, vector<1x1x8x128xf32>
    %799 = vector.shape_cast %798 : vector<1x1x8x128xf32> to vector<8x128xf32>
    %800 = arith.subf %799, %636 : vector<8x128xf32>
    %801 = math.exp %800 : vector<8x128xf32>
    %802 = arith.addf %797, %801 : vector<8x128xf32>
    %c2_403 = arith.constant 2 : index
    %c3_404 = arith.constant 3 : index
    %c0_405 = arith.constant 0 : index
    %c0_406 = arith.constant 0 : index
    %803 = vector.load %arg1[%c2_403, %c3_404, %c0_405, %c0_406] : memref<3x13x8x128xf32, #tpu.memory_space<vmem>>, vector<1x1x8x128xf32>
    %804 = vector.shape_cast %803 : vector<1x1x8x128xf32> to vector<8x128xf32>
    %805 = arith.subf %804, %636 : vector<8x128xf32>
    %806 = math.exp %805 : vector<8x128xf32>
    %807 = arith.addf %802, %806 : vector<8x128xf32>
    %c2_407 = arith.constant 2 : index
    %c4_408 = arith.constant 4 : index
    %c0_409 = arith.constant 0 : index
    %c0_410 = arith.constant 0 : index
    %808 = vector.load %arg1[%c2_407, %c4_408, %c0_409, %c0_410] : memref<3x13x8x128xf32, #tpu.memory_space<vmem>>, vector<1x1x8x128xf32>
    %809 = vector.shape_cast %808 : vector<1x1x8x128xf32> to vector<8x128xf32>
    %810 = arith.subf %809, %636 : vector<8x128xf32>
    %811 = math.exp %810 : vector<8x128xf32>
    %812 = arith.addf %807, %811 : vector<8x128xf32>
    %c2_411 = arith.constant 2 : index
    %c5_412 = arith.constant 5 : index
    %c0_413 = arith.constant 0 : index
    %c0_414 = arith.constant 0 : index
    %813 = vector.load %arg1[%c2_411, %c5_412, %c0_413, %c0_414] : memref<3x13x8x128xf32, #tpu.memory_space<vmem>>, vector<1x1x8x128xf32>
    %814 = vector.shape_cast %813 : vector<1x1x8x128xf32> to vector<8x128xf32>
    %815 = arith.subf %814, %636 : vector<8x128xf32>
    %816 = math.exp %815 : vector<8x128xf32>
    %817 = arith.addf %812, %816 : vector<8x128xf32>
    %c2_415 = arith.constant 2 : index
    %c6_416 = arith.constant 6 : index
    %c0_417 = arith.constant 0 : index
    %c0_418 = arith.constant 0 : index
    %818 = vector.load %arg1[%c2_415, %c6_416, %c0_417, %c0_418] : memref<3x13x8x128xf32, #tpu.memory_space<vmem>>, vector<1x1x8x128xf32>
    %819 = vector.shape_cast %818 : vector<1x1x8x128xf32> to vector<8x128xf32>
    %820 = arith.subf %819, %636 : vector<8x128xf32>
    %821 = math.exp %820 : vector<8x128xf32>
    %822 = arith.addf %817, %821 : vector<8x128xf32>
    %c2_419 = arith.constant 2 : index
    %c7_420 = arith.constant 7 : index
    %c0_421 = arith.constant 0 : index
    %c0_422 = arith.constant 0 : index
    %823 = vector.load %arg1[%c2_419, %c7_420, %c0_421, %c0_422] : memref<3x13x8x128xf32, #tpu.memory_space<vmem>>, vector<1x1x8x128xf32>
    %824 = vector.shape_cast %823 : vector<1x1x8x128xf32> to vector<8x128xf32>
    %825 = arith.subf %824, %636 : vector<8x128xf32>
    %826 = math.exp %825 : vector<8x128xf32>
    %827 = arith.addf %822, %826 : vector<8x128xf32>
    %c2_423 = arith.constant 2 : index
    %c8_424 = arith.constant 8 : index
    %c0_425 = arith.constant 0 : index
    %c0_426 = arith.constant 0 : index
    %828 = vector.load %arg1[%c2_423, %c8_424, %c0_425, %c0_426] : memref<3x13x8x128xf32, #tpu.memory_space<vmem>>, vector<1x1x8x128xf32>
    %829 = vector.shape_cast %828 : vector<1x1x8x128xf32> to vector<8x128xf32>
    %830 = arith.subf %829, %636 : vector<8x128xf32>
    %831 = math.exp %830 : vector<8x128xf32>
    %832 = arith.addf %827, %831 : vector<8x128xf32>
    %c2_427 = arith.constant 2 : index
    %c9_428 = arith.constant 9 : index
    %c0_429 = arith.constant 0 : index
    %c0_430 = arith.constant 0 : index
    %833 = vector.load %arg1[%c2_427, %c9_428, %c0_429, %c0_430] : memref<3x13x8x128xf32, #tpu.memory_space<vmem>>, vector<1x1x8x128xf32>
    %834 = vector.shape_cast %833 : vector<1x1x8x128xf32> to vector<8x128xf32>
    %835 = arith.subf %834, %636 : vector<8x128xf32>
    %836 = math.exp %835 : vector<8x128xf32>
    %837 = arith.addf %832, %836 : vector<8x128xf32>
    %c2_431 = arith.constant 2 : index
    %c10_432 = arith.constant 10 : index
    %c0_433 = arith.constant 0 : index
    %c0_434 = arith.constant 0 : index
    %838 = vector.load %arg1[%c2_431, %c10_432, %c0_433, %c0_434] : memref<3x13x8x128xf32, #tpu.memory_space<vmem>>, vector<1x1x8x128xf32>
    %839 = vector.shape_cast %838 : vector<1x1x8x128xf32> to vector<8x128xf32>
    %840 = arith.subf %839, %636 : vector<8x128xf32>
    %841 = math.exp %840 : vector<8x128xf32>
    %842 = arith.addf %837, %841 : vector<8x128xf32>
    %c2_435 = arith.constant 2 : index
    %c11_436 = arith.constant 11 : index
    %c0_437 = arith.constant 0 : index
    %c0_438 = arith.constant 0 : index
    %843 = vector.load %arg1[%c2_435, %c11_436, %c0_437, %c0_438] : memref<3x13x8x128xf32, #tpu.memory_space<vmem>>, vector<1x1x8x128xf32>
    %844 = vector.shape_cast %843 : vector<1x1x8x128xf32> to vector<8x128xf32>
    %845 = arith.subf %844, %636 : vector<8x128xf32>
    %846 = math.exp %845 : vector<8x128xf32>
    %847 = arith.addf %842, %846 : vector<8x128xf32>
    %c2_439 = arith.constant 2 : index
    %c12_440 = arith.constant 12 : index
    %c0_441 = arith.constant 0 : index
    %c0_442 = arith.constant 0 : index
    %848 = vector.load %arg1[%c2_439, %c12_440, %c0_441, %c0_442] : memref<3x13x8x128xf32, #tpu.memory_space<vmem>>, vector<1x1x8x128xf32>
    %849 = vector.shape_cast %848 : vector<1x1x8x128xf32> to vector<8x128xf32>
    %850 = arith.subf %849, %636 : vector<8x128xf32>
    %851 = math.exp %850 : vector<8x128xf32>
    %852 = arith.addf %847, %851 : vector<8x128xf32>
    %853 = math.log %852 : vector<8x128xf32>
    %854 = arith.addf %636, %853 : vector<8x128xf32>
    %855 = arith.subf %722, %639 : vector<8x128xf32>
    %cst_443 = arith.constant 0.000000e+00 : f32
    %856 = vector.broadcast %cst_443 : f32 to vector<8x128xf32>
    %857 = arith.select %13, %856, %855 : vector<8x128xi1>, vector<8x128xf32>
    %858 = arith.subf %788, %640 : vector<8x128xf32>
    %cst_444 = arith.constant 0.000000e+00 : f32
    %859 = vector.broadcast %cst_444 : f32 to vector<8x128xf32>
    %860 = arith.select %13, %859, %858 : vector<8x128xi1>, vector<8x128xf32>
    %861 = arith.subf %854, %641 : vector<8x128xf32>
    %cst_445 = arith.constant 0.000000e+00 : f32
    %862 = vector.broadcast %cst_445 : f32 to vector<8x128xf32>
    %863 = arith.select %13, %862, %861 : vector<8x128xi1>, vector<8x128xf32>
    %864 = arith.subf %722, %642 : vector<8x128xf32>
    %cst_446 = arith.constant 0.000000e+00 : f32
    %865 = vector.broadcast %cst_446 : f32 to vector<8x128xf32>
    %866 = arith.select %15, %865, %864 : vector<8x128xi1>, vector<8x128xf32>
    %867 = arith.subf %788, %643 : vector<8x128xf32>
    %cst_447 = arith.constant 0.000000e+00 : f32
    %868 = vector.broadcast %cst_447 : f32 to vector<8x128xf32>
    %869 = arith.select %15, %868, %867 : vector<8x128xi1>, vector<8x128xf32>
    %870 = arith.subf %854, %644 : vector<8x128xf32>
    %cst_448 = arith.constant 0.000000e+00 : f32
    %871 = vector.broadcast %cst_448 : f32 to vector<8x128xf32>
    %872 = arith.select %15, %871, %870 : vector<8x128xi1>, vector<8x128xf32>
    %873 = arith.subf %722, %645 : vector<8x128xf32>
    %cst_449 = arith.constant 0.000000e+00 : f32
    %874 = vector.broadcast %cst_449 : f32 to vector<8x128xf32>
    %875 = arith.select %17, %874, %873 : vector<8x128xi1>, vector<8x128xf32>
    %876 = arith.subf %788, %646 : vector<8x128xf32>
    %cst_450 = arith.constant 0.000000e+00 : f32
    %877 = vector.broadcast %cst_450 : f32 to vector<8x128xf32>
    %878 = arith.select %17, %877, %876 : vector<8x128xi1>, vector<8x128xf32>
    %879 = arith.subf %854, %647 : vector<8x128xf32>
    %cst_451 = arith.constant 0.000000e+00 : f32
    %880 = vector.broadcast %cst_451 : f32 to vector<8x128xf32>
    %881 = arith.select %17, %880, %879 : vector<8x128xi1>, vector<8x128xf32>
    %882 = arith.subf %722, %648 : vector<8x128xf32>
    %cst_452 = arith.constant 0.000000e+00 : f32
    %883 = vector.broadcast %cst_452 : f32 to vector<8x128xf32>
    %884 = arith.select %19, %883, %882 : vector<8x128xi1>, vector<8x128xf32>
    %885 = arith.subf %788, %649 : vector<8x128xf32>
    %cst_453 = arith.constant 0.000000e+00 : f32
    %886 = vector.broadcast %cst_453 : f32 to vector<8x128xf32>
    %887 = arith.select %19, %886, %885 : vector<8x128xi1>, vector<8x128xf32>
    %888 = arith.subf %854, %650 : vector<8x128xf32>
    %cst_454 = arith.constant 0.000000e+00 : f32
    %889 = vector.broadcast %cst_454 : f32 to vector<8x128xf32>
    %890 = arith.select %19, %889, %888 : vector<8x128xi1>, vector<8x128xf32>
    %891 = arith.subf %722, %651 : vector<8x128xf32>
    %cst_455 = arith.constant 0.000000e+00 : f32
    %892 = vector.broadcast %cst_455 : f32 to vector<8x128xf32>
    %893 = arith.select %21, %892, %891 : vector<8x128xi1>, vector<8x128xf32>
    %894 = arith.subf %788, %652 : vector<8x128xf32>
    %cst_456 = arith.constant 0.000000e+00 : f32
    %895 = vector.broadcast %cst_456 : f32 to vector<8x128xf32>
    %896 = arith.select %21, %895, %894 : vector<8x128xi1>, vector<8x128xf32>
    %897 = arith.subf %854, %653 : vector<8x128xf32>
    %cst_457 = arith.constant 0.000000e+00 : f32
    %898 = vector.broadcast %cst_457 : f32 to vector<8x128xf32>
    %899 = arith.select %21, %898, %897 : vector<8x128xi1>, vector<8x128xf32>
    %900 = arith.subf %722, %654 : vector<8x128xf32>
    %cst_458 = arith.constant 0.000000e+00 : f32
    %901 = vector.broadcast %cst_458 : f32 to vector<8x128xf32>
    %902 = arith.select %23, %901, %900 : vector<8x128xi1>, vector<8x128xf32>
    %903 = arith.subf %788, %655 : vector<8x128xf32>
    %cst_459 = arith.constant 0.000000e+00 : f32
    %904 = vector.broadcast %cst_459 : f32 to vector<8x128xf32>
    %905 = arith.select %23, %904, %903 : vector<8x128xi1>, vector<8x128xf32>
    %906 = arith.subf %854, %656 : vector<8x128xf32>
    %cst_460 = arith.constant 0.000000e+00 : f32
    %907 = vector.broadcast %cst_460 : f32 to vector<8x128xf32>
    %908 = arith.select %23, %907, %906 : vector<8x128xi1>, vector<8x128xf32>
    %909 = arith.addf %857, %869 : vector<8x128xf32>
    %910 = arith.addf %909, %881 : vector<8x128xf32>
    %cst_461 = arith.constant 0.333333343 : f32
    %911 = vector.broadcast %cst_461 : f32 to vector<8x128xf32>
    %912 = arith.mulf %910, %911 : vector<8x128xf32>
    %c0_i32_462 = arith.constant 0 : i32
    %913 = vector.broadcast %c0_i32_462 : i32 to vector<8x128xi32>
    %914 = arith.addf %857, %872 : vector<8x128xf32>
    %915 = arith.addf %914, %878 : vector<8x128xf32>
    %cst_463 = arith.constant 0.333333343 : f32
    %916 = vector.broadcast %cst_463 : f32 to vector<8x128xf32>
    %917 = arith.mulf %915, %916 : vector<8x128xf32>
    %918 = arith.cmpf olt, %917, %912 : vector<8x128xf32>
    %919 = arith.select %918, %917, %912 : vector<8x128xi1>, vector<8x128xf32>
    %c1_i32_464 = arith.constant 1 : i32
    %920 = vector.broadcast %c1_i32_464 : i32 to vector<8x128xi32>
    %921 = arith.select %918, %920, %913 : vector<8x128xi1>, vector<8x128xi32>
    %922 = arith.addf %860, %866 : vector<8x128xf32>
    %923 = arith.addf %922, %881 : vector<8x128xf32>
    %cst_465 = arith.constant 0.333333343 : f32
    %924 = vector.broadcast %cst_465 : f32 to vector<8x128xf32>
    %925 = arith.mulf %923, %924 : vector<8x128xf32>
    %926 = arith.cmpf olt, %925, %919 : vector<8x128xf32>
    %927 = arith.select %926, %925, %919 : vector<8x128xi1>, vector<8x128xf32>
    %c2_i32_466 = arith.constant 2 : i32
    %928 = vector.broadcast %c2_i32_466 : i32 to vector<8x128xi32>
    %929 = arith.select %926, %928, %921 : vector<8x128xi1>, vector<8x128xi32>
    %930 = arith.addf %860, %872 : vector<8x128xf32>
    %931 = arith.addf %930, %875 : vector<8x128xf32>
    %cst_467 = arith.constant 0.333333343 : f32
    %932 = vector.broadcast %cst_467 : f32 to vector<8x128xf32>
    %933 = arith.mulf %931, %932 : vector<8x128xf32>
    %934 = arith.cmpf olt, %933, %927 : vector<8x128xf32>
    %935 = arith.select %934, %933, %927 : vector<8x128xi1>, vector<8x128xf32>
    %c3_i32_468 = arith.constant 3 : i32
    %936 = vector.broadcast %c3_i32_468 : i32 to vector<8x128xi32>
    %937 = arith.select %934, %936, %929 : vector<8x128xi1>, vector<8x128xi32>
    %938 = arith.addf %863, %866 : vector<8x128xf32>
    %939 = arith.addf %938, %878 : vector<8x128xf32>
    %cst_469 = arith.constant 0.333333343 : f32
    %940 = vector.broadcast %cst_469 : f32 to vector<8x128xf32>
    %941 = arith.mulf %939, %940 : vector<8x128xf32>
    %942 = arith.cmpf olt, %941, %935 : vector<8x128xf32>
    %943 = arith.select %942, %941, %935 : vector<8x128xi1>, vector<8x128xf32>
    %c4_i32_470 = arith.constant 4 : i32
    %944 = vector.broadcast %c4_i32_470 : i32 to vector<8x128xi32>
    %945 = arith.select %942, %944, %937 : vector<8x128xi1>, vector<8x128xi32>
    %946 = arith.addf %863, %869 : vector<8x128xf32>
    %947 = arith.addf %946, %875 : vector<8x128xf32>
    %cst_471 = arith.constant 0.333333343 : f32
    %948 = vector.broadcast %cst_471 : f32 to vector<8x128xf32>
    %949 = arith.mulf %947, %948 : vector<8x128xf32>
    %950 = arith.cmpf olt, %949, %943 : vector<8x128xf32>
    %951 = arith.select %950, %949, %943 : vector<8x128xi1>, vector<8x128xf32>
    %c5_i32_472 = arith.constant 5 : i32
    %952 = vector.broadcast %c5_i32_472 : i32 to vector<8x128xi32>
    %953 = arith.select %950, %952, %945 : vector<8x128xi1>, vector<8x128xi32>
    %954 = arith.addf %884, %896 : vector<8x128xf32>
    %955 = arith.addf %954, %908 : vector<8x128xf32>
    %cst_473 = arith.constant 0.333333343 : f32
    %956 = vector.broadcast %cst_473 : f32 to vector<8x128xf32>
    %957 = arith.mulf %955, %956 : vector<8x128xf32>
    %c0_i32_474 = arith.constant 0 : i32
    %958 = vector.broadcast %c0_i32_474 : i32 to vector<8x128xi32>
    %959 = arith.addf %884, %899 : vector<8x128xf32>
    %960 = arith.addf %959, %905 : vector<8x128xf32>
    %cst_475 = arith.constant 0.333333343 : f32
    %961 = vector.broadcast %cst_475 : f32 to vector<8x128xf32>
    %962 = arith.mulf %960, %961 : vector<8x128xf32>
    %963 = arith.cmpf olt, %962, %957 : vector<8x128xf32>
    %964 = arith.select %963, %962, %957 : vector<8x128xi1>, vector<8x128xf32>
    %c1_i32_476 = arith.constant 1 : i32
    %965 = vector.broadcast %c1_i32_476 : i32 to vector<8x128xi32>
    %966 = arith.select %963, %965, %958 : vector<8x128xi1>, vector<8x128xi32>
    %967 = arith.addf %887, %893 : vector<8x128xf32>
    %968 = arith.addf %967, %908 : vector<8x128xf32>
    %cst_477 = arith.constant 0.333333343 : f32
    %969 = vector.broadcast %cst_477 : f32 to vector<8x128xf32>
    %970 = arith.mulf %968, %969 : vector<8x128xf32>
    %971 = arith.cmpf olt, %970, %964 : vector<8x128xf32>
    %972 = arith.select %971, %970, %964 : vector<8x128xi1>, vector<8x128xf32>
    %c2_i32_478 = arith.constant 2 : i32
    %973 = vector.broadcast %c2_i32_478 : i32 to vector<8x128xi32>
    %974 = arith.select %971, %973, %966 : vector<8x128xi1>, vector<8x128xi32>
    %975 = arith.addf %887, %899 : vector<8x128xf32>
    %976 = arith.addf %975, %902 : vector<8x128xf32>
    %cst_479 = arith.constant 0.333333343 : f32
    %977 = vector.broadcast %cst_479 : f32 to vector<8x128xf32>
    %978 = arith.mulf %976, %977 : vector<8x128xf32>
    %979 = arith.cmpf olt, %978, %972 : vector<8x128xf32>
    %980 = arith.select %979, %978, %972 : vector<8x128xi1>, vector<8x128xf32>
    %c3_i32_480 = arith.constant 3 : i32
    %981 = vector.broadcast %c3_i32_480 : i32 to vector<8x128xi32>
    %982 = arith.select %979, %981, %974 : vector<8x128xi1>, vector<8x128xi32>
    %983 = arith.addf %890, %893 : vector<8x128xf32>
    %984 = arith.addf %983, %905 : vector<8x128xf32>
    %cst_481 = arith.constant 0.333333343 : f32
    %985 = vector.broadcast %cst_481 : f32 to vector<8x128xf32>
    %986 = arith.mulf %984, %985 : vector<8x128xf32>
    %987 = arith.cmpf olt, %986, %980 : vector<8x128xf32>
    %988 = arith.select %987, %986, %980 : vector<8x128xi1>, vector<8x128xf32>
    %c4_i32_482 = arith.constant 4 : i32
    %989 = vector.broadcast %c4_i32_482 : i32 to vector<8x128xi32>
    %990 = arith.select %987, %989, %982 : vector<8x128xi1>, vector<8x128xi32>
    %991 = arith.addf %890, %896 : vector<8x128xf32>
    %992 = arith.addf %991, %902 : vector<8x128xf32>
    %cst_483 = arith.constant 0.333333343 : f32
    %993 = vector.broadcast %cst_483 : f32 to vector<8x128xf32>
    %994 = arith.mulf %992, %993 : vector<8x128xf32>
    %995 = arith.cmpf olt, %994, %988 : vector<8x128xf32>
    %996 = arith.select %995, %994, %988 : vector<8x128xi1>, vector<8x128xf32>
    %c5_i32_484 = arith.constant 5 : i32
    %997 = vector.broadcast %c5_i32_484 : i32 to vector<8x128xi32>
    %998 = arith.select %995, %997, %990 : vector<8x128xi1>, vector<8x128xi32>
    %999 = arith.cmpf olt, %996, %951 : vector<8x128xf32>
    %1000 = arith.select %999, %996, %951 : vector<8x128xi1>, vector<8x128xf32>
    %1001 = arith.select %999, %998, %953 : vector<8x128xi1>, vector<8x128xi32>
    %1002 = arith.select %999, %7, %1 : vector<8x128xi1>, vector<8x128xi32>
    %1003 = arith.select %999, %9, %3 : vector<8x128xi1>, vector<8x128xi32>
    %1004 = arith.select %999, %11, %5 : vector<8x128xi1>, vector<8x128xi32>
    %c1_i32_485 = arith.constant 1 : i32
    %1005 = vector.broadcast %c1_i32_485 : i32 to vector<8x128xi32>
    %1006 = arith.cmpi eq, %1001, %1005 : vector<8x128xi32>
    %c2_i32_486 = arith.constant 2 : i32
    %1007 = vector.broadcast %c2_i32_486 : i32 to vector<8x128xi32>
    %1008 = arith.cmpi eq, %1001, %1007 : vector<8x128xi32>
    %c3_i32_487 = arith.constant 3 : i32
    %1009 = vector.broadcast %c3_i32_487 : i32 to vector<8x128xi32>
    %1010 = arith.cmpi eq, %1001, %1009 : vector<8x128xi32>
    %c4_i32_488 = arith.constant 4 : i32
    %1011 = vector.broadcast %c4_i32_488 : i32 to vector<8x128xi32>
    %1012 = arith.cmpi eq, %1001, %1011 : vector<8x128xi32>
    %c5_i32_489 = arith.constant 5 : i32
    %1013 = vector.broadcast %c5_i32_489 : i32 to vector<8x128xi32>
    %1014 = arith.cmpi eq, %1001, %1013 : vector<8x128xi32>
    %cst_490 = arith.constant 0.000000e+00 : f32
    %1015 = vector.broadcast %cst_490 : f32 to vector<8x128xf32>
    %cst_491 = arith.constant 0.000000e+00 : f32
    %1016 = vector.broadcast %cst_491 : f32 to vector<8x128xf32>
    %1017 = arith.select %1006, %1002, %1002 : vector<8x128xi1>, vector<8x128xi32>
    %1018 = arith.select %1008, %1003, %1017 : vector<8x128xi1>, vector<8x128xi32>
    %1019 = arith.select %1010, %1003, %1018 : vector<8x128xi1>, vector<8x128xi32>
    %1020 = arith.select %1012, %1004, %1019 : vector<8x128xi1>, vector<8x128xi32>
    %1021 = arith.select %1014, %1004, %1020 : vector<8x128xi1>, vector<8x128xi32>
    %c-100_i32_492 = arith.constant -100 : i32
    %1022 = vector.broadcast %c-100_i32_492 : i32 to vector<8x128xi32>
    %1023 = arith.cmpi ne, %1021, %1022 : vector<8x128xi32>
    %1024 = arith.cmpi eq, %630, %1021 : vector<8x128xi32>
    %1025 = arith.andi %1023, %1024 : vector<8x128xi1>
    %1026 = arith.extui %1023 : vector<8x128xi1> to vector<8x128xi32>
    %1027 = arith.sitofp %1026 : vector<8x128xi32> to vector<8x128xf32>
    %1028 = arith.addf %1015, %1027 : vector<8x128xf32>
    %1029 = arith.extui %1025 : vector<8x128xi1> to vector<8x128xi32>
    %1030 = arith.sitofp %1029 : vector<8x128xi32> to vector<8x128xf32>
    %1031 = arith.addf %1016, %1030 : vector<8x128xf32>
    %1032 = arith.select %1006, %1004, %1003 : vector<8x128xi1>, vector<8x128xi32>
    %1033 = arith.select %1008, %1002, %1032 : vector<8x128xi1>, vector<8x128xi32>
    %1034 = arith.select %1010, %1004, %1033 : vector<8x128xi1>, vector<8x128xi32>
    %1035 = arith.select %1012, %1002, %1034 : vector<8x128xi1>, vector<8x128xi32>
    %1036 = arith.select %1014, %1003, %1035 : vector<8x128xi1>, vector<8x128xi32>
    %c-100_i32_493 = arith.constant -100 : i32
    %1037 = vector.broadcast %c-100_i32_493 : i32 to vector<8x128xi32>
    %1038 = arith.cmpi ne, %1036, %1037 : vector<8x128xi32>
    %1039 = arith.cmpi eq, %634, %1036 : vector<8x128xi32>
    %1040 = arith.andi %1038, %1039 : vector<8x128xi1>
    %1041 = arith.extui %1038 : vector<8x128xi1> to vector<8x128xi32>
    %1042 = arith.sitofp %1041 : vector<8x128xi32> to vector<8x128xf32>
    %1043 = arith.addf %1028, %1042 : vector<8x128xf32>
    %1044 = arith.extui %1040 : vector<8x128xi1> to vector<8x128xi32>
    %1045 = arith.sitofp %1044 : vector<8x128xi32> to vector<8x128xf32>
    %1046 = arith.addf %1031, %1045 : vector<8x128xf32>
    %1047 = arith.select %1006, %1003, %1004 : vector<8x128xi1>, vector<8x128xi32>
    %1048 = arith.select %1008, %1004, %1047 : vector<8x128xi1>, vector<8x128xi32>
    %1049 = arith.select %1010, %1002, %1048 : vector<8x128xi1>, vector<8x128xi32>
    %1050 = arith.select %1012, %1003, %1049 : vector<8x128xi1>, vector<8x128xi32>
    %1051 = arith.select %1014, %1002, %1050 : vector<8x128xi1>, vector<8x128xi32>
    %c-100_i32_494 = arith.constant -100 : i32
    %1052 = vector.broadcast %c-100_i32_494 : i32 to vector<8x128xi32>
    %1053 = arith.cmpi ne, %1051, %1052 : vector<8x128xi32>
    %1054 = arith.cmpi eq, %638, %1051 : vector<8x128xi32>
    %1055 = arith.andi %1053, %1054 : vector<8x128xi1>
    %1056 = arith.extui %1053 : vector<8x128xi1> to vector<8x128xi32>
    %1057 = arith.sitofp %1056 : vector<8x128xi32> to vector<8x128xf32>
    %1058 = arith.addf %1043, %1057 : vector<8x128xf32>
    %1059 = arith.extui %1055 : vector<8x128xi1> to vector<8x128xi32>
    %1060 = arith.sitofp %1059 : vector<8x128xi32> to vector<8x128xf32>
    %1061 = arith.addf %1046, %1060 : vector<8x128xf32>
    %cst_495 = arith.constant 0.000000e+00 : f32
    %1062 = vector.broadcast %cst_495 : f32 to vector<8x128xf32>
    %1063 = arith.cmpf ogt, %1000, %1062 : vector<8x128xf32>
    %cst_496 = arith.constant 0.000000e+00 : f32
    %1064 = vector.broadcast %cst_496 : f32 to vector<8x128xf32>
    %1065 = arith.select %1063, %1000, %1064 : vector<8x128xi1>, vector<8x128xf32>
    %cst_497 = arith.constant dense<0.000000e+00> : vector<128xf32>
    %1066 = vector.multi_reduction <add>, %1065, %cst_497 [0] : vector<8x128xf32> to vector<128xf32>
    %1067 = vector.shape_cast %1066 : vector<128xf32> to vector<1x128xf32>
    %cst_498 = arith.constant dense<0.000000e+00> : vector<1xf32>
    %1068 = vector.multi_reduction <add>, %1067, %cst_498 [1] : vector<1x128xf32> to vector<1xf32>
    %1069 = vector.shape_cast %1068 : vector<1xf32> to vector<1x1xf32>
    %1070 = arith.extui %1063 : vector<8x128xi1> to vector<8x128xi32>
    %1071 = arith.sitofp %1070 : vector<8x128xi32> to vector<8x128xf32>
    %cst_499 = arith.constant dense<0.000000e+00> : vector<128xf32>
    %1072 = vector.multi_reduction <add>, %1071, %cst_499 [0] : vector<8x128xf32> to vector<128xf32>
    %1073 = vector.shape_cast %1072 : vector<128xf32> to vector<1x128xf32>
    %cst_500 = arith.constant dense<0.000000e+00> : vector<1xf32>
    %1074 = vector.multi_reduction <add>, %1073, %cst_500 [1] : vector<1x128xf32> to vector<1xf32>
    %1075 = vector.shape_cast %1074 : vector<1xf32> to vector<1x1xf32>
    %cst_501 = arith.constant dense<0.000000e+00> : vector<128xf32>
    %1076 = vector.multi_reduction <add>, %1061, %cst_501 [0] : vector<8x128xf32> to vector<128xf32>
    %1077 = vector.shape_cast %1076 : vector<128xf32> to vector<1x128xf32>
    %cst_502 = arith.constant dense<0.000000e+00> : vector<1xf32>
    %1078 = vector.multi_reduction <add>, %1077, %cst_502 [1] : vector<1x128xf32> to vector<1xf32>
    %1079 = vector.shape_cast %1078 : vector<1xf32> to vector<1x1xf32>
    %cst_503 = arith.constant dense<0.000000e+00> : vector<128xf32>
    %1080 = vector.multi_reduction <add>, %1058, %cst_503 [0] : vector<8x128xf32> to vector<128xf32>
    %1081 = vector.shape_cast %1080 : vector<128xf32> to vector<1x128xf32>
    %cst_504 = arith.constant dense<0.000000e+00> : vector<1xf32>
    %1082 = vector.multi_reduction <add>, %1081, %cst_504 [1] : vector<1x128xf32> to vector<1xf32>
    %1083 = vector.shape_cast %1082 : vector<1xf32> to vector<1x1xf32>
    %1084 = tpu.iota {dimensions = array<i32: 0>} : vector<8x128xi32>
    %c0_i32_505 = arith.constant 0 : i32
    %1085 = vector.broadcast %c0_i32_505 : i32 to vector<8x128xi32>
    %1086 = arith.cmpi eq, %1084, %1085 : vector<8x128xi32>
    %cst_506 = arith.constant 0.000000e+00 : f32
    %1087 = vector.shape_cast %1069 : vector<1x1xf32> to vector<1x1xf32>
    %1088 = vector.broadcast %1087 : vector<1x1xf32> to vector<8x128xf32>
    %1089 = vector.broadcast %cst_506 : f32 to vector<8x128xf32>
    %1090 = arith.select %1086, %1088, %1089 : vector<8x128xi1>, vector<8x128xf32>
    %c1_i32_507 = arith.constant 1 : i32
    %1091 = vector.broadcast %c1_i32_507 : i32 to vector<8x128xi32>
    %1092 = arith.cmpi eq, %1084, %1091 : vector<8x128xi32>
    %cst_508 = arith.constant 0.000000e+00 : f32
    %1093 = vector.shape_cast %1075 : vector<1x1xf32> to vector<1x1xf32>
    %1094 = vector.broadcast %1093 : vector<1x1xf32> to vector<8x128xf32>
    %1095 = vector.broadcast %cst_508 : f32 to vector<8x128xf32>
    %1096 = arith.select %1092, %1094, %1095 : vector<8x128xi1>, vector<8x128xf32>
    %1097 = arith.addf %1090, %1096 : vector<8x128xf32>
    %c2_i32_509 = arith.constant 2 : i32
    %1098 = vector.broadcast %c2_i32_509 : i32 to vector<8x128xi32>
    %1099 = arith.cmpi eq, %1084, %1098 : vector<8x128xi32>
    %cst_510 = arith.constant 0.000000e+00 : f32
    %1100 = vector.shape_cast %1079 : vector<1x1xf32> to vector<1x1xf32>
    %1101 = vector.broadcast %1100 : vector<1x1xf32> to vector<8x128xf32>
    %1102 = vector.broadcast %cst_510 : f32 to vector<8x128xf32>
    %1103 = arith.select %1099, %1101, %1102 : vector<8x128xi1>, vector<8x128xf32>
    %1104 = arith.addf %1097, %1103 : vector<8x128xf32>
    %c3_i32_511 = arith.constant 3 : i32
    %1105 = vector.broadcast %c3_i32_511 : i32 to vector<8x128xi32>
    %1106 = arith.cmpi eq, %1084, %1105 : vector<8x128xi32>
    %cst_512 = arith.constant 0.000000e+00 : f32
    %1107 = vector.shape_cast %1083 : vector<1x1xf32> to vector<1x1xf32>
    %1108 = vector.broadcast %1107 : vector<1x1xf32> to vector<8x128xf32>
    %1109 = vector.broadcast %cst_512 : f32 to vector<8x128xf32>
    %1110 = arith.select %1106, %1108, %1109 : vector<8x128xi1>, vector<8x128xf32>
    %1111 = arith.addf %1104, %1110 : vector<8x128xf32>
    %1112 = vector.shape_cast %1111 : vector<8x128xf32> to vector<1x8x128xf32>
    %c0_513 = arith.constant 0 : index
    %c0_514 = arith.constant 0 : index
    %c0_515 = arith.constant 0 : index
    %1113 = vector.load %arg3[%c0_513, %c0_514, %c0_515] : memref<1x8x128xf32, #tpu.memory_space<vmem>>, vector<1x8x128xf32>
    tpu.vector_store %arg3[%c0_513, %c0_514, %c0_515], %1112 {strides = array<i32>} : memref<1x8x128xf32, #tpu.memory_space<vmem>>, vector<1x8x128xf32>,
    return
  }
  func.func @transform_0(%arg0: i32) -> (i32, i32, i32, i32) {
    %c0_i32 = arith.constant 0 : i32
    %c0_i32_0 = arith.constant 0 : i32
    %c0_i32_1 = arith.constant 0 : i32
    %c0_i32_2 = arith.constant 0 : i32
    return %c0_i32, %c0_i32_0, %arg0, %c0_i32_1 : i32, i32, i32, i32
  }
  func.func @transform_1(%arg0: i32) -> (i32, i32, i32) {
    %c0_i32 = arith.constant 0 : i32
    %c0_i32_0 = arith.constant 0 : i32
    %c0_i32_1 = arith.constant 0 : i32
    return %c0_i32, %arg0, %c0_i32_0 : i32, i32, i32
  }
  func.func @transform_2(%arg0: i32) -> (i32, i32, i32) {
    %c0_i32 = arith.constant 0 : i32
    %c0_i32_0 = arith.constant 0 : i32
    %c0_i32_1 = arith.constant 0 : i32
    return %arg0, %c0_i32, %c0_i32_0 : i32, i32, i32
  }
}

</mosaic_0001>

<llo_original>
// kernel: _tdoa_loss_device.1
$region0: #{_tdoa_loss_device.1}
  #allocation0 [shape = 'u32[]', space=smem, size = 0x4, offset = 0x4, fixed_abs, tag = 'smem constant byte address 0x4 - core index']
  #allocation1 [shape = 'u32[144,128]{1,0:T(1,128)}', space=vmem, size = 0x12000, scoped, tag = 'internal scratch']
  %s0 = inlined_call_operand.vmem [shape: f32[3,13,8,128], index: 0, kind: input, shape index: {}]
  %s1 = inlined_call_operand.vmem [shape: s32[8,8,128], index: 1, kind: input, shape index: {}]
  %s2 = inlined_call_operand.vmem [shape: f32[1,8,128], index: 2, kind: output, shape index: {}]
  %s3 = sld [smem:[#allocation0]]
  $region18: #{_tdoa_loss_device.1} parent=0
    _
  %s5 = ssub.s32 1, %s3
  %s6 = scalar_select 0, %s5, %s3
  // Predicated region
  $region2: #{_tdoa_loss_device.1} parent=0 // pred_check
    _
  $region3: #{_tdoa_loss_device.1} parent=0 // pred_check_branch
    %8 = sbr.rel (0) target = $region5
  $region4: #{_tdoa_loss_device.1} parent=0 // pred_region
    _
  $region5: #{_tdoa_loss_device.1} parent=0 // pred_fallthru
    _
  // Predicated region
  $region6: #{_tdoa_loss_device.1} parent=0 // pred_check
    _
  $region7: #{_tdoa_loss_device.1} parent=0 // pred_check_branch
    %10 = sbr.rel (0) target = $region9
  $region8: #{_tdoa_loss_device.1} parent=0 // pred_region
    _
  $region9: #{_tdoa_loss_device.1} parent=0 // pred_fallthru
    _
  %v11 = vld [vmem:[%s1] sm:$0xff]
  %s12 = scalar_lea.vmem %s1, 8
  %v13 = vld [vmem:[%s12] sm:$0xff]
  %s14 = scalar_lea.vmem %s1, 16
  %v15 = vld [vmem:[%s14] sm:$0xff]
  %s16 = scalar_lea.vmem %s1, 24
  %v17 = vld [vmem:[%s16] sm:$0xff]
  %s18 = scalar_lea.vmem %s1, 32
  %v19 = vld [vmem:[%s18] sm:$0xff]
  %s20 = scalar_lea.vmem %s1, 40
  %v21 = vld [vmem:[%s20] sm:$0xff]
  %vm22 = vcmp.eq.s32.totalorder %v11, 4294967196
  %vm23 = vcmp.eq.s32.totalorder %v13, 4294967196
  %vm24 = vcmp.eq.s32.totalorder %v15, 4294967196
  %vm25 = vcmp.eq.s32.totalorder %v17, 4294967196
  %vm26 = vcmp.eq.s32.totalorder %v19, 4294967196
  %vm27 = vcmp.eq.s32.totalorder %v21, 4294967196
  %v28 = vld [vmem:[%s0] sm:$0xff]
  %s29 = scalar_lea.vmem %s0, 104
  %v30 = vld [vmem:[%s29] sm:$0xff]
  %s31 = scalar_lea.vmem %s0, 208
  %v32 = vld [vmem:[%s31] sm:$0xff]
  %vm33 = vcmp.eq.s32.totalorder %v11, 0
  %vm34 = vcmp.eq.s32.totalorder %v13, 0
  %vm35 = vcmp.eq.s32.totalorder %v15, 0
  %vm36 = vcmp.eq.s32.totalorder %v17, 0
  %vm37 = vcmp.eq.s32.totalorder %v19, 0
  %vm38 = vcmp.eq.s32.totalorder %v21, 0
  %v39 = vsel %vm33, %v28, 0.0
  %v40 = vsel %vm33, %v30, 0.0
  %v41 = vsel %vm33, %v32, 0.0
  %v42 = vsel %vm34, %v28, 0.0
  %v43 = vsel %vm34, %v30, 0.0
  %v44 = vsel %vm34, %v32, 0.0
  %v45 = vsel %vm35, %v28, 0.0
  %v46 = vsel %vm35, %v30, 0.0
  %v47 = vsel %vm35, %v32, 0.0
  %v48 = vsel %vm36, %v28, 0.0
  %v49 = vsel %vm36, %v30, 0.0
  %v50 = vsel %vm36, %v32, 0.0
  %v51 = vsel %vm37, %v28, 0.0
  %v52 = vsel %vm37, %v30, 0.0
  %v53 = vsel %vm37, %v32, 0.0
  %v54 = vsel %vm38, %v28, 0.0
  %v55 = vsel %vm38, %v30, 0.0
  %v56 = vsel %vm38, %v32, 0.0
  %s57 = scalar_lea.vmem %s0, 8
  %v58 = vld [vmem:[%s57] sm:$0xff]
  %s59 = scalar_lea.vmem %s0, 112
  %v60 = vld [vmem:[%s59] sm:$0xff]
  %s61 = scalar_lea.vmem %s0, 216
  %v62 = vld [vmem:[%s61] sm:$0xff]
  %vm63 = vcmp.eq.s32.totalorder %v11, 1
  %vm64 = vcmp.eq.s32.totalorder %v13, 1
  %vm65 = vcmp.eq.s32.totalorder %v15, 1
  %vm66 = vcmp.eq.s32.totalorder %v17, 1
  %vm67 = vcmp.eq.s32.totalorder %v19, 1
  %vm68 = vcmp.eq.s32.totalorder %v21, 1
  %vm69 = vcmp.gt.f32.partialorder %v58, %v28
  %v70 = vsel %vm69, %v58, %v28
  %v71 = vsel %vm69, 1, 0
  %vm72 = vcmp.gt.f32.partialorder %v60, %v30
  %v73 = vsel %vm72, %v60, %v30
  %v74 = vsel %vm72, 1, 0
  %vm75 = vcmp.gt.f32.partialorder %v62, %v32
  %v76 = vsel %vm75, %v62, %v32
  %v77 = vsel %vm75, 1, 0
  %v78 = vsel %vm63, %v58, %v39
  %v79 = vsel %vm63, %v60, %v40
  %v80 = vsel %vm63, %v62, %v41
  %v81 = vsel %vm64, %v58, %v42
  %v82 = vsel %vm64, %v60, %v43
  %v83 = vsel %vm64, %v62, %v44
  %v84 = vsel %vm65, %v58, %v45
  %v85 = vsel %vm65, %v60, %v46
  %v86 = vsel %vm65, %v62, %v47
  %v87 = vsel %vm66, %v58, %v48
  %v88 = vsel %vm66, %v60, %v49
  %v89 = vsel %vm66, %v62, %v50
  %v90 = vsel %vm67, %v58, %v51
  %v91 = vsel %vm67, %v60, %v52
  %v92 = vsel %vm67, %v62, %v53
  %v93 = vsel %vm68, %v58, %v54
  %v94 = vsel %vm68, %v60, %v55
  %v95 = vsel %vm68, %v62, %v56
  %s96 = scalar_lea.vmem %s0, 16
  %v97 = vld [vmem:[%s96] sm:$0xff]
  %s98 = scalar_lea.vmem %s0, 120
  %v99 = vld [vmem:[%s98] sm:$0xff]
  %s100 = scalar_lea.vmem %s0, 224
  %v101 = vld [vmem:[%s100] sm:$0xff]
  %vm102 = vcmp.eq.s32.totalorder %v11, 2
  %vm103 = vcmp.eq.s32.totalorder %v13, 2
  %vm104 = vcmp.eq.s32.totalorder %v15, 2
  %vm105 = vcmp.eq.s32.totalorder %v17, 2
  %vm106 = vcmp.eq.s32.totalorder %v19, 2
  %vm107 = vcmp.eq.s32.totalorder %v21, 2
  %vm108 = vcmp.gt.f32.partialorder %v97, %v70
  %v109 = vsel %vm108, %v97, %v70
  %v110 = vsel %vm108, 2, %v71
  %vm111 = vcmp.gt.f32.partialorder %v99, %v73
  %v112 = vsel %vm111, %v99, %v73
  %v113 = vsel %vm111, 2, %v74
  %vm114 = vcmp.gt.f32.partialorder %v101, %v76
  %v115 = vsel %vm114, %v101, %v76
  %v116 = vsel %vm114, 2, %v77
  %v117 = vsel %vm102, %v97, %v78
  %v118 = vsel %vm102, %v99, %v79
  %v119 = vsel %vm102, %v101, %v80
  %v120 = vsel %vm103, %v97, %v81
  %v121 = vsel %vm103, %v99, %v82
  %v122 = vsel %vm103, %v101, %v83
  %v123 = vsel %vm104, %v97, %v84
  %v124 = vsel %vm104, %v99, %v85
  %v125 = vsel %vm104, %v101, %v86
  %v126 = vsel %vm105, %v97, %v87
  %v127 = vsel %vm105, %v99, %v88
  %v128 = vsel %vm105, %v101, %v89
  %v129 = vsel %vm106, %v97, %v90
  %v130 = vsel %vm106, %v99, %v91
  %v131 = vsel %vm106, %v101, %v92
  %v132 = vsel %vm107, %v97, %v93
  %v133 = vsel %vm107, %v99, %v94
  %v134 = vsel %vm107, %v101, %v95
  %s135 = scalar_lea.vmem %s0, 24
  %v136 = vld [vmem:[%s135] sm:$0xff]
  %s137 = scalar_lea.vmem %s0, 128
  %v138 = vld [vmem:[%s137] sm:$0xff]
  %s139 = scalar_lea.vmem %s0, 232
  %v140 = vld [vmem:[%s139] sm:$0xff]
  %vm141 = vcmp.eq.s32.totalorder %v11, 3
  %vm142 = vcmp.eq.s32.totalorder %v13, 3
  %vm143 = vcmp.eq.s32.totalorder %v15, 3
  %vm144 = vcmp.eq.s32.totalorder %v17, 3
  %vm145 = vcmp.eq.s32.totalorder %v19, 3
  %vm146 = vcmp.eq.s32.totalorder %v21, 3
  %vm147 = vcmp.gt.f32.partialorder %v136, %v109
  %v148 = vsel %vm147, %v136, %v109
  %v149 = vsel %vm147, 3, %v110
  %vm150 = vcmp.gt.f32.partialorder %v138, %v112
  %v151 = vsel %vm150, %v138, %v112
  %v152 = vsel %vm150, 3, %v113
  %vm153 = vcmp.gt.f32.partialorder %v140, %v115
  %v154 = vsel %vm153, %v140, %v115
  %v155 = vsel %vm153, 3, %v116
  %v156 = vsel %vm141, %v136, %v117
  %v157 = vsel %vm141, %v138, %v118
  %v158 = vsel %vm141, %v140, %v119
  %v159 = vsel %vm142, %v136, %v120
  %v160 = vsel %vm142, %v138, %v121
  %v161 = vsel %vm142, %v140, %v122
  %v162 = vsel %vm143, %v136, %v123
  %v163 = vsel %vm143, %v138, %v124
  %v164 = vsel %vm143, %v140, %v125
  %v165 = vsel %vm144, %v136, %v126
  %v166 = vsel %vm144, %v138, %v127
  %v167 = vsel %vm144, %v140, %v128
  %v168 = vsel %vm145, %v136, %v129
  %v169 = vsel %vm145, %v138, %v130
  %v170 = vsel %vm145, %v140, %v131
  %v171 = vsel %vm146, %v136, %v132
  %v172 = vsel %vm146, %v138, %v133
  %v173 = vsel %vm146, %v140, %v134
  %s174 = scalar_lea.vmem %s0, 32
  %v175 = vld [vmem:[%s174] sm:$0xff]
  %s176 = scalar_lea.vmem %s0, 136
  %v177 = vld [vmem:[%s176] sm:$0xff]
  %s178 = scalar_lea.vmem %s0, 240
  %v179 = vld [vmem:[%s178] sm:$0xff]
  %vm180 = vcmp.eq.s32.totalorder %v11, 4
  %vm181 = vcmp.eq.s32.totalorder %v13, 4
  %vm182 = vcmp.eq.s32.totalorder %v15, 4
  %vm183 = vcmp.eq.s32.totalorder %v17, 4
  %vm184 = vcmp.eq.s32.totalorder %v19, 4
  %vm185 = vcmp.eq.s32.totalorder %v21, 4
  %vm186 = vcmp.gt.f32.partialorder %v175, %v148
  %v187 = vsel %vm186, %v175, %v148
  %v188 = vsel %vm186, 4, %v149
  %vm189 = vcmp.gt.f32.partialorder %v177, %v151
  %v190 = vsel %vm189, %v177, %v151
  %v191 = vsel %vm189, 4, %v152
  %vm192 = vcmp.gt.f32.partialorder %v179, %v154
  %v193 = vsel %vm192, %v179, %v154
  %v194 = vsel %vm192, 4, %v155
  %v195 = vsel %vm180, %v175, %v156
  %v196 = vsel %vm180, %v177, %v157
  %v197 = vsel %vm180, %v179, %v158
  %v198 = vsel %vm181, %v175, %v159
  %v199 = vsel %vm181, %v177, %v160
  %v200 = vsel %vm181, %v179, %v161
  %v201 = vsel %vm182, %v175, %v162
  %v202 = vsel %vm182, %v177, %v163
  %v203 = vsel %vm182, %v179, %v164
  %v204 = vsel %vm183, %v175, %v165
  %v205 = vsel %vm183, %v177, %v166
  %v206 = vsel %vm183, %v179, %v167
  %v207 = vsel %vm184, %v175, %v168
  %v208 = vsel %vm184, %v177, %v169
  %v209 = vsel %vm184, %v179, %v170
  %v210 = vsel %vm185, %v175, %v171
  %v211 = vsel %vm185, %v177, %v172
  %v212 = vsel %vm185, %v179, %v173
  %s213 = scalar_lea.vmem %s0, 40
  %v214 = vld [vmem:[%s213] sm:$0xff]
  %s215 = scalar_lea.vmem %s0, 144
  %v216 = vld [vmem:[%s215] sm:$0xff]
  %s217 = scalar_lea.vmem %s0, 248
  %v218 = vld [vmem:[%s217] sm:$0xff]
  %vm219 = vcmp.eq.s32.totalorder %v11, 5
  %vm220 = vcmp.eq.s32.totalorder %v13, 5
  %vm221 = vcmp.eq.s32.totalorder %v15, 5
  %vm222 = vcmp.eq.s32.totalorder %v17, 5
  %vm223 = vcmp.eq.s32.totalorder %v19, 5
  %vm224 = vcmp.eq.s32.totalorder %v21, 5
  %vm225 = vcmp.gt.f32.partialorder %v214, %v187
  %v226 = vsel %vm225, %v214, %v187
  %v227 = vsel %vm225, 5, %v188
  %vm228 = vcmp.gt.f32.partialorder %v216, %v190
  %v229 = vsel %vm228, %v216, %v190
  %v230 = vsel %vm228, 5, %v191
  %vm231 = vcmp.gt.f32.partialorder %v218, %v193
  %v232 = vsel %vm231, %v218, %v193
  %v233 = vsel %vm231, 5, %v194
  %v234 = vsel %vm219, %v214, %v195
  %v235 = vsel %vm219, %v216, %v196
  %v236 = vsel %vm219, %v218, %v197
  %v237 = vsel %vm220, %v214, %v198
  %v238 = vsel %vm220, %v216, %v199
  %v239 = vsel %vm220, %v218, %v200
  %v240 = vsel %vm221, %v214, %v201
  %v241 = vsel %vm221, %v216, %v202
  %v242 = vsel %vm221, %v218, %v203
  %v243 = vsel %vm222, %v214, %v204
  %v244 = vsel %vm222, %v216, %v205
  %v245 = vsel %vm222, %v218, %v206
  %v246 = vsel %vm223, %v214, %v207
  %v247 = vsel %vm223, %v216, %v208
  %v248 = vsel %vm223, %v218, %v209
  %v249 = vsel %vm224, %v214, %v210
  %v250 = vsel %vm224, %v216, %v211
  %v251 = vsel %vm224, %v218, %v212
  %s252 = scalar_lea.vmem %s0, 48
  %v253 = vld [vmem:[%s252] sm:$0xff]
  %s254 = scalar_lea.vmem %s0, 152
  %v255 = vld [vmem:[%s254] sm:$0xff]
  %s256 = scalar_lea.vmem %s0, 256
  %v257 = vld [vmem:[%s256] sm:$0xff]
  %vm258 = vcmp.eq.s32.totalorder %v11, 6
  %vm259 = vcmp.eq.s32.totalorder %v13, 6
  %vm260 = vcmp.eq.s32.totalorder %v15, 6
  %vm261 = vcmp.eq.s32.totalorder %v17, 6
  %vm262 = vcmp.eq.s32.totalorder %v19, 6
  %vm263 = vcmp.eq.s32.totalorder %v21, 6
  %vm264 = vcmp.gt.f32.partialorder %v253, %v226
  %v265 = vsel %vm264, %v253, %v226
  %v266 = vsel %vm264, 6, %v227
  %vm267 = vcmp.gt.f32.partialorder %v255, %v229
  %v268 = vsel %vm267, %v255, %v229
  %v269 = vsel %vm267, 6, %v230
  %vm270 = vcmp.gt.f32.partialorder %v257, %v232
  %v271 = vsel %vm270, %v257, %v232
  %v272 = vsel %vm270, 6, %v233
  %v273 = vsel %vm258, %v253, %v234
  %v274 = vsel %vm258, %v255, %v235
  %v275 = vsel %vm258, %v257, %v236
  %v276 = vsel %vm259, %v253, %v237
  %v277 = vsel %vm259, %v255, %v238
  %v278 = vsel %vm259, %v257, %v239
  %v279 = vsel %vm260, %v253, %v240
  %v280 = vsel %vm260, %v255, %v241
  %v281 = vsel %vm260, %v257, %v242
  %v282 = vsel %vm261, %v253, %v243
  %v283 = vsel %vm261, %v255, %v244
  %v284 = vsel %vm261, %v257, %v245
  %v285 = vsel %vm262, %v253, %v246
  %v286 = vsel %vm262, %v255, %v247
  %v287 = vsel %vm262, %v257, %v248
  %v288 = vsel %vm263, %v253, %v249
  %v289 = vsel %vm263, %v255, %v250
  %v290 = vsel %vm263, %v257, %v251
  %s291 = scalar_lea.vmem %s0, 56
  %v292 = vld [vmem:[%s291] sm:$0xff]
  %s293 = scalar_lea.vmem %s0, 160
  %v294 = vld [vmem:[%s293] sm:$0xff]
  %s295 = scalar_lea.vmem %s0, 264
  %v296 = vld [vmem:[%s295] sm:$0xff]
  %vm297 = vcmp.eq.s32.totalorder %v11, 7
  %vm298 = vcmp.eq.s32.totalorder %v13, 7
  %vm299 = vcmp.eq.s32.totalorder %v15, 7
  %vm300 = vcmp.eq.s32.totalorder %v17, 7
  %vm301 = vcmp.eq.s32.totalorder %v19, 7
  %vm302 = vcmp.eq.s32.totalorder %v21, 7
  %vm303 = vcmp.gt.f32.partialorder %v292, %v265
  %v304 = vsel %vm303, %v292, %v265
  %v305 = vsel %vm303, 7, %v266
  %vm306 = vcmp.gt.f32.partialorder %v294, %v268
  %v307 = vsel %vm306, %v294, %v268
  %v308 = vsel %vm306, 7, %v269
  %vm309 = vcmp.gt.f32.partialorder %v296, %v271
  %v310 = vsel %vm309, %v296, %v271
  %v311 = vsel %vm309, 7, %v272
  %v312 = vsel %vm297, %v292, %v273
  %v313 = vsel %vm297, %v294, %v274
  %v314 = vsel %vm297, %v296, %v275
  %v315 = vsel %vm298, %v292, %v276
  %v316 = vsel %vm298, %v294, %v277
  %v317 = vsel %vm298, %v296, %v278
  %v318 = vsel %vm299, %v292, %v279
  %v319 = vsel %vm299, %v294, %v280
  %v320 = vsel %vm299, %v296, %v281
  %v321 = vsel %vm300, %v292, %v282
  %v322 = vsel %vm300, %v294, %v283
  %v323 = vsel %vm300, %v296, %v284
  %v324 = vsel %vm301, %v292, %v285
  %v325 = vsel %vm301, %v294, %v286
  %v326 = vsel %vm301, %v296, %v287
  %v327 = vsel %vm302, %v292, %v288
  %v328 = vsel %vm302, %v294, %v289
  %v329 = vsel %vm302, %v296, %v290
  %s330 = scalar_lea.vmem %s0, 64
  %v331 = vld [vmem:[%s330] sm:$0xff]
  %s332 = scalar_lea.vmem %s0, 168
  %v333 = vld [vmem:[%s332] sm:$0xff]
  %s334 = scalar_lea.vmem %s0, 272
  %v335 = vld [vmem:[%s334] sm:$0xff]
  %vm336 = vcmp.eq.s32.totalorder %v11, 8
  %vm337 = vcmp.eq.s32.totalorder %v13, 8
  %vm338 = vcmp.eq.s32.totalorder %v15, 8
  %vm339 = vcmp.eq.s32.totalorder %v17, 8
  %vm340 = vcmp.eq.s32.totalorder %v19, 8
  %vm341 = vcmp.eq.s32.totalorder %v21, 8
  %vm342 = vcmp.gt.f32.partialorder %v331, %v304
  %v343 = vsel %vm342, %v331, %v304
  %v344 = vsel %vm342, 8, %v305
  %vm345 = vcmp.gt.f32.partialorder %v333, %v307
  %v346 = vsel %vm345, %v333, %v307
  %v347 = vsel %vm345, 8, %v308
  %vm348 = vcmp.gt.f32.partialorder %v335, %v310
  %v349 = vsel %vm348, %v335, %v310
  %v350 = vsel %vm348, 8, %v311
  %v351 = vsel %vm336, %v331, %v312
  %v352 = vsel %vm336, %v333, %v313
  %v353 = vsel %vm336, %v335, %v314
  %v354 = vsel %vm337, %v331, %v315
  %v355 = vsel %vm337, %v333, %v316
  %v356 = vsel %vm337, %v335, %v317
  %v357 = vsel %vm338, %v331, %v318
  %v358 = vsel %vm338, %v333, %v319
  %v359 = vsel %vm338, %v335, %v320
  %v360 = vsel %vm339, %v331, %v321
  %v361 = vsel %vm339, %v333, %v322
  %v362 = vsel %vm339, %v335, %v323
  %v363 = vsel %vm340, %v331, %v324
  %v364 = vsel %vm340, %v333, %v325
  %v365 = vsel %vm340, %v335, %v326
  %v366 = vsel %vm341, %v331, %v327
  %v367 = vsel %vm341, %v333, %v328
  %v368 = vsel %vm341, %v335, %v329
  %s369 = scalar_lea.vmem %s0, 72
  %v370 = vld [vmem:[%s369] sm:$0xff]
  %s371 = scalar_lea.vmem %s0, 176
  %v372 = vld [vmem:[%s371] sm:$0xff]
  %s373 = scalar_lea.vmem %s0, 280
  %v374 = vld [vmem:[%s373] sm:$0xff]
  %vm375 = vcmp.eq.s32.totalorder %v11, 9
  %vm376 = vcmp.eq.s32.totalorder %v13, 9
  %vm377 = vcmp.eq.s32.totalorder %v15, 9
  %vm378 = vcmp.eq.s32.totalorder %v17, 9
  %vm379 = vcmp.eq.s32.totalorder %v19, 9
  %vm380 = vcmp.eq.s32.totalorder %v21, 9
  %vm381 = vcmp.gt.f32.partialorder %v370, %v343
  %v382 = vsel %vm381, %v370, %v343
  %v383 = vsel %vm381, 9, %v344
  %vm384 = vcmp.gt.f32.partialorder %v372, %v346
  %v385 = vsel %vm384, %v372, %v346
  %v386 = vsel %vm384, 9, %v347
  %vm387 = vcmp.gt.f32.partialorder %v374, %v349
  %v388 = vsel %vm387, %v374, %v349
  %v389 = vsel %vm387, 9, %v350
  %v390 = vsel %vm375, %v370, %v351
  %v391 = vsel %vm375, %v372, %v352
  %v392 = vsel %vm375, %v374, %v353
  %v393 = vsel %vm376, %v370, %v354
  %v394 = vsel %vm376, %v372, %v355
  %v395 = vsel %vm376, %v374, %v356
  %v396 = vsel %vm377, %v370, %v357
  %v397 = vsel %vm377, %v372, %v358
  %v398 = vsel %vm377, %v374, %v359
  %v399 = vsel %vm378, %v370, %v360
  %v400 = vsel %vm378, %v372, %v361
  %v401 = vsel %vm378, %v374, %v362
  %v402 = vsel %vm379, %v370, %v363
  %v403 = vsel %vm379, %v372, %v364
  %v404 = vsel %vm379, %v374, %v365
  %v405 = vsel %vm380, %v370, %v366
  %v406 = vsel %vm380, %v372, %v367
  %v407 = vsel %vm380, %v374, %v368
  %s408 = scalar_lea.vmem %s0, 80
  %v409 = vld [vmem:[%s408] sm:$0xff]
  %s410 = scalar_lea.vmem %s0, 184
  %v411 = vld [vmem:[%s410] sm:$0xff]
  %s412 = scalar_lea.vmem %s0, 288
  %v413 = vld [vmem:[%s412] sm:$0xff]
  %vm414 = vcmp.eq.s32.totalorder %v11, 10
  %vm415 = vcmp.eq.s32.totalorder %v13, 10
  %vm416 = vcmp.eq.s32.totalorder %v15, 10
  %vm417 = vcmp.eq.s32.totalorder %v17, 10
  %vm418 = vcmp.eq.s32.totalorder %v19, 10
  %vm419 = vcmp.eq.s32.totalorder %v21, 10
  %vm420 = vcmp.gt.f32.partialorder %v409, %v382
  %v421 = vsel %vm420, %v409, %v382
  %v422 = vsel %vm420, 10, %v383
  %vm423 = vcmp.gt.f32.partialorder %v411, %v385
  %v424 = vsel %vm423, %v411, %v385
  %v425 = vsel %vm423, 10, %v386
  %vm426 = vcmp.gt.f32.partialorder %v413, %v388
  %v427 = vsel %vm426, %v413, %v388
  %v428 = vsel %vm426, 10, %v389
  %v429 = vsel %vm414, %v409, %v390
  %v430 = vsel %vm414, %v411, %v391
  %v431 = vsel %vm414, %v413, %v392
  %v432 = vsel %vm415, %v409, %v393
  %v433 = vsel %vm415, %v411, %v394
  %v434 = vsel %vm415, %v413, %v395
  %v435 = vsel %vm416, %v409, %v396
  %v436 = vsel %vm416, %v411, %v397
  %v437 = vsel %vm416, %v413, %v398
  %v438 = vsel %vm417, %v409, %v399
  %v439 = vsel %vm417, %v411, %v400
  %v440 = vsel %vm417, %v413, %v401
  %v441 = vsel %vm418, %v409, %v402
  %v442 = vsel %vm418, %v411, %v403
  %v443 = vsel %vm418, %v413, %v404
  %v444 = vsel %vm419, %v409, %v405
  %v445 = vsel %vm419, %v411, %v406
  %v446 = vsel %vm419, %v413, %v407
  %s447 = scalar_lea.vmem %s0, 88
  %v448 = vld [vmem:[%s447] sm:$0xff]
  %s449 = scalar_lea.vmem %s0, 192
  %v450 = vld [vmem:[%s449] sm:$0xff]
  %s451 = scalar_lea.vmem %s0, 296
  %v452 = vld [vmem:[%s451] sm:$0xff]
  %vm453 = vcmp.eq.s32.totalorder %v11, 11
  %vm454 = vcmp.eq.s32.totalorder %v13, 11
  %vm455 = vcmp.eq.s32.totalorder %v15, 11
  %vm456 = vcmp.eq.s32.totalorder %v17, 11
  %vm457 = vcmp.eq.s32.totalorder %v19, 11
  %vm458 = vcmp.eq.s32.totalorder %v21, 11
  %vm459 = vcmp.gt.f32.partialorder %v448, %v421
  %v460 = vsel %vm459, %v448, %v421
  %v461 = vsel %vm459, 11, %v422
  %vm462 = vcmp.gt.f32.partialorder %v450, %v424
  %v463 = vsel %vm462, %v450, %v424
  %v464 = vsel %vm462, 11, %v425
  %vm465 = vcmp.gt.f32.partialorder %v452, %v427
  %v466 = vsel %vm465, %v452, %v427
  %v467 = vsel %vm465, 11, %v428
  %v468 = vsel %vm453, %v448, %v429
  %v469 = vsel %vm453, %v450, %v430
  %v470 = vsel %vm453, %v452, %v431
  %v471 = vsel %vm454, %v448, %v432
  %v472 = vsel %vm454, %v450, %v433
  %v473 = vsel %vm454, %v452, %v434
  %v474 = vsel %vm455, %v448, %v435
  %v475 = vsel %vm455, %v450, %v436
  %v476 = vsel %vm455, %v452, %v437
  %v477 = vsel %vm456, %v448, %v438
  %v478 = vsel %vm456, %v450, %v439
  %v479 = vsel %vm456, %v452, %v440
  %v480 = vsel %vm457, %v448, %v441
  %v481 = vsel %vm457, %v450, %v442
  %v482 = vsel %vm457, %v452, %v443
  %v483 = vsel %vm458, %v448, %v444
  %v484 = vsel %vm458, %v450, %v445
  %v485 = vsel %vm458, %v452, %v446
  %s486 = scalar_lea.vmem %s0, 96
  %v487 = vld [vmem:[%s486] sm:$0xff]
  %s488 = scalar_lea.vmem %s0, 200
  %v489 = vld [vmem:[%s488] sm:$0xff]
  %s490 = scalar_lea.vmem %s0, 304
  %v491 = vld [vmem:[%s490] sm:$0xff]
  %vm492 = vcmp.eq.s32.totalorder %v11, 12
  %vm493 = vcmp.eq.s32.totalorder %v13, 12
  %vm494 = vcmp.eq.s32.totalorder %v15, 12
  %vm495 = vcmp.eq.s32.totalorder %v17, 12
  %vm496 = vcmp.eq.s32.totalorder %v19, 12
  %vm497 = vcmp.eq.s32.totalorder %v21, 12
  %vm498 = vcmp.gt.f32.partialorder %v487, %v460
  %v499 = vsel %vm498, %v487, %v460
  %v500 = vsel %vm498, 12, %v461
  %vm501 = vcmp.gt.f32.partialorder %v489, %v463
  %v502 = vsel %vm501, %v489, %v463
  %v503 = vsel %vm501, 12, %v464
  %vm504 = vcmp.gt.f32.partialorder %v491, %v466
  %v505 = vsel %vm504, %v491, %v466
  %v506 = vsel %vm504, 12, %v467
  %v507 = vsel %vm492, %v487, %v468
  %v508 = vsel %vm492, %v489, %v469
  %v509 = vsel %vm492, %v491, %v470
  %v510 = vsel %vm493, %v487, %v471
  %v511 = vsel %vm493, %v489, %v472
  %v512 = vsel %vm493, %v491, %v473
  %v513 = vsel %vm494, %v487, %v474
  %v514 = vsel %vm494, %v489, %v475
  %v515 = vsel %vm494, %v491, %v476
  %v516 = vsel %vm495, %v487, %v477
  %v517 = vsel %vm495, %v489, %v478
  %v518 = vsel %vm495, %v491, %v479
  %v519 = vsel %vm496, %v487, %v480
  %v520 = vsel %vm496, %v489, %v481
  %v521 = vsel %vm496, %v491, %v482
  %v522 = vsel %vm497, %v487, %v483
  %v523 = vsel %vm497, %v489, %v484
  %v524 = vsel %vm497, %v491, %v485
  %v525 = vsub.f32 %v28, %v499
  %v526 = vmul.f32 %v525, 1.442695
  %v527 = vpow.pop %v526
  %v528 = vsub.f32 %v58, %v499
  %v529 = vmul.f32 %v528, 1.442695
  %v530 = vpow.pop %v529
  %v531 = vadd.f32 %v527, %v530
  %v532 = vsub.f32 %v97, %v499
  %v533 = vmul.f32 %v532, 1.442695
  %v534 = vpow.pop %v533
  %v535 = vadd.f32 %v531, %v534
  %v536 = vsub.f32 %v136, %v499
  %v537 = vmul.f32 %v536, 1.442695
  %v538 = vpow.pop %v537
  %v539 = vadd.f32 %v535, %v538
  %v540 = vsub.f32 %v175, %v499
  %v541 = vmul.f32 %v540, 1.442695
  %v542 = vpow.pop %v541
  %v543 = vadd.f32 %v539, %v542
  %v544 = vsub.f32 %v214, %v499
  %v545 = vmul.f32 %v544, 1.442695
  %v546 = vpow.pop %v545
  %v547 = vadd.f32 %v543, %v546
  %v548 = vsub.f32 %v253, %v499
  %v549 = vmul.f32 %v548, 1.442695
  %v550 = vpow.pop %v549
  %v551 = vadd.f32 %v547, %v550
  %v552 = vsub.f32 %v292, %v499
  %v553 = vmul.f32 %v552, 1.442695
  %v554 = vpow.pop %v553
  %v555 = vadd.f32 %v551, %v554
  %v556 = vsub.f32 %v331, %v499
  %v557 = vmul.f32 %v556, 1.442695
  %v558 = vpow.pop %v557
  %v559 = vadd.f32 %v555, %v558
  %v560 = vsub.f32 %v370, %v499
  %v561 = vmul.f32 %v560, 1.442695
  %v562 = vpow.pop %v561
  %v563 = vadd.f32 %v559, %v562
  %v564 = vsub.f32 %v409, %v499
  %v565 = vmul.f32 %v564, 1.442695
  %v566 = vpow.pop %v565
  %v567 = vadd.f32 %v563, %v566
  %v568 = vsub.f32 %v448, %v499
  %v569 = vmul.f32 %v568, 1.442695
  %v570 = vpow.pop %v569
  %v571 = vadd.f32 %v567, %v570
  %v572 = vsub.f32 %v487, %v499
  %v573 = vmul.f32 %v572, 1.442695
  %v574 = vpow.pop %v573
  %v575 = vadd.f32 %v571, %v574
  %v576 = vlog2.pop %v575
  %v577 = vmul.f32 %v576, 0.6931472
  %v578 = vadd.f32 %v499, %v577
  %v579 = vsub.f32 %v30, %v502
  %v580 = vmul.f32 %v579, 1.442695
  %v581 = vpow.pop %v580
  %v582 = vsub.f32 %v60, %v502
  %v583 = vmul.f32 %v582, 1.442695
  %v584 = vpow.pop %v583
  %v585 = vadd.f32 %v581, %v584
  %v586 = vsub.f32 %v99, %v502
  %v587 = vmul.f32 %v586, 1.442695
  %v588 = vpow.pop %v587
  %v589 = vadd.f32 %v585, %v588
  %v590 = vsub.f32 %v138, %v502
  %v591 = vmul.f32 %v590, 1.442695
  %v592 = vpow.pop %v591
  %v593 = vadd.f32 %v589, %v592
  %v594 = vsub.f32 %v177, %v502
  %v595 = vmul.f32 %v594, 1.442695
  %v596 = vpow.pop %v595
  %v597 = vadd.f32 %v593, %v596
  %v598 = vsub.f32 %v216, %v502
  %v599 = vmul.f32 %v598, 1.442695
  %v600 = vpow.pop %v599
  %v601 = vadd.f32 %v597, %v600
  %v602 = vsub.f32 %v255, %v502
  %v603 = vmul.f32 %v602, 1.442695
  %v604 = vpow.pop %v603
  %v605 = vadd.f32 %v601, %v604
  %v606 = vsub.f32 %v294, %v502
  %v607 = vmul.f32 %v606, 1.442695
  %v608 = vpow.pop %v607
  %v609 = vadd.f32 %v605, %v608
  %v610 = vsub.f32 %v333, %v502
  %v611 = vmul.f32 %v610, 1.442695
  %v612 = vpow.pop %v611
  %v613 = vadd.f32 %v609, %v612
  %v614 = vsub.f32 %v372, %v502
  %v615 = vmul.f32 %v614, 1.442695
  %v616 = vpow.pop %v615
  %v617 = vadd.f32 %v613, %v616
  %v618 = vsub.f32 %v411, %v502
  %v619 = vmul.f32 %v618, 1.442695
  %v620 = vpow.pop %v619
  %v621 = vadd.f32 %v617, %v620
  %v622 = vsub.f32 %v450, %v502
  %v623 = vmul.f32 %v622, 1.442695
  %v624 = vpow.pop %v623
  %v625 = vadd.f32 %v621, %v624
  %v626 = vsub.f32 %v489, %v502
  %v627 = vmul.f32 %v626, 1.442695
  %v628 = vpow.pop %v627
  %v629 = vadd.f32 %v625, %v628
  %v630 = vlog2.pop %v629
  %v631 = vmul.f32 %v630, 0.6931472
  %v632 = vadd.f32 %v502, %v631
  %v633 = vsub.f32 %v32, %v505
  %v634 = vmul.f32 %v633, 1.442695
  %v635 = vpow.pop %v634
  %v636 = vsub.f32 %v62, %v505
  %v637 = vmul.f32 %v636, 1.442695
  %v638 = vpow.pop %v637
  %v639 = vadd.f32 %v635, %v638
  %v640 = vsub.f32 %v101, %v505
  %v641 = vmul.f32 %v640, 1.442695
  %v642 = vpow.pop %v641
  %v643 = vadd.f32 %v639, %v642
  %v644 = vsub.f32 %v140, %v505
  %v645 = vmul.f32 %v644, 1.442695
  %v646 = vpow.pop %v645
  %v647 = vadd.f32 %v643, %v646
  %v648 = vsub.f32 %v179, %v505
  %v649 = vmul.f32 %v648, 1.442695
  %v650 = vpow.pop %v649
  %v651 = vadd.f32 %v647, %v650
  %v652 = vsub.f32 %v218, %v505
  %v653 = vmul.f32 %v652, 1.442695
  %v654 = vpow.pop %v653
  %v655 = vadd.f32 %v651, %v654
  %v656 = vsub.f32 %v257, %v505
  %v657 = vmul.f32 %v656, 1.442695
  %v658 = vpow.pop %v657
  %v659 = vadd.f32 %v655, %v658
  %v660 = vsub.f32 %v296, %v505
  %v661 = vmul.f32 %v660, 1.442695
  %v662 = vpow.pop %v661
  %v663 = vadd.f32 %v659, %v662
  %v664 = vsub.f32 %v335, %v505
  %v665 = vmul.f32 %v664, 1.442695
  %v666 = vpow.pop %v665
  %v667 = vadd.f32 %v663, %v666
  %v668 = vsub.f32 %v374, %v505
  %v669 = vmul.f32 %v668, 1.442695
  %v670 = vpow.pop %v669
  %v671 = vadd.f32 %v667, %v670
  %v672 = vsub.f32 %v413, %v505
  %v673 = vmul.f32 %v672, 1.442695
  %v674 = vpow.pop %v673
  %v675 = vadd.f32 %v671, %v674
  %v676 = vsub.f32 %v452, %v505
  %v677 = vmul.f32 %v676, 1.442695
  %v678 = vpow.pop %v677
  %v679 = vadd.f32 %v675, %v678
  %v680 = vsub.f32 %v491, %v505
  %v681 = vmul.f32 %v680, 1.442695
  %v682 = vpow.pop %v681
  %v683 = vadd.f32 %v679, %v682
  %v684 = vlog2.pop %v683
  %v685 = vmul.f32 %v684, 0.6931472
  %v686 = vadd.f32 %v505, %v685
  %v687 = vsub.f32 %v578, %v507
  %v688 = vsel %vm22, 0.0, %v687
  %v689 = vsub.f32 %v632, %v508
  %v690 = vsel %vm22, 0.0, %v689
  %v691 = vsub.f32 %v686, %v509
  %v692 = vsel %vm22, 0.0, %v691
  %v693 = vsub.f32 %v578, %v510
  %v694 = vsel %vm23, 0.0, %v693
  %v695 = vsub.f32 %v632, %v511
  %v696 = vsel %vm23, 0.0, %v695
  %v697 = vsub.f32 %v686, %v512
  %v698 = vsel %vm23, 0.0, %v697
  %v699 = vsub.f32 %v578, %v513
  %v700 = vsel %vm24, 0.0, %v699
  %v701 = vsub.f32 %v632, %v514
  %v702 = vsel %vm24, 0.0, %v701
  %v703 = vsub.f32 %v686, %v515
  %v704 = vsel %vm24, 0.0, %v703
  %v705 = vsub.f32 %v578, %v516
  %v706 = vsel %vm25, 0.0, %v705
  %v707 = vsub.f32 %v632, %v517
  %v708 = vsel %vm25, 0.0, %v707
  %v709 = vsub.f32 %v686, %v518
  %v710 = vsel %vm25, 0.0, %v709
  %v711 = vsub.f32 %v578, %v519
  %v712 = vsel %vm26, 0.0, %v711
  %v713 = vsub.f32 %v632, %v520
  %v714 = vsel %vm26, 0.0, %v713
  %v715 = vsub.f32 %v686, %v521
  %v716 = vsel %vm26, 0.0, %v715
  %v717 = vsub.f32 %v578, %v522
  %v718 = vsel %vm27, 0.0, %v717
  %v719 = vsub.f32 %v632, %v523
  %v720 = vsel %vm27, 0.0, %v719
  %v721 = vsub.f32 %v686, %v524
  %v722 = vsel %vm27, 0.0, %v721
  %v723 = vadd.f32 %v688, %v696
  %v724 = vadd.f32 %v723, %v704
  %v725 = vmul.f32 %v724, 0.33333334
  %v726 = vadd.f32 %v688, %v698
  %v727 = vadd.f32 %v726, %v702
  %v728 = vmul.f32 %v727, 0.33333334
  %vm729 = vcmp.lt.f32.partialorder %v728, %v725
  %v730 = vsel %vm729, %v728, %v725
  %v731 = vsel %vm729, 1, 0
  %v732 = vadd.f32 %v690, %v694
  %v733 = vadd.f32 %v732, %v704
  %v734 = vmul.f32 %v733, 0.33333334
  %vm735 = vcmp.lt.f32.partialorder %v734, %v730
  %v736 = vsel %vm735, %v734, %v730
  %v737 = vsel %vm735, 2, %v731
  %v738 = vadd.f32 %v690, %v698
  %v739 = vadd.f32 %v738, %v700
  %v740 = vmul.f32 %v739, 0.33333334
  %vm741 = vcmp.lt.f32.partialorder %v740, %v736
  %v742 = vsel %vm741, %v740, %v736
  %v743 = vsel %vm741, 3, %v737
  %v744 = vadd.f32 %v692, %v694
  %v745 = vadd.f32 %v744, %v702
  %v746 = vmul.f32 %v745, 0.33333334
  %vm747 = vcmp.lt.f32.partialorder %v746, %v742
  %v748 = vsel %vm747, %v746, %v742
  %v749 = vsel %vm747, 4, %v743
  %v750 = vadd.f32 %v692, %v696
  %v751 = vadd.f32 %v750, %v700
  %v752 = vmul.f32 %v751, 0.33333334
  %vm753 = vcmp.lt.f32.partialorder %v752, %v748
  %v754 = vsel %vm753, %v752, %v748
  %v755 = vsel %vm753, 5, %v749
  %v756 = vadd.f32 %v706, %v714
  %v757 = vadd.f32 %v756, %v722
  %v758 = vmul.f32 %v757, 0.33333334
  %v759 = vadd.f32 %v706, %v716
  %v760 = vadd.f32 %v759, %v720
  %v761 = vmul.f32 %v760, 0.33333334
  %vm762 = vcmp.lt.f32.partialorder %v761, %v758
  %v763 = vsel %vm762, %v761, %v758
  %v764 = vsel %vm762, 1, 0
  %v765 = vadd.f32 %v708, %v712
  %v766 = vadd.f32 %v765, %v722
  %v767 = vmul.f32 %v766, 0.33333334
  %vm768 = vcmp.lt.f32.partialorder %v767, %v763
  %v769 = vsel %vm768, %v767, %v763
  %v770 = vsel %vm768, 2, %v764
  %v771 = vadd.f32 %v708, %v716
  %v772 = vadd.f32 %v771, %v718
  %v773 = vmul.f32 %v772, 0.33333334
  %vm774 = vcmp.lt.f32.partialorder %v773, %v769
  %v775 = vsel %vm774, %v773, %v769
  %v776 = vsel %vm774, 3, %v770
  %v777 = vadd.f32 %v710, %v712
  %v778 = vadd.f32 %v777, %v720
  %v779 = vmul.f32 %v778, 0.33333334
  %vm780 = vcmp.lt.f32.partialorder %v779, %v775
  %v781 = vsel %vm780, %v779, %v775
  %v782 = vsel %vm780, 4, %v776
  %v783 = vadd.f32 %v710, %v714
  %v784 = vadd.f32 %v783, %v718
  %v785 = vmul.f32 %v784, 0.33333334
  %vm786 = vcmp.lt.f32.partialorder %v785, %v781
  %v787 = vsel %vm786, %v785, %v781
  %v788 = vsel %vm786, 5, %v782
  %vm789 = vcmp.lt.f32.partialorder %v787, %v754
  %v790 = vsel %vm789, %v787, %v754
  %v791 = vsel %vm789, %v788, %v755
  %v792 = vsel %vm789, %v17, %v11
  %v793 = vsel %vm789, %v19, %v13
  %v794 = vsel %vm789, %v21, %v15
  %vm795 = vcmp.eq.s32.totalorder %v791, 1
  %vm796 = vcmp.eq.s32.totalorder %v791, 2
  %vm797 = vcmp.eq.s32.totalorder %v791, 3
  %vm798 = vcmp.eq.s32.totalorder %v791, 4
  %vm799 = vcmp.eq.s32.totalorder %v791, 5
  %v800 = vsel %vm796, %v793, %v792
  %v801 = vsel %vm797, %v793, %v800
  %v802 = vsel %vm798, %v794, %v801
  %v803 = vsel %vm799, %v794, %v802
  %vm804 = vcmp.ne.s32.totalorder %v803, 4294967196
  %vm805 = vcmp.eq.s32.totalorder %v500, %v803
  %vm806 = vmand %vm804, %vm805
  %v807 = vsel %vm804, 1, 0
  %v808 = vcvt.s32.f32 %v807
  %v809 = vadd.f32 %v808, 0.0
  %v810 = vsel %vm806, 1, 0
  %v811 = vcvt.s32.f32 %v810
  %v812 = vadd.f32 %v811, 0.0
  %v813 = vsel %vm795, %v794, %v793
  %v814 = vsel %vm796, %v792, %v813
  %v815 = vsel %vm797, %v794, %v814
  %v816 = vsel %vm798, %v792, %v815
  %v817 = vsel %vm799, %v793, %v816
  %vm818 = vcmp.ne.s32.totalorder %v817, 4294967196
  %vm819 = vcmp.eq.s32.totalorder %v503, %v817
  %vm820 = vmand %vm818, %vm819
  %v821 = vsel %vm818, 1, 0
  %v822 = vcvt.s32.f32 %v821
  %v823 = vadd.f32 %v809, %v822
  %v824 = vsel %vm820, 1, 0
  %v825 = vcvt.s32.f32 %v824
  %v826 = vadd.f32 %v812, %v825
  %v827 = vsel %vm795, %v793, %v794
  %v828 = vsel %vm796, %v794, %v827
  %v829 = vsel %vm797, %v792, %v828
  %v830 = vsel %vm798, %v793, %v829
  %v831 = vsel %vm799, %v792, %v830
  %vm832 = vcmp.ne.s32.totalorder %v831, 4294967196
  %vm833 = vcmp.eq.s32.totalorder %v506, %v831
  %vm834 = vmand %vm832, %vm833
  %v835 = vsel %vm832, 1, 0
  %v836 = vcvt.s32.f32 %v835
  %v837 = vadd.f32 %v823, %v836
  %v838 = vsel %vm834, 1, 0
  %v839 = vcvt.s32.f32 %v838
  %v840 = vadd.f32 %v826, %v839
  %vm841 = vcmp.gt.f32.partialorder %v790, 0.0
  %v842 = vsel %vm841, %v790, 0.0
  %v843 = vrot.slane %v842, 4
  %v844 = vadd.f32 %v842, %v843
  %v845 = vrot.slane %v844, 2
  %v846 = vadd.f32 %v844, %v845
  %v847 = vrot.slane %v846, 1
  %v848 = vadd.f32 %v846, %v847
  %849 = vadd.xlane.f32.xlu0 %v848
  %v850 = vpop.xlane.xlu0 %849
  %v851 = vsel %vm841, 1, 0
  %v852 = vcvt.s32.f32 %v851
  %v853 = vrot.slane %v852, 4
  %v854 = vadd.f32 %v852, %v853
  %v855 = vrot.slane %v854, 2
  %v856 = vadd.f32 %v854, %v855
  %v857 = vrot.slane %v856, 1
  %v858 = vadd.f32 %v856, %v857
  %859 = vadd.xlane.f32.xlu0 %v858
  %v860 = vpop.xlane.xlu0 %859
  %v861 = vrot.slane %v840, 4
  %v862 = vadd.f32 %v840, %v861
  %v863 = vrot.slane %v862, 2
  %v864 = vadd.f32 %v862, %v863
  %v865 = vrot.slane %v864, 1
  %v866 = vadd.f32 %v864, %v865
  %867 = vadd.xlane.f32.xlu0 %v866
  %v868 = vpop.xlane.xlu0 %867
  %v869 = vrot.slane %v837, 4
  %v870 = vadd.f32 %v837, %v869
  %v871 = vrot.slane %v870, 2
  %v872 = vadd.f32 %v870, %v871
  %v873 = vrot.slane %v872, 1
  %v874 = vadd.f32 %v872, %v873
  %875 = vadd.xlane.f32.xlu0 %v874
  %v876 = vpop.xlane.xlu0 %875
  %v877 = vlaneseq
  %v878 = vshrl.u32 %v877, 7
  %vm879 = vcmp.eq.s32.totalorder %v878, 0
  %v880 = vsel %vm879, %v850, 0.0
  %vm881 = vcmp.eq.s32.totalorder %v878, 1
  %v882 = vsel %vm881, %v860, 0.0
  %v883 = vadd.f32 %v880, %v882
  %vm884 = vcmp.eq.s32.totalorder %v878, 2
  %v885 = vsel %vm884, %v868, 0.0
  %v886 = vadd.f32 %v883, %v885
  %vm887 = vcmp.eq.s32.totalorder %v878, 3
  %v888 = vsel %vm887, %v876, 0.0
  %v889 = vadd.f32 %v886, %v888
  %890 = vst [vmem:[%s2] sm:$0xff] %v889
  // Predicated region
  $region10: #{_tdoa_loss_device.1} parent=0 // pred_check
    _
  $region11: #{_tdoa_loss_device.1} parent=0 // pred_check_branch
    %892 = sbr.rel (0) target = $region13
  $region12: #{_tdoa_loss_device.1} parent=0 // pred_region
    _
  $region13: #{_tdoa_loss_device.1} parent=0 // pred_fallthru
    _
  // Predicated region
  $region14: #{_tdoa_loss_device.1} parent=0 // pred_check
    _
  $region15: #{_tdoa_loss_device.1} parent=0 // pred_check_branch
    %894 = sbr.rel (0) target = $region17
  $region16: #{_tdoa_loss_device.1} parent=0 // pred_region
    _
  $region17: #{_tdoa_loss_device.1} parent=0 // pred_fallthru
    _

</llo_original>
